<compile_context>
chip_gen: v5e
topology: v5e:2x2
jax: 0.10.0
libtpu: 0.0.40
codegen_flags: <defaults>
</compile_context>

<pallas_src>
import functools

import jax
import jax.numpy as jnp
from jax.experimental import pallas as pl
from jax.experimental.pallas import tpu as pltpu

# ------------------------------------------------------------------ cfg ----
# TODO(synk): cfg values assumed from standard faster-rcnn / graph-rcnn defaults.
CFG = dict(
    MAX_ROI_PAIR_NUMBER=16,
    TRAIN_BATCH_SIZE=32,           # rois_per_image (num_images == 1)
    TRAIN_FG_FRACTION=0.25,
    RELPN_FG_THRESH=0.5,
    RELPN_BG_THRESH_HI=0.5,
    RELPN_BG_THRESH_LO=0.0,
    BBOX_NORMALIZE_MEANS=(0.0, 0.0, 0.0, 0.0),
    BBOX_NORMALIZE_STDS=(0.1, 0.1, 0.2, 0.2),
    BBOX_INSIDE_WEIGHTS=(1.0, 1.0, 1.0, 1.0),
)


# -------------------------------------------------------- Pallas kernel ----
def _co_overlap_label_kernel(roi_ref, gt_ref, out_ref):
    """roi_ref: (bpb, N, 9) = [batch_idx, sub box(4), obj box(4)]
       gt_ref : (bpb, 9, K) coordinate-major gt box pairs, row 8 = predicate label
       out_ref: (bpb, N, 2) = [max co-overlap, label of winning gt pair]."""
    bpb = roi_ref.shape[0]
    K = gt_ref.shape[2]

    for b in range(bpb):            # static unroll (bpb is tiny)
        roi = roi_ref[b]            # (N, 9)
        gt = gt_ref[b]              # (9, K)

        def pair(ro, go):
            bx1 = roi[:, ro + 1:ro + 2]      # (N, 1)  (+1 skips batch-index col)
            by1 = roi[:, ro + 2:ro + 3]
            bx2 = roi[:, ro + 3:ro + 4]
            by2 = roi[:, ro + 4:ro + 5]
            qx1 = gt[go + 0:go + 1, :]       # (1, K)
            qy1 = gt[go + 1:go + 2, :]
            qx2 = gt[go + 2:go + 3, :]
            qy2 = gt[go + 3:go + 4, :]

            bw = bx2 - bx1 + 1.0
            bh = by2 - by1 + 1.0
            qw = qx2 - qx1 + 1.0
            qh = qy2 - qy1 + 1.0
            b_area = bw * bh                 # (N, 1)
            q_area = qw * qh                 # (1, K)

            iw = jnp.maximum(jnp.minimum(bx2, qx2) - jnp.maximum(bx1, qx1) + 1.0, 0.0)
            ih = jnp.maximum(jnp.minimum(by2, qy2) - jnp.maximum(by1, qy1) + 1.0, 0.0)
            inter = iw * ih                  # (N, K)
            ua = b_area + q_area - inter     # (N, K), always >= 1

            b_zero = (bw == 1.0) & (bh == 1.0)   # (N, 1) degenerate roi box
            q_zero = (qw == 1.0) & (qh == 1.0)   # (1, K) zero-padded gt pair
            return inter, ua, b_zero, q_zero

        inter_s, ua_s, bz_s, qz_s = pair(0, 0)   # subject boxes
        inter_o, ua_o, bz_o, qz_o = pair(4, 4)   # object boxes

        # TODO(synk): co_bbox_overlaps_batch combination assumed to be the
        # product of subject IoU and object IoU (computed with ONE exact divide).
        ov = (inter_s * inter_o) / (ua_s * ua_o)          # (N, K)
        ov = jnp.where(qz_s | qz_o, 0.0, ov)              # padded gt pairs -> 0
        ov = jnp.where(bz_s | bz_o, -1.0, ov)             # zero-area roi pairs -> -1

        mx = jnp.max(ov, axis=1, keepdims=True)           # (N, 1) max over gt pairs
        k_idx = jax.lax.broadcasted_iota(jnp.int32, ov.shape, 1)
        cand = jnp.where(ov == mx, k_idx, jnp.int32(K))
        arg = jnp.min(cand, axis=1, keepdims=True)        # first-max index (N, 1)
        lab_row = gt[8:9, :]                              # (1, K) predicate labels
        lab = jnp.sum(jnp.where(k_idx == arg, lab_row, 0.0),
                      axis=1, keepdims=True)              # (N, 1) winner's label

        out_ref[b, :, 0:1] = mx
        out_ref[b, :, 1:2] = lab


def co_overlaps_and_labels(roi_pairs, gt_cmajor):
    """roi_pairs: (B, N, 9) f32 ; gt_cmajor: (B, 9, K) f32
    returns max_overlaps (B, N) f32 and labels (B, N) f32."""
    B, N, _ = roi_pairs.shape
    K = gt_cmajor.shape[2]

    # Single grid step for small B (per-step overhead dominates the compute);
    # for B >= 4 split into two steps so v7x megacore can take one each.
    if B >= 4 and B % 2 == 0:
        steps, bpb = 2, B // 2
    else:
        steps, bpb = 1, B

    out = pl.pallas_call(
        _co_overlap_label_kernel,
        out_shape=jax.ShapeDtypeStruct((B, N, 2), jnp.float32),
        grid=(steps,),
        in_specs=[
            pl.BlockSpec((bpb, N, 9), lambda i: (i, 0, 0)),
            pl.BlockSpec((bpb, 9, K), lambda i: (i, 0, 0)),
        ],
        out_specs=pl.BlockSpec((bpb, N, 2), lambda i: (i, 0, 0)),
        compiler_params=pltpu.CompilerParams(dimension_semantics=("parallel",)),
    )(roi_pairs, gt_cmajor)
    return out[:, :, 0], out[:, :, 1]


# ------------------------------------------------------------ JAX glue -----
def build_gt_box_pairs_cmajor(gt_boxes, gt_relation, max_pairs):
    """gt_boxes (B,G,5) f32, gt_relation (B,R,3) i32
    -> gt pairs coordinate-major (B, 9, max_pairs):
       rows 0:4 subject box, 4:8 object box, 8 predicate label."""
    B, R, _ = gt_relation.shape

    def per_image(boxes, rels):
        valid = rels[:, 2] > 0
        # compact: valid relations first, original order preserved (stable sort)
        order = jnp.argsort((~valid).astype(jnp.int32))
        rels_s = rels[order]
        valid_s = valid[order]
        sub = boxes[rels_s[:, 0], :4]
        obj = boxes[rels_s[:, 1], :4]
        lab = rels_s[:, 2].astype(jnp.float32)
        rows = jnp.concatenate([sub, obj, lab[:, None]], axis=1)     # (R, 9)
        rows = jnp.where(valid_s[:, None], rows, 0.0)
        out = jnp.zeros((max_pairs, 9), jnp.float32)
        out = out.at[:R].set(rows)        # assumes R <= max_pairs
        return out.T                      # (9, max_pairs) — tiny, free transpose

    return jax.vmap(per_image)(gt_boxes, gt_relation)


def sample_roi_pairs(key, all_roi_pairs, labels, max_overlaps,
                     fg_rois_per_image, rois_per_image):
    """Random fg/bg sampling of roi pairs (jax.random in place of np.random)."""
    B, N, _ = all_roi_pairs.shape
    fg_t = CFG["RELPN_FG_THRESH"]
    bg_hi = CFG["RELPN_BG_THRESH_HI"]
    bg_lo = CFG["RELPN_BG_THRESH_LO"]

    def per_image(key, rois, lab, mo, i):
        fg_mask = mo >= fg_t
        bg_mask = (mo < bg_hi) & (mo >= bg_lo)
        fg_num = jnp.sum(fg_mask.astype(jnp.int32))
        bg_num = jnp.sum(bg_mask.astype(jnp.int32))

        k1, k2, k3, k4 = jax.random.split(key, 4)
        # random permutations with fg/bg entries first
        fg_perm = jnp.argsort(jnp.where(fg_mask, jax.random.uniform(k1, (N,)), 2.0))
        bg_perm = jnp.argsort(jnp.where(bg_mask, jax.random.uniform(k2, (N,)), 2.0))

        pos = jnp.arange(rois_per_image, dtype=jnp.int32)
        fg_rand = jnp.floor(jax.random.uniform(k3, (rois_per_image,))
                            * jnp.maximum(fg_num, 1)).astype(jnp.int32)
        bg_rand = jnp.floor(jax.random.uniform(k4, (rois_per_image,))
                            * jnp.maximum(bg_num, 1)).astype(jnp.int32)
        fg_pick_repl = fg_perm[fg_rand]        # with replacement
        bg_pick_repl = bg_perm[bg_rand]

        fg_this_A = jnp.minimum(fg_rois_per_image, fg_num)
        keep_A = jnp.where(pos < fg_this_A, fg_perm[pos], bg_pick_repl)

        keep = jnp.where(
            fg_num > 0,
            jnp.where(bg_num > 0, keep_A, fg_pick_repl),
            jnp.where(bg_num > 0, bg_pick_repl, keep_A),
        )
        fg_this = jnp.where(
            fg_num > 0,
            jnp.where(bg_num > 0, fg_this_A, rois_per_image),
            0,
        )

        lab_keep = lab[keep]
        lab_keep = jnp.where(pos < fg_this, lab_keep, 0.0)
        rois_keep = rois[keep]
        rois_keep = rois_keep.at[:, 0].set(i.astype(jnp.float32))
        return rois_keep, lab_keep, keep.astype(jnp.float32)

    keys = jax.random.split(key, B)
    return jax.vmap(per_image)(keys, all_roi_pairs, labels, max_overlaps,
                               jnp.arange(B))


@functools.partial(jax.jit,
                   static_argnames=("fg_rois_per_image", "rois_per_image",
                                    "max_pairs"))
def _relpn_forward(key, roi_pairs, gt_boxes, gt_relation,
                   fg_rois_per_image, rois_per_image, max_pairs):
    roi_pairs = roi_pairs.astype(jnp.float32)
    gt_cmajor = build_gt_box_pairs_cmajor(gt_boxes.astype(jnp.float32),
                                          gt_relation, max_pairs)     # (B,9,K)
    max_overlaps, labels = co_overlaps_and_labels(roi_pairs, gt_cmajor)
    return sample_roi_pairs(key, roi_pairs, labels, max_overlaps,
                            fg_rois_per_image, rois_per_image)


class RelProposalTargetLayer:
    """JAX/Pallas port of _RelProposalTargetLayer.forward."""

    def __init__(self, nclasses_rel):
        self._num_classes_rel = nclasses_rel
        # Deterministic "parameter" init (unused in forward, kept for parity).
        self.BBOX_NORMALIZE_MEANS = jnp.asarray(CFG["BBOX_NORMALIZE_MEANS"], jnp.float32)
        self.BBOX_NORMALIZE_STDS = jnp.asarray(CFG["BBOX_NORMALIZE_STDS"], jnp.float32)
        self.BBOX_INSIDE_WEIGHTS = jnp.asarray(CFG["BBOX_INSIDE_WEIGHTS"], jnp.float32)

    def __call__(self, key, roi_pairs, gt_boxes, gt_relation, num_boxes):
        del num_boxes  # unused by the reference forward as well
        num_images = 1
        rois_per_image = int(CFG["TRAIN_BATCH_SIZE"] / num_images)
        fg_rois_per_image = int(round(CFG["TRAIN_FG_FRACTION"] * rois_per_image))
        rois, labels_rel, keep_inds = _relpn_forward(
            key, roi_pairs, gt_boxes, gt_relation,
            fg_rois_per_image=fg_rois_per_image,
            rois_per_image=rois_per_image,
            max_pairs=CFG["MAX_ROI_PAIR_NUMBER"])
        return rois, labels_rel, keep_inds


# ----------------------------------------------------------------- main ----
def _make_boxes(key, shape, img_size=512.0):
    k1, k2, k3, k4 = jax.random.split(key, 4)
    x1 = jax.random.uniform(k1, shape, minval=0.0, maxval=img_size - 80.0)
    y1 = jax.random.uniform(k2, shape, minval=0.0, maxval=img_size - 80.0)
    w = jax.random.uniform(k3, shape, minval=16.0, maxval=64.0)
    h = jax.random.uniform(k4, shape, minval=16.0, maxval=64.0)
    return jnp.stack([x1, y1, x1 + w, y1 + h], axis=-1)


if __name__ == "__main__":
    B, N, G, R = 2, 128, 10, 12
    nclasses_rel = 51

    root = jax.random.PRNGKey(0)
    k_roi_s, k_roi_o, k_gt, k_cls, k_sub, k_obj, k_lab, k_drop, k_samp = \
        jax.random.split(root, 9)

    # roi_pairs: (B, N, 9) = [batch_idx, sub_box(4), obj_box(4)]
    sub_boxes = _make_boxes(k_roi_s, (B, N))
    obj_boxes = _make_boxes(k_roi_o, (B, N))
    batch_col = jnp.broadcast_to(jnp.arange(B, dtype=jnp.float32)[:, None, None], (B, N, 1))
    roi_pairs = jnp.concatenate([batch_col, sub_boxes, obj_boxes], axis=-1)

    # gt_boxes: (B, G, 5) = [box(4), class]
    gt_cls = jax.random.randint(k_cls, (B, G, 1), 1, 20).astype(jnp.float32)
    gt_boxes = jnp.concatenate([_make_boxes(k_gt, (B, G)), gt_cls], axis=-1)

    # gt_relation: (B, R, 3) = [sub_idx, obj_idx, predicate_label]
    sub_idx = jax.random.randint(k_sub, (B, R), 0, G)
    obj_idx = jax.random.randint(k_obj, (B, R), 0, G)
    rel_lab = jax.random.randint(k_lab, (B, R), 1, nclasses_rel)
    drop = jax.random.uniform(k_drop, (B, R)) < 0.4
    rel_lab = jnp.where(drop, 0, rel_lab)
    rel_lab = rel_lab.at[:, :2].set(jnp.maximum(rel_lab[:, :2], 1))   # >=2 valid rels
    gt_relation = jnp.stack([sub_idx, obj_idx, rel_lab], axis=-1).astype(jnp.int32)

    # Seed a couple of proposals equal to gt pairs so foreground exists.
    for b in range(B):
        for j in range(2):
            s = gt_relation[b, j, 0]
            o = gt_relation[b, j, 1]
            roi_pairs = roi_pairs.at[b, j, 1:5].set(gt_boxes[b, s, :4])
            roi_pairs = roi_pairs.at[b, j, 5:9].set(gt_boxes[b, o, :4])

    num_boxes = jnp.full((B,), G, dtype=jnp.int32)

    layer = RelProposalTargetLayer(nclasses_rel)
    rois, labels, keeps = layer(k_samp, roi_pairs, gt_boxes, gt_relation, num_boxes)
    jax.block_until_ready((rois, labels, keeps))

    assert rois.shape == (B, CFG["TRAIN_BATCH_SIZE"], 9)
    assert labels.shape == (B, CFG["TRAIN_BATCH_SIZE"])
    assert keeps.shape == (B, CFG["TRAIN_BATCH_SIZE"])
    print("KERNEL_OK")
</pallas_src>

<mosaic_0001>
module attributes {stable_mosaic.version = 11 : i64} {
  func.func @_co_overlap_label_kernel(%arg0: i32, %arg1: memref<2x128x9xf32, #tpu.memory_space<vmem>>, %arg2: memref<2x9x16xf32, #tpu.memory_space<vmem>>, %arg3: memref<2x128x2xf32, #tpu.memory_space<vmem>>) attributes {dimension_semantics = [#tpu.dimension_semantics<parallel>], iteration_bounds = array<i64: 1>, scalar_prefetch = 0 : i64, scratch_operands = 0 : i64, tpu.core_type = #tpu.core_type<tc>, window_params = [{transform_indices = @transform_0, window_bounds = array<i64: 2, 128, 9>}, {transform_indices = @transform_1, window_bounds = array<i64: 2, 9, 16>}, {transform_indices = @transform_2, window_bounds = array<i64: 2, 128, 2>}]} {
    %c0 = arith.constant 0 : index
    %c0_0 = arith.constant 0 : index
    %c0_1 = arith.constant 0 : index
    %0 = vector.load %arg1[%c0, %c0_0, %c0_1] : memref<2x128x9xf32, #tpu.memory_space<vmem>>, vector<1x128x9xf32>
    %1 = vector.shape_cast %0 : vector<1x128x9xf32> to vector<128x9xf32>
    %c0_2 = arith.constant 0 : index
    %c0_3 = arith.constant 0 : index
    %c0_4 = arith.constant 0 : index
    %2 = vector.load %arg2[%c0_2, %c0_3, %c0_4] : memref<2x9x16xf32, #tpu.memory_space<vmem>>, vector<1x9x16xf32>
    %3 = vector.shape_cast %2 : vector<1x9x16xf32> to vector<9x16xf32>
    %4 = vector.extract_strided_slice %1 {offsets = [0, 1], sizes = [128, 1], strides = [1, 1]} : vector<128x9xf32> to vector<128x1xf32>
    %5 = vector.extract_strided_slice %1 {offsets = [0, 2], sizes = [128, 1], strides = [1, 1]} : vector<128x9xf32> to vector<128x1xf32>
    %6 = vector.extract_strided_slice %1 {offsets = [0, 3], sizes = [128, 1], strides = [1, 1]} : vector<128x9xf32> to vector<128x1xf32>
    %7 = vector.extract_strided_slice %1 {offsets = [0, 4], sizes = [128, 1], strides = [1, 1]} : vector<128x9xf32> to vector<128x1xf32>
    %8 = vector.extract_strided_slice %3 {offsets = [0, 0], sizes = [1, 16], strides = [1, 1]} : vector<9x16xf32> to vector<1x16xf32>
    %9 = vector.extract_strided_slice %3 {offsets = [1, 0], sizes = [1, 16], strides = [1, 1]} : vector<9x16xf32> to vector<1x16xf32>
    %10 = vector.extract_strided_slice %3 {offsets = [2, 0], sizes = [1, 16], strides = [1, 1]} : vector<9x16xf32> to vector<1x16xf32>
    %11 = vector.extract_strided_slice %3 {offsets = [3, 0], sizes = [1, 16], strides = [1, 1]} : vector<9x16xf32> to vector<1x16xf32>
    %12 = arith.subf %6, %4 : vector<128x1xf32>
    %cst = arith.constant 1.000000e+00 : f32
    %13 = vector.broadcast %cst : f32 to vector<128x1xf32>
    %14 = arith.addf %12, %13 : vector<128x1xf32>
    %15 = arith.subf %7, %5 : vector<128x1xf32>
    %cst_5 = arith.constant 1.000000e+00 : f32
    %16 = vector.broadcast %cst_5 : f32 to vector<128x1xf32>
    %17 = arith.addf %15, %16 : vector<128x1xf32>
    %18 = arith.subf %10, %8 : vector<1x16xf32>
    %cst_6 = arith.constant 1.000000e+00 : f32
    %19 = vector.broadcast %cst_6 : f32 to vector<1x16xf32>
    %20 = arith.addf %18, %19 : vector<1x16xf32>
    %21 = arith.subf %11, %9 : vector<1x16xf32>
    %cst_7 = arith.constant 1.000000e+00 : f32
    %22 = vector.broadcast %cst_7 : f32 to vector<1x16xf32>
    %23 = arith.addf %21, %22 : vector<1x16xf32>
    %24 = arith.mulf %14, %17 : vector<128x1xf32>
    %25 = arith.mulf %20, %23 : vector<1x16xf32>
    %26 = vector.broadcast %6 : vector<128x1xf32> to vector<128x16xf32>
    %27 = vector.broadcast %10 : vector<1x16xf32> to vector<128x16xf32>
    %28 = arith.minimumf %26, %27 : vector<128x16xf32>
    %29 = vector.broadcast %4 : vector<128x1xf32> to vector<128x16xf32>
    %30 = vector.broadcast %8 : vector<1x16xf32> to vector<128x16xf32>
    %31 = arith.maximumf %29, %30 : vector<128x16xf32>
    %32 = arith.subf %28, %31 : vector<128x16xf32>
    %cst_8 = arith.constant 1.000000e+00 : f32
    %33 = vector.broadcast %cst_8 : f32 to vector<128x16xf32>
    %34 = arith.addf %32, %33 : vector<128x16xf32>
    %cst_9 = arith.constant 0.000000e+00 : f32
    %35 = vector.broadcast %cst_9 : f32 to vector<128x16xf32>
    %36 = arith.maximumf %34, %35 : vector<128x16xf32>
    %37 = vector.broadcast %7 : vector<128x1xf32> to vector<128x16xf32>
    %38 = vector.broadcast %11 : vector<1x16xf32> to vector<128x16xf32>
    %39 = arith.minimumf %37, %38 : vector<128x16xf32>
    %40 = vector.broadcast %5 : vector<128x1xf32> to vector<128x16xf32>
    %41 = vector.broadcast %9 : vector<1x16xf32> to vector<128x16xf32>
    %42 = arith.maximumf %40, %41 : vector<128x16xf32>
    %43 = arith.subf %39, %42 : vector<128x16xf32>
    %cst_10 = arith.constant 1.000000e+00 : f32
    %44 = vector.broadcast %cst_10 : f32 to vector<128x16xf32>
    %45 = arith.addf %43, %44 : vector<128x16xf32>
    %cst_11 = arith.constant 0.000000e+00 : f32
    %46 = vector.broadcast %cst_11 : f32 to vector<128x16xf32>
    %47 = arith.maximumf %45, %46 : vector<128x16xf32>
    %48 = arith.mulf %36, %47 : vector<128x16xf32>
    %49 = vector.broadcast %24 : vector<128x1xf32> to vector<128x16xf32>
    %50 = vector.broadcast %25 : vector<1x16xf32> to vector<128x16xf32>
    %51 = arith.addf %49, %50 : vector<128x16xf32>
    %52 = arith.subf %51, %48 : vector<128x16xf32>
    %cst_12 = arith.constant 1.000000e+00 : f32
    %53 = vector.broadcast %cst_12 : f32 to vector<128x1xf32>
    %54 = arith.cmpf oeq, %14, %53 : vector<128x1xf32>
    %cst_13 = arith.constant 1.000000e+00 : f32
    %55 = vector.broadcast %cst_13 : f32 to vector<128x1xf32>
    %56 = arith.cmpf oeq, %17, %55 : vector<128x1xf32>
    %57 = arith.andi %54, %56 : vector<128x1xi1>
    %cst_14 = arith.constant 1.000000e+00 : f32
    %58 = vector.broadcast %cst_14 : f32 to vector<1x16xf32>
    %59 = arith.cmpf oeq, %20, %58 : vector<1x16xf32>
    %cst_15 = arith.constant 1.000000e+00 : f32
    %60 = vector.broadcast %cst_15 : f32 to vector<1x16xf32>
    %61 = arith.cmpf oeq, %23, %60 : vector<1x16xf32>
    %62 = arith.andi %59, %61 : vector<1x16xi1>
    %63 = vector.extract_strided_slice %1 {offsets = [0, 5], sizes = [128, 1], strides = [1, 1]} : vector<128x9xf32> to vector<128x1xf32>
    %64 = vector.extract_strided_slice %1 {offsets = [0, 6], sizes = [128, 1], strides = [1, 1]} : vector<128x9xf32> to vector<128x1xf32>
    %65 = vector.extract_strided_slice %1 {offsets = [0, 7], sizes = [128, 1], strides = [1, 1]} : vector<128x9xf32> to vector<128x1xf32>
    %66 = vector.extract_strided_slice %1 {offsets = [0, 8], sizes = [128, 1], strides = [1, 1]} : vector<128x9xf32> to vector<128x1xf32>
    %67 = vector.extract_strided_slice %3 {offsets = [4, 0], sizes = [1, 16], strides = [1, 1]} : vector<9x16xf32> to vector<1x16xf32>
    %68 = vector.extract_strided_slice %3 {offsets = [5, 0], sizes = [1, 16], strides = [1, 1]} : vector<9x16xf32> to vector<1x16xf32>
    %69 = vector.extract_strided_slice %3 {offsets = [6, 0], sizes = [1, 16], strides = [1, 1]} : vector<9x16xf32> to vector<1x16xf32>
    %70 = vector.extract_strided_slice %3 {offsets = [7, 0], sizes = [1, 16], strides = [1, 1]} : vector<9x16xf32> to vector<1x16xf32>
    %71 = arith.subf %65, %63 : vector<128x1xf32>
    %cst_16 = arith.constant 1.000000e+00 : f32
    %72 = vector.broadcast %cst_16 : f32 to vector<128x1xf32>
    %73 = arith.addf %71, %72 : vector<128x1xf32>
    %74 = arith.subf %66, %64 : vector<128x1xf32>
    %cst_17 = arith.constant 1.000000e+00 : f32
    %75 = vector.broadcast %cst_17 : f32 to vector<128x1xf32>
    %76 = arith.addf %74, %75 : vector<128x1xf32>
    %77 = arith.subf %69, %67 : vector<1x16xf32>
    %cst_18 = arith.constant 1.000000e+00 : f32
    %78 = vector.broadcast %cst_18 : f32 to vector<1x16xf32>
    %79 = arith.addf %77, %78 : vector<1x16xf32>
    %80 = arith.subf %70, %68 : vector<1x16xf32>
    %cst_19 = arith.constant 1.000000e+00 : f32
    %81 = vector.broadcast %cst_19 : f32 to vector<1x16xf32>
    %82 = arith.addf %80, %81 : vector<1x16xf32>
    %83 = arith.mulf %73, %76 : vector<128x1xf32>
    %84 = arith.mulf %79, %82 : vector<1x16xf32>
    %85 = vector.broadcast %65 : vector<128x1xf32> to vector<128x16xf32>
    %86 = vector.broadcast %69 : vector<1x16xf32> to vector<128x16xf32>
    %87 = arith.minimumf %85, %86 : vector<128x16xf32>
    %88 = vector.broadcast %63 : vector<128x1xf32> to vector<128x16xf32>
    %89 = vector.broadcast %67 : vector<1x16xf32> to vector<128x16xf32>
    %90 = arith.maximumf %88, %89 : vector<128x16xf32>
    %91 = arith.subf %87, %90 : vector<128x16xf32>
    %cst_20 = arith.constant 1.000000e+00 : f32
    %92 = vector.broadcast %cst_20 : f32 to vector<128x16xf32>
    %93 = arith.addf %91, %92 : vector<128x16xf32>
    %cst_21 = arith.constant 0.000000e+00 : f32
    %94 = vector.broadcast %cst_21 : f32 to vector<128x16xf32>
    %95 = arith.maximumf %93, %94 : vector<128x16xf32>
    %96 = vector.broadcast %66 : vector<128x1xf32> to vector<128x16xf32>
    %97 = vector.broadcast %70 : vector<1x16xf32> to vector<128x16xf32>
    %98 = arith.minimumf %96, %97 : vector<128x16xf32>
    %99 = vector.broadcast %64 : vector<128x1xf32> to vector<128x16xf32>
    %100 = vector.broadcast %68 : vector<1x16xf32> to vector<128x16xf32>
    %101 = arith.maximumf %99, %100 : vector<128x16xf32>
    %102 = arith.subf %98, %101 : vector<128x16xf32>
    %cst_22 = arith.constant 1.000000e+00 : f32
    %103 = vector.broadcast %cst_22 : f32 to vector<128x16xf32>
    %104 = arith.addf %102, %103 : vector<128x16xf32>
    %cst_23 = arith.constant 0.000000e+00 : f32
    %105 = vector.broadcast %cst_23 : f32 to vector<128x16xf32>
    %106 = arith.maximumf %104, %105 : vector<128x16xf32>
    %107 = arith.mulf %95, %106 : vector<128x16xf32>
    %108 = vector.broadcast %83 : vector<128x1xf32> to vector<128x16xf32>
    %109 = vector.broadcast %84 : vector<1x16xf32> to vector<128x16xf32>
    %110 = arith.addf %108, %109 : vector<128x16xf32>
    %111 = arith.subf %110, %107 : vector<128x16xf32>
    %cst_24 = arith.constant 1.000000e+00 : f32
    %112 = vector.broadcast %cst_24 : f32 to vector<128x1xf32>
    %113 = arith.cmpf oeq, %73, %112 : vector<128x1xf32>
    %cst_25 = arith.constant 1.000000e+00 : f32
    %114 = vector.broadcast %cst_25 : f32 to vector<128x1xf32>
    %115 = arith.cmpf oeq, %76, %114 : vector<128x1xf32>
    %116 = arith.andi %113, %115 : vector<128x1xi1>
    %cst_26 = arith.constant 1.000000e+00 : f32
    %117 = vector.broadcast %cst_26 : f32 to vector<1x16xf32>
    %118 = arith.cmpf oeq, %79, %117 : vector<1x16xf32>
    %cst_27 = arith.constant 1.000000e+00 : f32
    %119 = vector.broadcast %cst_27 : f32 to vector<1x16xf32>
    %120 = arith.cmpf oeq, %82, %119 : vector<1x16xf32>
    %121 = arith.andi %118, %120 : vector<1x16xi1>
    %122 = arith.mulf %48, %107 : vector<128x16xf32>
    %123 = arith.mulf %52, %111 : vector<128x16xf32>
    %124 = arith.divf %122, %123 : vector<128x16xf32>
    %125 = arith.ori %62, %121 : vector<1x16xi1>
    %cst_28 = arith.constant 0.000000e+00 : f32
    %126 = vector.shape_cast %125 : vector<1x16xi1> to vector<1x16xi1>
    %127 = vector.broadcast %126 : vector<1x16xi1> to vector<128x16xi1>
    %128 = vector.broadcast %cst_28 : f32 to vector<128x16xf32>
    %129 = arith.select %127, %128, %124 : vector<128x16xi1>, vector<128x16xf32>
    %130 = arith.ori %57, %116 : vector<128x1xi1>
    %cst_29 = arith.constant -1.000000e+00 : f32
    %131 = vector.shape_cast %130 : vector<128x1xi1> to vector<128x1xi1>
    %132 = vector.broadcast %131 : vector<128x1xi1> to vector<128x16xi1>
    %133 = vector.broadcast %cst_29 : f32 to vector<128x16xf32>
    %134 = arith.select %132, %133, %129 : vector<128x16xi1>, vector<128x16xf32>
    %cst_30 = arith.constant dense<0xFF800000> : vector<128xf32>
    %135 = vector.multi_reduction <maximumf>, %134, %cst_30 [1] : vector<128x16xf32> to vector<128xf32>
    %136 = vector.shape_cast %135 : vector<128xf32> to vector<128x1xf32>
    %137 = tpu.iota {dimensions = array<i32: 1>} : vector<128x16xi32>
    %138 = vector.broadcast %136 : vector<128x1xf32> to vector<128x16xf32>
    %139 = arith.cmpf oeq, %134, %138 : vector<128x16xf32>
    %c16_i32 = arith.constant 16 : i32
    %140 = vector.broadcast %c16_i32 : i32 to vector<128x16xi32>
    %141 = arith.select %139, %137, %140 : vector<128x16xi1>, vector<128x16xi32>
    %cst_31 = arith.constant dense<2147483647> : vector<128xi32>
    %142 = vector.multi_reduction <minsi>, %141, %cst_31 [1] : vector<128x16xi32> to vector<128xi32>
    %143 = vector.shape_cast %142 : vector<128xi32> to vector<128x1xi32>
    %144 = vector.extract_strided_slice %3 {offsets = [8, 0], sizes = [1, 16], strides = [1, 1]} : vector<9x16xf32> to vector<1x16xf32>
    %145 = vector.broadcast %143 : vector<128x1xi32> to vector<128x16xi32>
    %146 = arith.cmpi eq, %137, %145 : vector<128x16xi32>
    %cst_32 = arith.constant 0.000000e+00 : f32
    %147 = vector.shape_cast %144 : vector<1x16xf32> to vector<1x16xf32>
    %148 = vector.broadcast %147 : vector<1x16xf32> to vector<128x16xf32>
    %149 = vector.broadcast %cst_32 : f32 to vector<128x16xf32>
    %150 = arith.select %146, %148, %149 : vector<128x16xi1>, vector<128x16xf32>
    %cst_33 = arith.constant dense<0.000000e+00> : vector<128xf32>
    %151 = vector.multi_reduction <add>, %150, %cst_33 [1] : vector<128x16xf32> to vector<128xf32>
    %152 = vector.shape_cast %151 : vector<128xf32> to vector<128x1xf32>
    %c0_34 = arith.constant 0 : index
    %c0_35 = arith.constant 0 : index
    %c0_36 = arith.constant 0 : index
    %153 = vector.load %arg3[%c0_34, %c0_35, %c0_36] : memref<2x128x2xf32, #tpu.memory_space<vmem>>, vector<1x128x1xf32>
    %154 = vector.shape_cast %153 : vector<1x128x1xf32> to vector<128x1xf32>
    %155 = vector.shape_cast %136 : vector<128x1xf32> to vector<1x128x1xf32>
    tpu.vector_store %arg3[%c0_34, %c0_35, %c0_36], %155 {strides = array<i32>} : memref<2x128x2xf32, #tpu.memory_space<vmem>>, vector<1x128x1xf32>,
    %c0_37 = arith.constant 0 : index
    %c0_38 = arith.constant 0 : index
    %c1 = arith.constant 1 : index
    %156 = vector.load %arg3[%c0_37, %c0_38, %c1] : memref<2x128x2xf32, #tpu.memory_space<vmem>>, vector<1x128x1xf32>
    %157 = vector.shape_cast %156 : vector<1x128x1xf32> to vector<128x1xf32>
    %158 = vector.shape_cast %152 : vector<128x1xf32> to vector<1x128x1xf32>
    tpu.vector_store %arg3[%c0_37, %c0_38, %c1], %158 {strides = array<i32>} : memref<2x128x2xf32, #tpu.memory_space<vmem>>, vector<1x128x1xf32>,
    %c1_39 = arith.constant 1 : index
    %c0_40 = arith.constant 0 : index
    %c0_41 = arith.constant 0 : index
    %159 = vector.load %arg1[%c1_39, %c0_40, %c0_41] : memref<2x128x9xf32, #tpu.memory_space<vmem>>, vector<1x128x9xf32>
    %160 = vector.shape_cast %159 : vector<1x128x9xf32> to vector<128x9xf32>
    %c1_42 = arith.constant 1 : index
    %c0_43 = arith.constant 0 : index
    %c0_44 = arith.constant 0 : index
    %161 = vector.load %arg2[%c1_42, %c0_43, %c0_44] : memref<2x9x16xf32, #tpu.memory_space<vmem>>, vector<1x9x16xf32>
    %162 = vector.shape_cast %161 : vector<1x9x16xf32> to vector<9x16xf32>
    %163 = vector.extract_strided_slice %160 {offsets = [0, 1], sizes = [128, 1], strides = [1, 1]} : vector<128x9xf32> to vector<128x1xf32>
    %164 = vector.extract_strided_slice %160 {offsets = [0, 2], sizes = [128, 1], strides = [1, 1]} : vector<128x9xf32> to vector<128x1xf32>
    %165 = vector.extract_strided_slice %160 {offsets = [0, 3], sizes = [128, 1], strides = [1, 1]} : vector<128x9xf32> to vector<128x1xf32>
    %166 = vector.extract_strided_slice %160 {offsets = [0, 4], sizes = [128, 1], strides = [1, 1]} : vector<128x9xf32> to vector<128x1xf32>
    %167 = vector.extract_strided_slice %162 {offsets = [0, 0], sizes = [1, 16], strides = [1, 1]} : vector<9x16xf32> to vector<1x16xf32>
    %168 = vector.extract_strided_slice %162 {offsets = [1, 0], sizes = [1, 16], strides = [1, 1]} : vector<9x16xf32> to vector<1x16xf32>
    %169 = vector.extract_strided_slice %162 {offsets = [2, 0], sizes = [1, 16], strides = [1, 1]} : vector<9x16xf32> to vector<1x16xf32>
    %170 = vector.extract_strided_slice %162 {offsets = [3, 0], sizes = [1, 16], strides = [1, 1]} : vector<9x16xf32> to vector<1x16xf32>
    %171 = arith.subf %165, %163 : vector<128x1xf32>
    %cst_45 = arith.constant 1.000000e+00 : f32
    %172 = vector.broadcast %cst_45 : f32 to vector<128x1xf32>
    %173 = arith.addf %171, %172 : vector<128x1xf32>
    %174 = arith.subf %166, %164 : vector<128x1xf32>
    %cst_46 = arith.constant 1.000000e+00 : f32
    %175 = vector.broadcast %cst_46 : f32 to vector<128x1xf32>
    %176 = arith.addf %174, %175 : vector<128x1xf32>
    %177 = arith.subf %169, %167 : vector<1x16xf32>
    %cst_47 = arith.constant 1.000000e+00 : f32
    %178 = vector.broadcast %cst_47 : f32 to vector<1x16xf32>
    %179 = arith.addf %177, %178 : vector<1x16xf32>
    %180 = arith.subf %170, %168 : vector<1x16xf32>
    %cst_48 = arith.constant 1.000000e+00 : f32
    %181 = vector.broadcast %cst_48 : f32 to vector<1x16xf32>
    %182 = arith.addf %180, %181 : vector<1x16xf32>
    %183 = arith.mulf %173, %176 : vector<128x1xf32>
    %184 = arith.mulf %179, %182 : vector<1x16xf32>
    %185 = vector.broadcast %165 : vector<128x1xf32> to vector<128x16xf32>
    %186 = vector.broadcast %169 : vector<1x16xf32> to vector<128x16xf32>
    %187 = arith.minimumf %185, %186 : vector<128x16xf32>
    %188 = vector.broadcast %163 : vector<128x1xf32> to vector<128x16xf32>
    %189 = vector.broadcast %167 : vector<1x16xf32> to vector<128x16xf32>
    %190 = arith.maximumf %188, %189 : vector<128x16xf32>
    %191 = arith.subf %187, %190 : vector<128x16xf32>
    %cst_49 = arith.constant 1.000000e+00 : f32
    %192 = vector.broadcast %cst_49 : f32 to vector<128x16xf32>
    %193 = arith.addf %191, %192 : vector<128x16xf32>
    %cst_50 = arith.constant 0.000000e+00 : f32
    %194 = vector.broadcast %cst_50 : f32 to vector<128x16xf32>
    %195 = arith.maximumf %193, %194 : vector<128x16xf32>
    %196 = vector.broadcast %166 : vector<128x1xf32> to vector<128x16xf32>
    %197 = vector.broadcast %170 : vector<1x16xf32> to vector<128x16xf32>
    %198 = arith.minimumf %196, %197 : vector<128x16xf32>
    %199 = vector.broadcast %164 : vector<128x1xf32> to vector<128x16xf32>
    %200 = vector.broadcast %168 : vector<1x16xf32> to vector<128x16xf32>
    %201 = arith.maximumf %199, %200 : vector<128x16xf32>
    %202 = arith.subf %198, %201 : vector<128x16xf32>
    %cst_51 = arith.constant 1.000000e+00 : f32
    %203 = vector.broadcast %cst_51 : f32 to vector<128x16xf32>
    %204 = arith.addf %202, %203 : vector<128x16xf32>
    %cst_52 = arith.constant 0.000000e+00 : f32
    %205 = vector.broadcast %cst_52 : f32 to vector<128x16xf32>
    %206 = arith.maximumf %204, %205 : vector<128x16xf32>
    %207 = arith.mulf %195, %206 : vector<128x16xf32>
    %208 = vector.broadcast %183 : vector<128x1xf32> to vector<128x16xf32>
    %209 = vector.broadcast %184 : vector<1x16xf32> to vector<128x16xf32>
    %210 = arith.addf %208, %209 : vector<128x16xf32>
    %211 = arith.subf %210, %207 : vector<128x16xf32>
    %cst_53 = arith.constant 1.000000e+00 : f32
    %212 = vector.broadcast %cst_53 : f32 to vector<128x1xf32>
    %213 = arith.cmpf oeq, %173, %212 : vector<128x1xf32>
    %cst_54 = arith.constant 1.000000e+00 : f32
    %214 = vector.broadcast %cst_54 : f32 to vector<128x1xf32>
    %215 = arith.cmpf oeq, %176, %214 : vector<128x1xf32>
    %216 = arith.andi %213, %215 : vector<128x1xi1>
    %cst_55 = arith.constant 1.000000e+00 : f32
    %217 = vector.broadcast %cst_55 : f32 to vector<1x16xf32>
    %218 = arith.cmpf oeq, %179, %217 : vector<1x16xf32>
    %cst_56 = arith.constant 1.000000e+00 : f32
    %219 = vector.broadcast %cst_56 : f32 to vector<1x16xf32>
    %220 = arith.cmpf oeq, %182, %219 : vector<1x16xf32>
    %221 = arith.andi %218, %220 : vector<1x16xi1>
    %222 = vector.extract_strided_slice %160 {offsets = [0, 5], sizes = [128, 1], strides = [1, 1]} : vector<128x9xf32> to vector<128x1xf32>
    %223 = vector.extract_strided_slice %160 {offsets = [0, 6], sizes = [128, 1], strides = [1, 1]} : vector<128x9xf32> to vector<128x1xf32>
    %224 = vector.extract_strided_slice %160 {offsets = [0, 7], sizes = [128, 1], strides = [1, 1]} : vector<128x9xf32> to vector<128x1xf32>
    %225 = vector.extract_strided_slice %160 {offsets = [0, 8], sizes = [128, 1], strides = [1, 1]} : vector<128x9xf32> to vector<128x1xf32>
    %226 = vector.extract_strided_slice %162 {offsets = [4, 0], sizes = [1, 16], strides = [1, 1]} : vector<9x16xf32> to vector<1x16xf32>
    %227 = vector.extract_strided_slice %162 {offsets = [5, 0], sizes = [1, 16], strides = [1, 1]} : vector<9x16xf32> to vector<1x16xf32>
    %228 = vector.extract_strided_slice %162 {offsets = [6, 0], sizes = [1, 16], strides = [1, 1]} : vector<9x16xf32> to vector<1x16xf32>
    %229 = vector.extract_strided_slice %162 {offsets = [7, 0], sizes = [1, 16], strides = [1, 1]} : vector<9x16xf32> to vector<1x16xf32>
    %230 = arith.subf %224, %222 : vector<128x1xf32>
    %cst_57 = arith.constant 1.000000e+00 : f32
    %231 = vector.broadcast %cst_57 : f32 to vector<128x1xf32>
    %232 = arith.addf %230, %231 : vector<128x1xf32>
    %233 = arith.subf %225, %223 : vector<128x1xf32>
    %cst_58 = arith.constant 1.000000e+00 : f32
    %234 = vector.broadcast %cst_58 : f32 to vector<128x1xf32>
    %235 = arith.addf %233, %234 : vector<128x1xf32>
    %236 = arith.subf %228, %226 : vector<1x16xf32>
    %cst_59 = arith.constant 1.000000e+00 : f32
    %237 = vector.broadcast %cst_59 : f32 to vector<1x16xf32>
    %238 = arith.addf %236, %237 : vector<1x16xf32>
    %239 = arith.subf %229, %227 : vector<1x16xf32>
    %cst_60 = arith.constant 1.000000e+00 : f32
    %240 = vector.broadcast %cst_60 : f32 to vector<1x16xf32>
    %241 = arith.addf %239, %240 : vector<1x16xf32>
    %242 = arith.mulf %232, %235 : vector<128x1xf32>
    %243 = arith.mulf %238, %241 : vector<1x16xf32>
    %244 = vector.broadcast %224 : vector<128x1xf32> to vector<128x16xf32>
    %245 = vector.broadcast %228 : vector<1x16xf32> to vector<128x16xf32>
    %246 = arith.minimumf %244, %245 : vector<128x16xf32>
    %247 = vector.broadcast %222 : vector<128x1xf32> to vector<128x16xf32>
    %248 = vector.broadcast %226 : vector<1x16xf32> to vector<128x16xf32>
    %249 = arith.maximumf %247, %248 : vector<128x16xf32>
    %250 = arith.subf %246, %249 : vector<128x16xf32>
    %cst_61 = arith.constant 1.000000e+00 : f32
    %251 = vector.broadcast %cst_61 : f32 to vector<128x16xf32>
    %252 = arith.addf %250, %251 : vector<128x16xf32>
    %cst_62 = arith.constant 0.000000e+00 : f32
    %253 = vector.broadcast %cst_62 : f32 to vector<128x16xf32>
    %254 = arith.maximumf %252, %253 : vector<128x16xf32>
    %255 = vector.broadcast %225 : vector<128x1xf32> to vector<128x16xf32>
    %256 = vector.broadcast %229 : vector<1x16xf32> to vector<128x16xf32>
    %257 = arith.minimumf %255, %256 : vector<128x16xf32>
    %258 = vector.broadcast %223 : vector<128x1xf32> to vector<128x16xf32>
    %259 = vector.broadcast %227 : vector<1x16xf32> to vector<128x16xf32>
    %260 = arith.maximumf %258, %259 : vector<128x16xf32>
    %261 = arith.subf %257, %260 : vector<128x16xf32>
    %cst_63 = arith.constant 1.000000e+00 : f32
    %262 = vector.broadcast %cst_63 : f32 to vector<128x16xf32>
    %263 = arith.addf %261, %262 : vector<128x16xf32>
    %cst_64 = arith.constant 0.000000e+00 : f32
    %264 = vector.broadcast %cst_64 : f32 to vector<128x16xf32>
    %265 = arith.maximumf %263, %264 : vector<128x16xf32>
    %266 = arith.mulf %254, %265 : vector<128x16xf32>
    %267 = vector.broadcast %242 : vector<128x1xf32> to vector<128x16xf32>
    %268 = vector.broadcast %243 : vector<1x16xf32> to vector<128x16xf32>
    %269 = arith.addf %267, %268 : vector<128x16xf32>
    %270 = arith.subf %269, %266 : vector<128x16xf32>
    %cst_65 = arith.constant 1.000000e+00 : f32
    %271 = vector.broadcast %cst_65 : f32 to vector<128x1xf32>
    %272 = arith.cmpf oeq, %232, %271 : vector<128x1xf32>
    %cst_66 = arith.constant 1.000000e+00 : f32
    %273 = vector.broadcast %cst_66 : f32 to vector<128x1xf32>
    %274 = arith.cmpf oeq, %235, %273 : vector<128x1xf32>
    %275 = arith.andi %272, %274 : vector<128x1xi1>
    %cst_67 = arith.constant 1.000000e+00 : f32
    %276 = vector.broadcast %cst_67 : f32 to vector<1x16xf32>
    %277 = arith.cmpf oeq, %238, %276 : vector<1x16xf32>
    %cst_68 = arith.constant 1.000000e+00 : f32
    %278 = vector.broadcast %cst_68 : f32 to vector<1x16xf32>
    %279 = arith.cmpf oeq, %241, %278 : vector<1x16xf32>
    %280 = arith.andi %277, %279 : vector<1x16xi1>
    %281 = arith.mulf %207, %266 : vector<128x16xf32>
    %282 = arith.mulf %211, %270 : vector<128x16xf32>
    %283 = arith.divf %281, %282 : vector<128x16xf32>
    %284 = arith.ori %221, %280 : vector<1x16xi1>
    %cst_69 = arith.constant 0.000000e+00 : f32
    %285 = vector.shape_cast %284 : vector<1x16xi1> to vector<1x16xi1>
    %286 = vector.broadcast %285 : vector<1x16xi1> to vector<128x16xi1>
    %287 = vector.broadcast %cst_69 : f32 to vector<128x16xf32>
    %288 = arith.select %286, %287, %283 : vector<128x16xi1>, vector<128x16xf32>
    %289 = arith.ori %216, %275 : vector<128x1xi1>
    %cst_70 = arith.constant -1.000000e+00 : f32
    %290 = vector.shape_cast %289 : vector<128x1xi1> to vector<128x1xi1>
    %291 = vector.broadcast %290 : vector<128x1xi1> to vector<128x16xi1>
    %292 = vector.broadcast %cst_70 : f32 to vector<128x16xf32>
    %293 = arith.select %291, %292, %288 : vector<128x16xi1>, vector<128x16xf32>
    %cst_71 = arith.constant dense<0xFF800000> : vector<128xf32>
    %294 = vector.multi_reduction <maximumf>, %293, %cst_71 [1] : vector<128x16xf32> to vector<128xf32>
    %295 = vector.shape_cast %294 : vector<128xf32> to vector<128x1xf32>
    %296 = tpu.iota {dimensions = array<i32: 1>} : vector<128x16xi32>
    %297 = vector.broadcast %295 : vector<128x1xf32> to vector<128x16xf32>
    %298 = arith.cmpf oeq, %293, %297 : vector<128x16xf32>
    %c16_i32_72 = arith.constant 16 : i32
    %299 = vector.broadcast %c16_i32_72 : i32 to vector<128x16xi32>
    %300 = arith.select %298, %296, %299 : vector<128x16xi1>, vector<128x16xi32>
    %cst_73 = arith.constant dense<2147483647> : vector<128xi32>
    %301 = vector.multi_reduction <minsi>, %300, %cst_73 [1] : vector<128x16xi32> to vector<128xi32>
    %302 = vector.shape_cast %301 : vector<128xi32> to vector<128x1xi32>
    %303 = vector.extract_strided_slice %162 {offsets = [8, 0], sizes = [1, 16], strides = [1, 1]} : vector<9x16xf32> to vector<1x16xf32>
    %304 = vector.broadcast %302 : vector<128x1xi32> to vector<128x16xi32>
    %305 = arith.cmpi eq, %296, %304 : vector<128x16xi32>
    %cst_74 = arith.constant 0.000000e+00 : f32
    %306 = vector.shape_cast %303 : vector<1x16xf32> to vector<1x16xf32>
    %307 = vector.broadcast %306 : vector<1x16xf32> to vector<128x16xf32>
    %308 = vector.broadcast %cst_74 : f32 to vector<128x16xf32>
    %309 = arith.select %305, %307, %308 : vector<128x16xi1>, vector<128x16xf32>
    %cst_75 = arith.constant dense<0.000000e+00> : vector<128xf32>
    %310 = vector.multi_reduction <add>, %309, %cst_75 [1] : vector<128x16xf32> to vector<128xf32>
    %311 = vector.shape_cast %310 : vector<128xf32> to vector<128x1xf32>
    %c1_76 = arith.constant 1 : index
    %c0_77 = arith.constant 0 : index
    %c0_78 = arith.constant 0 : index
    %312 = vector.load %arg3[%c1_76, %c0_77, %c0_78] : memref<2x128x2xf32, #tpu.memory_space<vmem>>, vector<1x128x1xf32>
    %313 = vector.shape_cast %312 : vector<1x128x1xf32> to vector<128x1xf32>
    %314 = vector.shape_cast %295 : vector<128x1xf32> to vector<1x128x1xf32>
    tpu.vector_store %arg3[%c1_76, %c0_77, %c0_78], %314 {strides = array<i32>} : memref<2x128x2xf32, #tpu.memory_space<vmem>>, vector<1x128x1xf32>,
    %c1_79 = arith.constant 1 : index
    %c0_80 = arith.constant 0 : index
    %c1_81 = arith.constant 1 : index
    %315 = vector.load %arg3[%c1_79, %c0_80, %c1_81] : memref<2x128x2xf32, #tpu.memory_space<vmem>>, vector<1x128x1xf32>
    %316 = vector.shape_cast %315 : vector<1x128x1xf32> to vector<128x1xf32>
    %317 = vector.shape_cast %311 : vector<128x1xf32> to vector<1x128x1xf32>
    tpu.vector_store %arg3[%c1_79, %c0_80, %c1_81], %317 {strides = array<i32>} : memref<2x128x2xf32, #tpu.memory_space<vmem>>, vector<1x128x1xf32>,
    return
  }
  func.func @transform_0(%arg0: i32) -> (i32, i32, i32) {
    %c0_i32 = arith.constant 0 : i32
    %c0_i32_0 = arith.constant 0 : i32
    %c0_i32_1 = arith.constant 0 : i32
    return %arg0, %c0_i32, %c0_i32_0 : i32, i32, i32
  }
  func.func @transform_1(%arg0: i32) -> (i32, i32, i32) {
    %c0_i32 = arith.constant 0 : i32
    %c0_i32_0 = arith.constant 0 : i32
    %c0_i32_1 = arith.constant 0 : i32
    return %arg0, %c0_i32, %c0_i32_0 : i32, i32, i32
  }
  func.func @transform_2(%arg0: i32) -> (i32, i32, i32) {
    %c0_i32 = arith.constant 0 : i32
    %c0_i32_0 = arith.constant 0 : i32
    %c0_i32_1 = arith.constant 0 : i32
    return %arg0, %c0_i32, %c0_i32_0 : i32, i32, i32
  }
}

</mosaic_0001>

<llo_original>
// kernel: _relpn_forward.1
$region0: #{_relpn_forward.1}
  #allocation0 [shape = 'u32[]', space=smem, size = 0x4, offset = 0x4, fixed_abs, tag = 'smem constant byte address 0x4 - core index']
  #allocation1 [shape = 'u32[72,128]{1,0:T(1,128)}', space=vmem, size = 0x9000, scoped, tag = 'internal scratch']
  %s0 = inlined_call_operand.vmem [shape: f32[2,128,9], index: 0, kind: input, shape index: {}]
  %s1 = inlined_call_operand.vmem [shape: f32[2,9,16], index: 1, kind: input, shape index: {}]
  %s2 = inlined_call_operand.vmem [shape: f32[2,128,2], index: 2, kind: output, shape index: {}]
  %s3 = sld [smem:[#allocation0]]
  $region18: #{_relpn_forward.1} parent=0
    _
  %s5 = ssub.s32 1, %s3
  %s6 = scalar_select 0, %s5, %s3
  // Predicated region
  $region2: #{_relpn_forward.1} parent=0 // pred_check
    _
  $region3: #{_relpn_forward.1} parent=0 // pred_check_branch
    %8 = sbr.rel (0) target = $region5
  $region4: #{_relpn_forward.1} parent=0 // pred_region
    _
  $region5: #{_relpn_forward.1} parent=0 // pred_fallthru
    _
  // Predicated region
  $region6: #{_relpn_forward.1} parent=0 // pred_check
    _
  $region7: #{_relpn_forward.1} parent=0 // pred_check_branch
    %10 = sbr.rel (0) target = $region9
  $region8: #{_relpn_forward.1} parent=0 // pred_region
    _
  $region9: #{_relpn_forward.1} parent=0 // pred_fallthru
    _
  %v11 = vld [vmem:[%s0] sm:$0xff]
  %v12 = vld [vmem:[%s0 + $0x8] sm:$0xff]
  %v13 = vld [vmem:[%s0 + $0x10] sm:$0xff]
  %v14 = vld [vmem:[%s0 + $0x18] sm:$0xff]
  %v15 = vld [vmem:[%s0 + $0x20] sm:$0xff]
  %v16 = vld [vmem:[%s0 + $0x28] sm:$0xff]
  %v17 = vld [vmem:[%s0 + $0x30] sm:$0xff]
  %v18 = vld [vmem:[%s0 + $0x38] sm:$0xff]
  %v19 = vld [vmem:[%s0 + $0x40] sm:$0xff]
  %v20 = vld [vmem:[%s0 + $0x48] sm:$0xff]
  %v21 = vld [vmem:[%s0 + $0x50] sm:$0xff]
  %v22 = vld [vmem:[%s0 + $0x58] sm:$0xff]
  %v23 = vld [vmem:[%s0 + $0x60] sm:$0xff]
  %v24 = vld [vmem:[%s0 + $0x68] sm:$0xff]
  %v25 = vld [vmem:[%s0 + $0x70] sm:$0xff]
  %v26 = vld [vmem:[%s0 + $0x78] sm:$0xff]
  %v27 = vld [vmem:[%s1] sm:$0xff]
  %v28 = vld [vmem:[%s1 + $0x8] sm:$0x1]
  %45 = vrot.lane.b32.xlu0 %v11, 2
  %v46 = vpop.permute.xlu0 %45
  %47 = vrot.lane.b32.xlu0 %v12, 2
  %v48 = vpop.permute.xlu0 %47
  %49 = vrot.lane.b32.xlu0 %v13, 2
  %v50 = vpop.permute.xlu0 %49
  %51 = vrot.lane.b32.xlu0 %v14, 2
  %v52 = vpop.permute.xlu0 %51
  %53 = vrot.lane.b32.xlu0 %v15, 2
  %v54 = vpop.permute.xlu0 %53
  %55 = vrot.lane.b32.xlu0 %v16, 2
  %v56 = vpop.permute.xlu0 %55
  %57 = vrot.lane.b32.xlu0 %v17, 2
  %v58 = vpop.permute.xlu0 %57
  %59 = vrot.lane.b32.xlu0 %v18, 2
  %v60 = vpop.permute.xlu0 %59
  %61 = vrot.lane.b32.xlu0 %v19, 2
  %v62 = vpop.permute.xlu0 %61
  %63 = vrot.lane.b32.xlu0 %v20, 2
  %v64 = vpop.permute.xlu0 %63
  %65 = vrot.lane.b32.xlu0 %v21, 2
  %v66 = vpop.permute.xlu0 %65
  %67 = vrot.lane.b32.xlu0 %v22, 2
  %v68 = vpop.permute.xlu0 %67
  %69 = vrot.lane.b32.xlu0 %v23, 2
  %v70 = vpop.permute.xlu0 %69
  %71 = vrot.lane.b32.xlu0 %v24, 2
  %v72 = vpop.permute.xlu0 %71
  %73 = vrot.lane.b32.xlu0 %v25, 2
  %v74 = vpop.permute.xlu0 %73
  %75 = vrot.lane.b32.xlu0 %v26, 2
  %v76 = vpop.permute.xlu0 %75
  %v93 = vsub.f32 %v11, %v46
  %v94 = vsub.f32 %v12, %v48
  %v95 = vsub.f32 %v13, %v50
  %v96 = vsub.f32 %v14, %v52
  %v97 = vsub.f32 %v15, %v54
  %v98 = vsub.f32 %v16, %v56
  %v99 = vsub.f32 %v17, %v58
  %v100 = vsub.f32 %v18, %v60
  %v101 = vsub.f32 %v19, %v62
  %v102 = vsub.f32 %v20, %v64
  %v103 = vsub.f32 %v21, %v66
  %v104 = vsub.f32 %v22, %v68
  %v105 = vsub.f32 %v23, %v70
  %v106 = vsub.f32 %v24, %v72
  %v107 = vsub.f32 %v25, %v74
  %v108 = vsub.f32 %v26, %v76
  %v109 = vadd.f32 %v93, 1.0
  %v110 = vadd.f32 %v94, 1.0
  %v111 = vadd.f32 %v95, 1.0
  %v112 = vadd.f32 %v96, 1.0
  %v113 = vadd.f32 %v97, 1.0
  %v114 = vadd.f32 %v98, 1.0
  %v115 = vadd.f32 %v99, 1.0
  %v116 = vadd.f32 %v100, 1.0
  %v117 = vadd.f32 %v101, 1.0
  %v118 = vadd.f32 %v102, 1.0
  %v119 = vadd.f32 %v103, 1.0
  %v120 = vadd.f32 %v104, 1.0
  %v121 = vadd.f32 %v105, 1.0
  %v122 = vadd.f32 %v106, 1.0
  %v123 = vadd.f32 %v107, 1.0
  %v124 = vadd.f32 %v108, 1.0
  %v126 = vrot.slane %v27, 6
  %v128 = vsub.f32 %v27, %v126
  %v129 = vadd.f32 %v128, 1.0
  %146 = vrot.lane.b32.xlu0 %v109, 127
  %v147 = vpop.permute.xlu0 %146
  %148 = vrot.lane.b32.xlu0 %v110, 127
  %v149 = vpop.permute.xlu0 %148
  %150 = vrot.lane.b32.xlu0 %v111, 127
  %v151 = vpop.permute.xlu0 %150
  %152 = vrot.lane.b32.xlu0 %v112, 127
  %v153 = vpop.permute.xlu0 %152
  %154 = vrot.lane.b32.xlu0 %v113, 127
  %v155 = vpop.permute.xlu0 %154
  %156 = vrot.lane.b32.xlu0 %v114, 127
  %v157 = vpop.permute.xlu0 %156
  %158 = vrot.lane.b32.xlu0 %v115, 127
  %v159 = vpop.permute.xlu0 %158
  %160 = vrot.lane.b32.xlu0 %v116, 127
  %v161 = vpop.permute.xlu0 %160
  %162 = vrot.lane.b32.xlu0 %v117, 127
  %v163 = vpop.permute.xlu0 %162
  %164 = vrot.lane.b32.xlu0 %v118, 127
  %v165 = vpop.permute.xlu0 %164
  %166 = vrot.lane.b32.xlu0 %v119, 127
  %v167 = vpop.permute.xlu0 %166
  %168 = vrot.lane.b32.xlu0 %v120, 127
  %v169 = vpop.permute.xlu0 %168
  %170 = vrot.lane.b32.xlu0 %v121, 127
  %v171 = vpop.permute.xlu0 %170
  %172 = vrot.lane.b32.xlu0 %v122, 127
  %v173 = vpop.permute.xlu0 %172
  %174 = vrot.lane.b32.xlu0 %v123, 127
  %v175 = vpop.permute.xlu0 %174
  %176 = vrot.lane.b32.xlu0 %v124, 127
  %v177 = vpop.permute.xlu0 %176
  %v194 = vmul.f32 %v109, %v147
  %v195 = vmul.f32 %v110, %v149
  %v196 = vmul.f32 %v111, %v151
  %v197 = vmul.f32 %v112, %v153
  %v198 = vmul.f32 %v113, %v155
  %v199 = vmul.f32 %v114, %v157
  %v200 = vmul.f32 %v115, %v159
  %v201 = vmul.f32 %v116, %v161
  %v202 = vmul.f32 %v117, %v163
  %v203 = vmul.f32 %v118, %v165
  %v204 = vmul.f32 %v119, %v167
  %v205 = vmul.f32 %v120, %v169
  %v206 = vmul.f32 %v121, %v171
  %v207 = vmul.f32 %v122, %v173
  %v208 = vmul.f32 %v123, %v175
  %v209 = vmul.f32 %v124, %v177
  %v211 = vrot.slane %v129, 1
  %v213 = vmul.f32 %v129, %v211
  %214 = vset.pattern.permute.xlu0 3
  %215 = vperm.xlu0 %214, %v11
  %v216 = vpop.permute.xlu0 %215
  %218 = vset.pattern.permute.xlu0 3
  %219 = vperm.xlu0 %218, %v12
  %v220 = vpop.permute.xlu0 %219
  %222 = vset.pattern.permute.xlu0 3
  %223 = vperm.xlu0 %222, %v13
  %v224 = vpop.permute.xlu0 %223
  %226 = vset.pattern.permute.xlu0 3
  %227 = vperm.xlu0 %226, %v14
  %v228 = vpop.permute.xlu0 %227
  %230 = vset.pattern.permute.xlu0 3
  %231 = vperm.xlu0 %230, %v15
  %v232 = vpop.permute.xlu0 %231
  %234 = vset.pattern.permute.xlu0 3
  %235 = vperm.xlu0 %234, %v16
  %v236 = vpop.permute.xlu0 %235
  %238 = vset.pattern.permute.xlu0 3
  %239 = vperm.xlu0 %238, %v17
  %v240 = vpop.permute.xlu0 %239
  %242 = vset.pattern.permute.xlu0 3
  %243 = vperm.xlu0 %242, %v18
  %v244 = vpop.permute.xlu0 %243
  %246 = vset.pattern.permute.xlu0 3
  %247 = vperm.xlu0 %246, %v19
  %v248 = vpop.permute.xlu0 %247
  %250 = vset.pattern.permute.xlu0 3
  %251 = vperm.xlu0 %250, %v20
  %v252 = vpop.permute.xlu0 %251
  %254 = vset.pattern.permute.xlu0 3
  %255 = vperm.xlu0 %254, %v21
  %v256 = vpop.permute.xlu0 %255
  %258 = vset.pattern.permute.xlu0 3
  %259 = vperm.xlu0 %258, %v22
  %v260 = vpop.permute.xlu0 %259
  %262 = vset.pattern.permute.xlu0 3
  %263 = vperm.xlu0 %262, %v23
  %v264 = vpop.permute.xlu0 %263
  %266 = vset.pattern.permute.xlu0 3
  %267 = vperm.xlu0 %266, %v24
  %v268 = vpop.permute.xlu0 %267
  %270 = vset.pattern.permute.xlu0 3
  %271 = vperm.xlu0 %270, %v25
  %v272 = vpop.permute.xlu0 %271
  %274 = vset.pattern.permute.xlu0 3
  %275 = vperm.xlu0 %274, %v26
  %v276 = vpop.permute.xlu0 %275
  %v278 = vperm.slane %v27, 2
  %v279 = vmin.f32 %v216, %v278
  %v280 = vmin.f32 %v220, %v278
  %v281 = vmin.f32 %v224, %v278
  %v282 = vmin.f32 %v228, %v278
  %v283 = vmin.f32 %v232, %v278
  %v284 = vmin.f32 %v236, %v278
  %v285 = vmin.f32 %v240, %v278
  %v286 = vmin.f32 %v244, %v278
  %v287 = vmin.f32 %v248, %v278
  %v288 = vmin.f32 %v252, %v278
  %v289 = vmin.f32 %v256, %v278
  %v290 = vmin.f32 %v260, %v278
  %v291 = vmin.f32 %v264, %v278
  %v292 = vmin.f32 %v268, %v278
  %v293 = vmin.f32 %v272, %v278
  %v294 = vmin.f32 %v276, %v278
  %295 = vset.pattern.permute.xlu0 1
  %296 = vperm.xlu0 %295, %v11
  %v297 = vpop.permute.xlu0 %296
  %299 = vset.pattern.permute.xlu0 1
  %300 = vperm.xlu0 %299, %v12
  %v301 = vpop.permute.xlu0 %300
  %303 = vset.pattern.permute.xlu0 1
  %304 = vperm.xlu0 %303, %v13
  %v305 = vpop.permute.xlu0 %304
  %307 = vset.pattern.permute.xlu0 1
  %308 = vperm.xlu0 %307, %v14
  %v309 = vpop.permute.xlu0 %308
  %311 = vset.pattern.permute.xlu0 1
  %312 = vperm.xlu0 %311, %v15
  %v313 = vpop.permute.xlu0 %312
  %315 = vset.pattern.permute.xlu0 1
  %316 = vperm.xlu0 %315, %v16
  %v317 = vpop.permute.xlu0 %316
  %319 = vset.pattern.permute.xlu0 1
  %320 = vperm.xlu0 %319, %v17
  %v321 = vpop.permute.xlu0 %320
  %323 = vset.pattern.permute.xlu0 1
  %324 = vperm.xlu0 %323, %v18
  %v325 = vpop.permute.xlu0 %324
  %327 = vset.pattern.permute.xlu0 1
  %328 = vperm.xlu0 %327, %v19
  %v329 = vpop.permute.xlu0 %328
  %331 = vset.pattern.permute.xlu0 1
  %332 = vperm.xlu0 %331, %v20
  %v333 = vpop.permute.xlu0 %332
  %335 = vset.pattern.permute.xlu0 1
  %336 = vperm.xlu0 %335, %v21
  %v337 = vpop.permute.xlu0 %336
  %339 = vset.pattern.permute.xlu0 1
  %340 = vperm.xlu0 %339, %v22
  %v341 = vpop.permute.xlu0 %340
  %343 = vset.pattern.permute.xlu0 1
  %344 = vperm.xlu0 %343, %v23
  %v345 = vpop.permute.xlu0 %344
  %347 = vset.pattern.permute.xlu0 1
  %348 = vperm.xlu0 %347, %v24
  %v349 = vpop.permute.xlu0 %348
  %351 = vset.pattern.permute.xlu0 1
  %352 = vperm.xlu0 %351, %v25
  %v353 = vpop.permute.xlu0 %352
  %355 = vset.pattern.permute.xlu0 1
  %356 = vperm.xlu0 %355, %v26
  %v357 = vpop.permute.xlu0 %356
  %v359 = vperm.slane %v27, 0
  %v360 = vmax.f32 %v297, %v359
  %v361 = vmax.f32 %v301, %v359
  %v362 = vmax.f32 %v305, %v359
  %v363 = vmax.f32 %v309, %v359
  %v364 = vmax.f32 %v313, %v359
  %v365 = vmax.f32 %v317, %v359
  %v366 = vmax.f32 %v321, %v359
  %v367 = vmax.f32 %v325, %v359
  %v368 = vmax.f32 %v329, %v359
  %v369 = vmax.f32 %v333, %v359
  %v370 = vmax.f32 %v337, %v359
  %v371 = vmax.f32 %v341, %v359
  %v372 = vmax.f32 %v345, %v359
  %v373 = vmax.f32 %v349, %v359
  %v374 = vmax.f32 %v353, %v359
  %v375 = vmax.f32 %v357, %v359
  %v376 = vsub.f32 %v279, %v360
  %v377 = vsub.f32 %v280, %v361
  %v378 = vsub.f32 %v281, %v362
  %v379 = vsub.f32 %v282, %v363
  %v380 = vsub.f32 %v283, %v364
  %v381 = vsub.f32 %v284, %v365
  %v382 = vsub.f32 %v285, %v366
  %v383 = vsub.f32 %v286, %v367
  %v384 = vsub.f32 %v287, %v368
  %v385 = vsub.f32 %v288, %v369
  %v386 = vsub.f32 %v289, %v370
  %v387 = vsub.f32 %v290, %v371
  %v388 = vsub.f32 %v291, %v372
  %v389 = vsub.f32 %v292, %v373
  %v390 = vsub.f32 %v293, %v374
  %v391 = vsub.f32 %v294, %v375
  %v392 = vadd.f32 %v376, 1.0
  %v393 = vadd.f32 %v377, 1.0
  %v394 = vadd.f32 %v378, 1.0
  %v395 = vadd.f32 %v379, 1.0
  %v396 = vadd.f32 %v380, 1.0
  %v397 = vadd.f32 %v381, 1.0
  %v398 = vadd.f32 %v382, 1.0
  %v399 = vadd.f32 %v383, 1.0
  %v400 = vadd.f32 %v384, 1.0
  %v401 = vadd.f32 %v385, 1.0
  %v402 = vadd.f32 %v386, 1.0
  %v403 = vadd.f32 %v387, 1.0
  %v404 = vadd.f32 %v388, 1.0
  %v405 = vadd.f32 %v389, 1.0
  %v406 = vadd.f32 %v390, 1.0
  %v407 = vadd.f32 %v391, 1.0
  %v408 = vmax.f32 %v392, 0.0
  %v409 = vmax.f32 %v393, 0.0
  %v410 = vmax.f32 %v394, 0.0
  %v411 = vmax.f32 %v395, 0.0
  %v412 = vmax.f32 %v396, 0.0
  %v413 = vmax.f32 %v397, 0.0
  %v414 = vmax.f32 %v398, 0.0
  %v415 = vmax.f32 %v399, 0.0
  %v416 = vmax.f32 %v400, 0.0
  %v417 = vmax.f32 %v401, 0.0
  %v418 = vmax.f32 %v402, 0.0
  %v419 = vmax.f32 %v403, 0.0
  %v420 = vmax.f32 %v404, 0.0
  %v421 = vmax.f32 %v405, 0.0
  %v422 = vmax.f32 %v406, 0.0
  %v423 = vmax.f32 %v407, 0.0
  %424 = vset.pattern.permute.xlu0 4
  %425 = vperm.xlu0 %424, %v11
  %v426 = vpop.permute.xlu0 %425
  %428 = vset.pattern.permute.xlu0 4
  %429 = vperm.xlu0 %428, %v12
  %v430 = vpop.permute.xlu0 %429
  %432 = vset.pattern.permute.xlu0 4
  %433 = vperm.xlu0 %432, %v13
  %v434 = vpop.permute.xlu0 %433
  %436 = vset.pattern.permute.xlu0 4
  %437 = vperm.xlu0 %436, %v14
  %v438 = vpop.permute.xlu0 %437
  %440 = vset.pattern.permute.xlu0 4
  %441 = vperm.xlu0 %440, %v15
  %v442 = vpop.permute.xlu0 %441
  %444 = vset.pattern.permute.xlu0 4
  %445 = vperm.xlu0 %444, %v16
  %v446 = vpop.permute.xlu0 %445
  %448 = vset.pattern.permute.xlu0 4
  %449 = vperm.xlu0 %448, %v17
  %v450 = vpop.permute.xlu0 %449
  %452 = vset.pattern.permute.xlu0 4
  %453 = vperm.xlu0 %452, %v18
  %v454 = vpop.permute.xlu0 %453
  %456 = vset.pattern.permute.xlu0 4
  %457 = vperm.xlu0 %456, %v19
  %v458 = vpop.permute.xlu0 %457
  %460 = vset.pattern.permute.xlu0 4
  %461 = vperm.xlu0 %460, %v20
  %v462 = vpop.permute.xlu0 %461
  %464 = vset.pattern.permute.xlu0 4
  %465 = vperm.xlu0 %464, %v21
  %v466 = vpop.permute.xlu0 %465
  %468 = vset.pattern.permute.xlu0 4
  %469 = vperm.xlu0 %468, %v22
  %v470 = vpop.permute.xlu0 %469
  %472 = vset.pattern.permute.xlu0 4
  %473 = vperm.xlu0 %472, %v23
  %v474 = vpop.permute.xlu0 %473
  %476 = vset.pattern.permute.xlu0 4
  %477 = vperm.xlu0 %476, %v24
  %v478 = vpop.permute.xlu0 %477
  %480 = vset.pattern.permute.xlu0 4
  %481 = vperm.xlu0 %480, %v25
  %v482 = vpop.permute.xlu0 %481
  %484 = vset.pattern.permute.xlu0 4
  %485 = vperm.xlu0 %484, %v26
  %v486 = vpop.permute.xlu0 %485
  %v488 = vperm.slane %v27, 3
  %v489 = vmin.f32 %v426, %v488
  %v490 = vmin.f32 %v430, %v488
  %v491 = vmin.f32 %v434, %v488
  %v492 = vmin.f32 %v438, %v488
  %v493 = vmin.f32 %v442, %v488
  %v494 = vmin.f32 %v446, %v488
  %v495 = vmin.f32 %v450, %v488
  %v496 = vmin.f32 %v454, %v488
  %v497 = vmin.f32 %v458, %v488
  %v498 = vmin.f32 %v462, %v488
  %v499 = vmin.f32 %v466, %v488
  %v500 = vmin.f32 %v470, %v488
  %v501 = vmin.f32 %v474, %v488
  %v502 = vmin.f32 %v478, %v488
  %v503 = vmin.f32 %v482, %v488
  %v504 = vmin.f32 %v486, %v488
  %505 = vset.pattern.permute.xlu0 2
  %506 = vperm.xlu0 %505, %v11
  %v507 = vpop.permute.xlu0 %506
  %509 = vset.pattern.permute.xlu0 2
  %510 = vperm.xlu0 %509, %v12
  %v511 = vpop.permute.xlu0 %510
  %513 = vset.pattern.permute.xlu0 2
  %514 = vperm.xlu0 %513, %v13
  %v515 = vpop.permute.xlu0 %514
  %517 = vset.pattern.permute.xlu0 2
  %518 = vperm.xlu0 %517, %v14
  %v519 = vpop.permute.xlu0 %518
  %521 = vset.pattern.permute.xlu0 2
  %522 = vperm.xlu0 %521, %v15
  %v523 = vpop.permute.xlu0 %522
  %525 = vset.pattern.permute.xlu0 2
  %526 = vperm.xlu0 %525, %v16
  %v527 = vpop.permute.xlu0 %526
  %529 = vset.pattern.permute.xlu0 2
  %530 = vperm.xlu0 %529, %v17
  %v531 = vpop.permute.xlu0 %530
  %533 = vset.pattern.permute.xlu0 2
  %534 = vperm.xlu0 %533, %v18
  %v535 = vpop.permute.xlu0 %534
  %537 = vset.pattern.permute.xlu0 2
  %538 = vperm.xlu0 %537, %v19
  %v539 = vpop.permute.xlu0 %538
  %541 = vset.pattern.permute.xlu0 2
  %542 = vperm.xlu0 %541, %v20
  %v543 = vpop.permute.xlu0 %542
  %545 = vset.pattern.permute.xlu0 2
  %546 = vperm.xlu0 %545, %v21
  %v547 = vpop.permute.xlu0 %546
  %549 = vset.pattern.permute.xlu0 2
  %550 = vperm.xlu0 %549, %v22
  %v551 = vpop.permute.xlu0 %550
  %553 = vset.pattern.permute.xlu0 2
  %554 = vperm.xlu0 %553, %v23
  %v555 = vpop.permute.xlu0 %554
  %557 = vset.pattern.permute.xlu0 2
  %558 = vperm.xlu0 %557, %v24
  %v559 = vpop.permute.xlu0 %558
  %561 = vset.pattern.permute.xlu0 2
  %562 = vperm.xlu0 %561, %v25
  %v563 = vpop.permute.xlu0 %562
  %565 = vset.pattern.permute.xlu0 2
  %566 = vperm.xlu0 %565, %v26
  %v567 = vpop.permute.xlu0 %566
  %v569 = vperm.slane %v27, 1
  %v570 = vmax.f32 %v507, %v569
  %v571 = vmax.f32 %v511, %v569
  %v572 = vmax.f32 %v515, %v569
  %v573 = vmax.f32 %v519, %v569
  %v574 = vmax.f32 %v523, %v569
  %v575 = vmax.f32 %v527, %v569
  %v576 = vmax.f32 %v531, %v569
  %v577 = vmax.f32 %v535, %v569
  %v578 = vmax.f32 %v539, %v569
  %v579 = vmax.f32 %v543, %v569
  %v580 = vmax.f32 %v547, %v569
  %v581 = vmax.f32 %v551, %v569
  %v582 = vmax.f32 %v555, %v569
  %v583 = vmax.f32 %v559, %v569
  %v584 = vmax.f32 %v563, %v569
  %v585 = vmax.f32 %v567, %v569
  %v586 = vsub.f32 %v489, %v570
  %v587 = vsub.f32 %v490, %v571
  %v588 = vsub.f32 %v491, %v572
  %v589 = vsub.f32 %v492, %v573
  %v590 = vsub.f32 %v493, %v574
  %v591 = vsub.f32 %v494, %v575
  %v592 = vsub.f32 %v495, %v576
  %v593 = vsub.f32 %v496, %v577
  %v594 = vsub.f32 %v497, %v578
  %v595 = vsub.f32 %v498, %v579
  %v596 = vsub.f32 %v499, %v580
  %v597 = vsub.f32 %v500, %v581
  %v598 = vsub.f32 %v501, %v582
  %v599 = vsub.f32 %v502, %v583
  %v600 = vsub.f32 %v503, %v584
  %v601 = vsub.f32 %v504, %v585
  %v602 = vadd.f32 %v586, 1.0
  %v603 = vadd.f32 %v587, 1.0
  %v604 = vadd.f32 %v588, 1.0
  %v605 = vadd.f32 %v589, 1.0
  %v606 = vadd.f32 %v590, 1.0
  %v607 = vadd.f32 %v591, 1.0
  %v608 = vadd.f32 %v592, 1.0
  %v609 = vadd.f32 %v593, 1.0
  %v610 = vadd.f32 %v594, 1.0
  %v611 = vadd.f32 %v595, 1.0
  %v612 = vadd.f32 %v596, 1.0
  %v613 = vadd.f32 %v597, 1.0
  %v614 = vadd.f32 %v598, 1.0
  %v615 = vadd.f32 %v599, 1.0
  %v616 = vadd.f32 %v600, 1.0
  %v617 = vadd.f32 %v601, 1.0
  %v618 = vmax.f32 %v602, 0.0
  %v619 = vmax.f32 %v603, 0.0
  %v620 = vmax.f32 %v604, 0.0
  %v621 = vmax.f32 %v605, 0.0
  %v622 = vmax.f32 %v606, 0.0
  %v623 = vmax.f32 %v607, 0.0
  %v624 = vmax.f32 %v608, 0.0
  %v625 = vmax.f32 %v609, 0.0
  %v626 = vmax.f32 %v610, 0.0
  %v627 = vmax.f32 %v611, 0.0
  %v628 = vmax.f32 %v612, 0.0
  %v629 = vmax.f32 %v613, 0.0
  %v630 = vmax.f32 %v614, 0.0
  %v631 = vmax.f32 %v615, 0.0
  %v632 = vmax.f32 %v616, 0.0
  %v633 = vmax.f32 %v617, 0.0
  %v634 = vmul.f32 %v408, %v618
  %v635 = vmul.f32 %v409, %v619
  %v636 = vmul.f32 %v410, %v620
  %v637 = vmul.f32 %v411, %v621
  %v638 = vmul.f32 %v412, %v622
  %v639 = vmul.f32 %v413, %v623
  %v640 = vmul.f32 %v414, %v624
  %v641 = vmul.f32 %v415, %v625
  %v642 = vmul.f32 %v416, %v626
  %v643 = vmul.f32 %v417, %v627
  %v644 = vmul.f32 %v418, %v628
  %v645 = vmul.f32 %v419, %v629
  %v646 = vmul.f32 %v420, %v630
  %v647 = vmul.f32 %v421, %v631
  %v648 = vmul.f32 %v422, %v632
  %v649 = vmul.f32 %v423, %v633
  %651 = vset.pattern.permute.xlu0 3
  %652 = vperm.xlu0 %651, %v194
  %v653 = vpop.permute.xlu0 %652
  %656 = vset.pattern.permute.xlu0 3
  %657 = vperm.xlu0 %656, %v195
  %v658 = vpop.permute.xlu0 %657
  %661 = vset.pattern.permute.xlu0 3
  %662 = vperm.xlu0 %661, %v196
  %v663 = vpop.permute.xlu0 %662
  %666 = vset.pattern.permute.xlu0 3
  %667 = vperm.xlu0 %666, %v197
  %v668 = vpop.permute.xlu0 %667
  %671 = vset.pattern.permute.xlu0 3
  %672 = vperm.xlu0 %671, %v198
  %v673 = vpop.permute.xlu0 %672
  %676 = vset.pattern.permute.xlu0 3
  %677 = vperm.xlu0 %676, %v199
  %v678 = vpop.permute.xlu0 %677
  %681 = vset.pattern.permute.xlu0 3
  %682 = vperm.xlu0 %681, %v200
  %v683 = vpop.permute.xlu0 %682
  %686 = vset.pattern.permute.xlu0 3
  %687 = vperm.xlu0 %686, %v201
  %v688 = vpop.permute.xlu0 %687
  %691 = vset.pattern.permute.xlu0 3
  %692 = vperm.xlu0 %691, %v202
  %v693 = vpop.permute.xlu0 %692
  %696 = vset.pattern.permute.xlu0 3
  %697 = vperm.xlu0 %696, %v203
  %v698 = vpop.permute.xlu0 %697
  %701 = vset.pattern.permute.xlu0 3
  %702 = vperm.xlu0 %701, %v204
  %v703 = vpop.permute.xlu0 %702
  %706 = vset.pattern.permute.xlu0 3
  %707 = vperm.xlu0 %706, %v205
  %v708 = vpop.permute.xlu0 %707
  %711 = vset.pattern.permute.xlu0 3
  %712 = vperm.xlu0 %711, %v206
  %v713 = vpop.permute.xlu0 %712
  %716 = vset.pattern.permute.xlu0 3
  %717 = vperm.xlu0 %716, %v207
  %v718 = vpop.permute.xlu0 %717
  %721 = vset.pattern.permute.xlu0 3
  %722 = vperm.xlu0 %721, %v208
  %v723 = vpop.permute.xlu0 %722
  %726 = vset.pattern.permute.xlu0 3
  %727 = vperm.xlu0 %726, %v209
  %v728 = vpop.permute.xlu0 %727
  %v730 = vperm.slane %v213, 2
  %v731 = vadd.f32 %v653, %v730
  %v732 = vadd.f32 %v658, %v730
  %v733 = vadd.f32 %v663, %v730
  %v734 = vadd.f32 %v668, %v730
  %v735 = vadd.f32 %v673, %v730
  %v736 = vadd.f32 %v678, %v730
  %v737 = vadd.f32 %v683, %v730
  %v738 = vadd.f32 %v688, %v730
  %v739 = vadd.f32 %v693, %v730
  %v740 = vadd.f32 %v698, %v730
  %v741 = vadd.f32 %v703, %v730
  %v742 = vadd.f32 %v708, %v730
  %v743 = vadd.f32 %v713, %v730
  %v744 = vadd.f32 %v718, %v730
  %v745 = vadd.f32 %v723, %v730
  %v746 = vadd.f32 %v728, %v730
  %v747 = vsub.f32 %v731, %v634
  %v748 = vsub.f32 %v732, %v635
  %v749 = vsub.f32 %v733, %v636
  %v750 = vsub.f32 %v734, %v637
  %v751 = vsub.f32 %v735, %v638
  %v752 = vsub.f32 %v736, %v639
  %v753 = vsub.f32 %v737, %v640
  %v754 = vsub.f32 %v738, %v641
  %v755 = vsub.f32 %v739, %v642
  %v756 = vsub.f32 %v740, %v643
  %v757 = vsub.f32 %v741, %v644
  %v758 = vsub.f32 %v742, %v645
  %v759 = vsub.f32 %v743, %v646
  %v760 = vsub.f32 %v744, %v647
  %v761 = vsub.f32 %v745, %v648
  %v762 = vsub.f32 %v746, %v649
  %vm763 = vcmp.eq.f32.partialorder %v109, 1.0
  %vm764 = vcmp.eq.f32.partialorder %v110, 1.0
  %vm765 = vcmp.eq.f32.partialorder %v111, 1.0
  %vm766 = vcmp.eq.f32.partialorder %v112, 1.0
  %vm767 = vcmp.eq.f32.partialorder %v113, 1.0
  %vm768 = vcmp.eq.f32.partialorder %v114, 1.0
  %vm769 = vcmp.eq.f32.partialorder %v115, 1.0
  %vm770 = vcmp.eq.f32.partialorder %v116, 1.0
  %vm771 = vcmp.eq.f32.partialorder %v117, 1.0
  %vm772 = vcmp.eq.f32.partialorder %v118, 1.0
  %vm773 = vcmp.eq.f32.partialorder %v119, 1.0
  %vm774 = vcmp.eq.f32.partialorder %v120, 1.0
  %vm775 = vcmp.eq.f32.partialorder %v121, 1.0
  %vm776 = vcmp.eq.f32.partialorder %v122, 1.0
  %vm777 = vcmp.eq.f32.partialorder %v123, 1.0
  %vm778 = vcmp.eq.f32.partialorder %v124, 1.0
  %v779 = vsel %vm763, 1, 0
  %v780 = vsel %vm764, 1, 0
  %v781 = vsel %vm765, 1, 0
  %v782 = vsel %vm766, 1, 0
  %v783 = vsel %vm767, 1, 0
  %v784 = vsel %vm768, 1, 0
  %v785 = vsel %vm769, 1, 0
  %v786 = vsel %vm770, 1, 0
  %v787 = vsel %vm771, 1, 0
  %v788 = vsel %vm772, 1, 0
  %v789 = vsel %vm773, 1, 0
  %v790 = vsel %vm774, 1, 0
  %v791 = vsel %vm775, 1, 0
  %v792 = vsel %vm776, 1, 0
  %v793 = vsel %vm777, 1, 0
  %v794 = vsel %vm778, 1, 0
  %795 = vrot.lane.b32.xlu0 %v779, 127
  %v796 = vpop.permute.xlu0 %795
  %797 = vrot.lane.b32.xlu0 %v780, 127
  %v798 = vpop.permute.xlu0 %797
  %799 = vrot.lane.b32.xlu0 %v781, 127
  %v800 = vpop.permute.xlu0 %799
  %801 = vrot.lane.b32.xlu0 %v782, 127
  %v802 = vpop.permute.xlu0 %801
  %803 = vrot.lane.b32.xlu0 %v783, 127
  %v804 = vpop.permute.xlu0 %803
  %805 = vrot.lane.b32.xlu0 %v784, 127
  %v806 = vpop.permute.xlu0 %805
  %807 = vrot.lane.b32.xlu0 %v785, 127
  %v808 = vpop.permute.xlu0 %807
  %809 = vrot.lane.b32.xlu0 %v786, 127
  %v810 = vpop.permute.xlu0 %809
  %811 = vrot.lane.b32.xlu0 %v787, 127
  %v812 = vpop.permute.xlu0 %811
  %813 = vrot.lane.b32.xlu0 %v788, 127
  %v814 = vpop.permute.xlu0 %813
  %815 = vrot.lane.b32.xlu0 %v789, 127
  %v816 = vpop.permute.xlu0 %815
  %817 = vrot.lane.b32.xlu0 %v790, 127
  %v818 = vpop.permute.xlu0 %817
  %819 = vrot.lane.b32.xlu0 %v791, 127
  %v820 = vpop.permute.xlu0 %819
  %821 = vrot.lane.b32.xlu0 %v792, 127
  %v822 = vpop.permute.xlu0 %821
  %823 = vrot.lane.b32.xlu0 %v793, 127
  %v824 = vpop.permute.xlu0 %823
  %825 = vrot.lane.b32.xlu0 %v794, 127
  %v826 = vpop.permute.xlu0 %825
  %vm827 = vcmp.ne.s32.totalorder %v796, 0
  %vm828 = vcmp.ne.s32.totalorder %v798, 0
  %vm829 = vcmp.ne.s32.totalorder %v800, 0
  %vm830 = vcmp.ne.s32.totalorder %v802, 0
  %vm831 = vcmp.ne.s32.totalorder %v804, 0
  %vm832 = vcmp.ne.s32.totalorder %v806, 0
  %vm833 = vcmp.ne.s32.totalorder %v808, 0
  %vm834 = vcmp.ne.s32.totalorder %v810, 0
  %vm835 = vcmp.ne.s32.totalorder %v812, 0
  %vm836 = vcmp.ne.s32.totalorder %v814, 0
  %vm837 = vcmp.ne.s32.totalorder %v816, 0
  %vm838 = vcmp.ne.s32.totalorder %v818, 0
  %vm839 = vcmp.ne.s32.totalorder %v820, 0
  %vm840 = vcmp.ne.s32.totalorder %v822, 0
  %vm841 = vcmp.ne.s32.totalorder %v824, 0
  %vm842 = vcmp.ne.s32.totalorder %v826, 0
  %vm843 = vmand %vm763, %vm827
  %vm844 = vmand %vm764, %vm828
  %vm845 = vmand %vm765, %vm829
  %vm846 = vmand %vm766, %vm830
  %vm847 = vmand %vm767, %vm831
  %vm848 = vmand %vm768, %vm832
  %vm849 = vmand %vm769, %vm833
  %vm850 = vmand %vm770, %vm834
  %vm851 = vmand %vm771, %vm835
  %vm852 = vmand %vm772, %vm836
  %vm853 = vmand %vm773, %vm837
  %vm854 = vmand %vm774, %vm838
  %vm855 = vmand %vm775, %vm839
  %vm856 = vmand %vm776, %vm840
  %vm857 = vmand %vm777, %vm841
  %vm858 = vmand %vm778, %vm842
  %vm859 = vcmp.eq.f32.partialorder %v129, 1.0
  %v860 = vsel %vm859, 1, 0
  %v861 = vrot.slane %v860, 1
  %vm862 = vcmp.ne.s32.totalorder %v861, 0
  %vm863 = vmand %vm859, %vm862
  %864 = vset.pattern.permute.xlu0 7
  %865 = vperm.xlu0 %864, %v11
  %v866 = vpop.permute.xlu0 %865
  %868 = vset.pattern.permute.xlu0 7
  %869 = vperm.xlu0 %868, %v12
  %v870 = vpop.permute.xlu0 %869
  %872 = vset.pattern.permute.xlu0 7
  %873 = vperm.xlu0 %872, %v13
  %v874 = vpop.permute.xlu0 %873
  %876 = vset.pattern.permute.xlu0 7
  %877 = vperm.xlu0 %876, %v14
  %v878 = vpop.permute.xlu0 %877
  %880 = vset.pattern.permute.xlu0 7
  %881 = vperm.xlu0 %880, %v15
  %v882 = vpop.permute.xlu0 %881
  %884 = vset.pattern.permute.xlu0 7
  %885 = vperm.xlu0 %884, %v16
  %v886 = vpop.permute.xlu0 %885
  %888 = vset.pattern.permute.xlu0 7
  %889 = vperm.xlu0 %888, %v17
  %v890 = vpop.permute.xlu0 %889
  %892 = vset.pattern.permute.xlu0 7
  %893 = vperm.xlu0 %892, %v18
  %v894 = vpop.permute.xlu0 %893
  %896 = vset.pattern.permute.xlu0 7
  %897 = vperm.xlu0 %896, %v19
  %v898 = vpop.permute.xlu0 %897
  %900 = vset.pattern.permute.xlu0 7
  %901 = vperm.xlu0 %900, %v20
  %v902 = vpop.permute.xlu0 %901
  %904 = vset.pattern.permute.xlu0 7
  %905 = vperm.xlu0 %904, %v21
  %v906 = vpop.permute.xlu0 %905
  %908 = vset.pattern.permute.xlu0 7
  %909 = vperm.xlu0 %908, %v22
  %v910 = vpop.permute.xlu0 %909
  %912 = vset.pattern.permute.xlu0 7
  %913 = vperm.xlu0 %912, %v23
  %v914 = vpop.permute.xlu0 %913
  %916 = vset.pattern.permute.xlu0 7
  %917 = vperm.xlu0 %916, %v24
  %v918 = vpop.permute.xlu0 %917
  %920 = vset.pattern.permute.xlu0 7
  %921 = vperm.xlu0 %920, %v25
  %v922 = vpop.permute.xlu0 %921
  %924 = vset.pattern.permute.xlu0 7
  %925 = vperm.xlu0 %924, %v26
  %v926 = vpop.permute.xlu0 %925
  %v928 = vperm.slane %v27, 6
  %v929 = vmin.f32 %v866, %v928
  %v930 = vmin.f32 %v870, %v928
  %v931 = vmin.f32 %v874, %v928
  %v932 = vmin.f32 %v878, %v928
  %v933 = vmin.f32 %v882, %v928
  %v934 = vmin.f32 %v886, %v928
  %v935 = vmin.f32 %v890, %v928
  %v936 = vmin.f32 %v894, %v928
  %v937 = vmin.f32 %v898, %v928
  %v938 = vmin.f32 %v902, %v928
  %v939 = vmin.f32 %v906, %v928
  %v940 = vmin.f32 %v910, %v928
  %v941 = vmin.f32 %v914, %v928
  %v942 = vmin.f32 %v918, %v928
  %v943 = vmin.f32 %v922, %v928
  %v944 = vmin.f32 %v926, %v928
  %945 = vset.pattern.permute.xlu0 5
  %946 = vperm.xlu0 %945, %v11
  %v947 = vpop.permute.xlu0 %946
  %949 = vset.pattern.permute.xlu0 5
  %950 = vperm.xlu0 %949, %v12
  %v951 = vpop.permute.xlu0 %950
  %953 = vset.pattern.permute.xlu0 5
  %954 = vperm.xlu0 %953, %v13
  %v955 = vpop.permute.xlu0 %954
  %957 = vset.pattern.permute.xlu0 5
  %958 = vperm.xlu0 %957, %v14
  %v959 = vpop.permute.xlu0 %958
  %961 = vset.pattern.permute.xlu0 5
  %962 = vperm.xlu0 %961, %v15
  %v963 = vpop.permute.xlu0 %962
  %965 = vset.pattern.permute.xlu0 5
  %966 = vperm.xlu0 %965, %v16
  %v967 = vpop.permute.xlu0 %966
  %969 = vset.pattern.permute.xlu0 5
  %970 = vperm.xlu0 %969, %v17
  %v971 = vpop.permute.xlu0 %970
  %973 = vset.pattern.permute.xlu0 5
  %974 = vperm.xlu0 %973, %v18
  %v975 = vpop.permute.xlu0 %974
  %977 = vset.pattern.permute.xlu0 5
  %978 = vperm.xlu0 %977, %v19
  %v979 = vpop.permute.xlu0 %978
  %981 = vset.pattern.permute.xlu0 5
  %982 = vperm.xlu0 %981, %v20
  %v983 = vpop.permute.xlu0 %982
  %985 = vset.pattern.permute.xlu0 5
  %986 = vperm.xlu0 %985, %v21
  %v987 = vpop.permute.xlu0 %986
  %989 = vset.pattern.permute.xlu0 5
  %990 = vperm.xlu0 %989, %v22
  %v991 = vpop.permute.xlu0 %990
  %993 = vset.pattern.permute.xlu0 5
  %994 = vperm.xlu0 %993, %v23
  %v995 = vpop.permute.xlu0 %994
  %997 = vset.pattern.permute.xlu0 5
  %998 = vperm.xlu0 %997, %v24
  %v999 = vpop.permute.xlu0 %998
  %1001 = vset.pattern.permute.xlu0 5
  %1002 = vperm.xlu0 %1001, %v25
  %v1003 = vpop.permute.xlu0 %1002
  %1005 = vset.pattern.permute.xlu0 5
  %1006 = vperm.xlu0 %1005, %v26
  %v1007 = vpop.permute.xlu0 %1006
  %v1009 = vperm.slane %v27, 4
  %v1010 = vmax.f32 %v947, %v1009
  %v1011 = vmax.f32 %v951, %v1009
  %v1012 = vmax.f32 %v955, %v1009
  %v1013 = vmax.f32 %v959, %v1009
  %v1014 = vmax.f32 %v963, %v1009
  %v1015 = vmax.f32 %v967, %v1009
  %v1016 = vmax.f32 %v971, %v1009
  %v1017 = vmax.f32 %v975, %v1009
  %v1018 = vmax.f32 %v979, %v1009
  %v1019 = vmax.f32 %v983, %v1009
  %v1020 = vmax.f32 %v987, %v1009
  %v1021 = vmax.f32 %v991, %v1009
  %v1022 = vmax.f32 %v995, %v1009
  %v1023 = vmax.f32 %v999, %v1009
  %v1024 = vmax.f32 %v1003, %v1009
  %v1025 = vmax.f32 %v1007, %v1009
  %v1026 = vsub.f32 %v929, %v1010
  %v1027 = vsub.f32 %v930, %v1011
  %v1028 = vsub.f32 %v931, %v1012
  %v1029 = vsub.f32 %v932, %v1013
  %v1030 = vsub.f32 %v933, %v1014
  %v1031 = vsub.f32 %v934, %v1015
  %v1032 = vsub.f32 %v935, %v1016
  %v1033 = vsub.f32 %v936, %v1017
  %v1034 = vsub.f32 %v937, %v1018
  %v1035 = vsub.f32 %v938, %v1019
  %v1036 = vsub.f32 %v939, %v1020
  %v1037 = vsub.f32 %v940, %v1021
  %v1038 = vsub.f32 %v941, %v1022
  %v1039 = vsub.f32 %v942, %v1023
  %v1040 = vsub.f32 %v943, %v1024
  %v1041 = vsub.f32 %v944, %v1025
  %v1042 = vadd.f32 %v1026, 1.0
  %v1043 = vadd.f32 %v1027, 1.0
  %v1044 = vadd.f32 %v1028, 1.0
  %v1045 = vadd.f32 %v1029, 1.0
  %v1046 = vadd.f32 %v1030, 1.0
  %v1047 = vadd.f32 %v1031, 1.0
  %v1048 = vadd.f32 %v1032, 1.0
  %v1049 = vadd.f32 %v1033, 1.0
  %v1050 = vadd.f32 %v1034, 1.0
  %v1051 = vadd.f32 %v1035, 1.0
  %v1052 = vadd.f32 %v1036, 1.0
  %v1053 = vadd.f32 %v1037, 1.0
  %v1054 = vadd.f32 %v1038, 1.0
  %v1055 = vadd.f32 %v1039, 1.0
  %v1056 = vadd.f32 %v1040, 1.0
  %v1057 = vadd.f32 %v1041, 1.0
  %v1058 = vmax.f32 %v1042, 0.0
  %v1059 = vmax.f32 %v1043, 0.0
  %v1060 = vmax.f32 %v1044, 0.0
  %v1061 = vmax.f32 %v1045, 0.0
  %v1062 = vmax.f32 %v1046, 0.0
  %v1063 = vmax.f32 %v1047, 0.0
  %v1064 = vmax.f32 %v1048, 0.0
  %v1065 = vmax.f32 %v1049, 0.0
  %v1066 = vmax.f32 %v1050, 0.0
  %v1067 = vmax.f32 %v1051, 0.0
  %v1068 = vmax.f32 %v1052, 0.0
  %v1069 = vmax.f32 %v1053, 0.0
  %v1070 = vmax.f32 %v1054, 0.0
  %v1071 = vmax.f32 %v1055, 0.0
  %v1072 = vmax.f32 %v1056, 0.0
  %v1073 = vmax.f32 %v1057, 0.0
  %1074 = vset.pattern.permute.xlu0 8
  %1075 = vperm.xlu0 %1074, %v11
  %v1076 = vpop.permute.xlu0 %1075
  %1078 = vset.pattern.permute.xlu0 8
  %1079 = vperm.xlu0 %1078, %v12
  %v1080 = vpop.permute.xlu0 %1079
  %1082 = vset.pattern.permute.xlu0 8
  %1083 = vperm.xlu0 %1082, %v13
  %v1084 = vpop.permute.xlu0 %1083
  %1086 = vset.pattern.permute.xlu0 8
  %1087 = vperm.xlu0 %1086, %v14
  %v1088 = vpop.permute.xlu0 %1087
  %1090 = vset.pattern.permute.xlu0 8
  %1091 = vperm.xlu0 %1090, %v15
  %v1092 = vpop.permute.xlu0 %1091
  %1094 = vset.pattern.permute.xlu0 8
  %1095 = vperm.xlu0 %1094, %v16
  %v1096 = vpop.permute.xlu0 %1095
  %1098 = vset.pattern.permute.xlu0 8
  %1099 = vperm.xlu0 %1098, %v17
  %v1100 = vpop.permute.xlu0 %1099
  %1102 = vset.pattern.permute.xlu0 8
  %1103 = vperm.xlu0 %1102, %v18
  %v1104 = vpop.permute.xlu0 %1103
  %1106 = vset.pattern.permute.xlu0 8
  %1107 = vperm.xlu0 %1106, %v19
  %v1108 = vpop.permute.xlu0 %1107
  %1110 = vset.pattern.permute.xlu0 8
  %1111 = vperm.xlu0 %1110, %v20
  %v1112 = vpop.permute.xlu0 %1111
  %1114 = vset.pattern.permute.xlu0 8
  %1115 = vperm.xlu0 %1114, %v21
  %v1116 = vpop.permute.xlu0 %1115
  %1118 = vset.pattern.permute.xlu0 8
  %1119 = vperm.xlu0 %1118, %v22
  %v1120 = vpop.permute.xlu0 %1119
  %1122 = vset.pattern.permute.xlu0 8
  %1123 = vperm.xlu0 %1122, %v23
  %v1124 = vpop.permute.xlu0 %1123
  %1126 = vset.pattern.permute.xlu0 8
  %1127 = vperm.xlu0 %1126, %v24
  %v1128 = vpop.permute.xlu0 %1127
  %1130 = vset.pattern.permute.xlu0 8
  %1131 = vperm.xlu0 %1130, %v25
  %v1132 = vpop.permute.xlu0 %1131
  %1134 = vset.pattern.permute.xlu0 8
  %1135 = vperm.xlu0 %1134, %v26
  %v1136 = vpop.permute.xlu0 %1135
  %v1138 = vperm.slane %v27, 7
  %v1139 = vmin.f32 %v1076, %v1138
  %v1140 = vmin.f32 %v1080, %v1138
  %v1141 = vmin.f32 %v1084, %v1138
  %v1142 = vmin.f32 %v1088, %v1138
  %v1143 = vmin.f32 %v1092, %v1138
  %v1144 = vmin.f32 %v1096, %v1138
  %v1145 = vmin.f32 %v1100, %v1138
  %v1146 = vmin.f32 %v1104, %v1138
  %v1147 = vmin.f32 %v1108, %v1138
  %v1148 = vmin.f32 %v1112, %v1138
  %v1149 = vmin.f32 %v1116, %v1138
  %v1150 = vmin.f32 %v1120, %v1138
  %v1151 = vmin.f32 %v1124, %v1138
  %v1152 = vmin.f32 %v1128, %v1138
  %v1153 = vmin.f32 %v1132, %v1138
  %v1154 = vmin.f32 %v1136, %v1138
  %1155 = vset.pattern.permute.xlu0 6
  %1156 = vperm.xlu0 %1155, %v11
  %v1157 = vpop.permute.xlu0 %1156
  %1159 = vset.pattern.permute.xlu0 6
  %1160 = vperm.xlu0 %1159, %v12
  %v1161 = vpop.permute.xlu0 %1160
  %1163 = vset.pattern.permute.xlu0 6
  %1164 = vperm.xlu0 %1163, %v13
  %v1165 = vpop.permute.xlu0 %1164
  %1167 = vset.pattern.permute.xlu0 6
  %1168 = vperm.xlu0 %1167, %v14
  %v1169 = vpop.permute.xlu0 %1168
  %1171 = vset.pattern.permute.xlu0 6
  %1172 = vperm.xlu0 %1171, %v15
  %v1173 = vpop.permute.xlu0 %1172
  %1175 = vset.pattern.permute.xlu0 6
  %1176 = vperm.xlu0 %1175, %v16
  %v1177 = vpop.permute.xlu0 %1176
  %1179 = vset.pattern.permute.xlu0 6
  %1180 = vperm.xlu0 %1179, %v17
  %v1181 = vpop.permute.xlu0 %1180
  %1183 = vset.pattern.permute.xlu0 6
  %1184 = vperm.xlu0 %1183, %v18
  %v1185 = vpop.permute.xlu0 %1184
  %1187 = vset.pattern.permute.xlu0 6
  %1188 = vperm.xlu0 %1187, %v19
  %v1189 = vpop.permute.xlu0 %1188
  %1191 = vset.pattern.permute.xlu0 6
  %1192 = vperm.xlu0 %1191, %v20
  %v1193 = vpop.permute.xlu0 %1192
  %1195 = vset.pattern.permute.xlu0 6
  %1196 = vperm.xlu0 %1195, %v21
  %v1197 = vpop.permute.xlu0 %1196
  %1199 = vset.pattern.permute.xlu0 6
  %1200 = vperm.xlu0 %1199, %v22
  %v1201 = vpop.permute.xlu0 %1200
  %1203 = vset.pattern.permute.xlu0 6
  %1204 = vperm.xlu0 %1203, %v23
  %v1205 = vpop.permute.xlu0 %1204
  %1207 = vset.pattern.permute.xlu0 6
  %1208 = vperm.xlu0 %1207, %v24
  %v1209 = vpop.permute.xlu0 %1208
  %1211 = vset.pattern.permute.xlu0 6
  %1212 = vperm.xlu0 %1211, %v25
  %v1213 = vpop.permute.xlu0 %1212
  %1215 = vset.pattern.permute.xlu0 6
  %1216 = vperm.xlu0 %1215, %v26
  %v1217 = vpop.permute.xlu0 %1216
  %v1219 = vperm.slane %v27, 5
  %v1220 = vmax.f32 %v1157, %v1219
  %v1221 = vmax.f32 %v1161, %v1219
  %v1222 = vmax.f32 %v1165, %v1219
  %v1223 = vmax.f32 %v1169, %v1219
  %v1224 = vmax.f32 %v1173, %v1219
  %v1225 = vmax.f32 %v1177, %v1219
  %v1226 = vmax.f32 %v1181, %v1219
  %v1227 = vmax.f32 %v1185, %v1219
  %v1228 = vmax.f32 %v1189, %v1219
  %v1229 = vmax.f32 %v1193, %v1219
  %v1230 = vmax.f32 %v1197, %v1219
  %v1231 = vmax.f32 %v1201, %v1219
  %v1232 = vmax.f32 %v1205, %v1219
  %v1233 = vmax.f32 %v1209, %v1219
  %v1234 = vmax.f32 %v1213, %v1219
  %v1235 = vmax.f32 %v1217, %v1219
  %v1236 = vsub.f32 %v1139, %v1220
  %v1237 = vsub.f32 %v1140, %v1221
  %v1238 = vsub.f32 %v1141, %v1222
  %v1239 = vsub.f32 %v1142, %v1223
  %v1240 = vsub.f32 %v1143, %v1224
  %v1241 = vsub.f32 %v1144, %v1225
  %v1242 = vsub.f32 %v1145, %v1226
  %v1243 = vsub.f32 %v1146, %v1227
  %v1244 = vsub.f32 %v1147, %v1228
  %v1245 = vsub.f32 %v1148, %v1229
  %v1246 = vsub.f32 %v1149, %v1230
  %v1247 = vsub.f32 %v1150, %v1231
  %v1248 = vsub.f32 %v1151, %v1232
  %v1249 = vsub.f32 %v1152, %v1233
  %v1250 = vsub.f32 %v1153, %v1234
  %v1251 = vsub.f32 %v1154, %v1235
  %v1252 = vadd.f32 %v1236, 1.0
  %v1253 = vadd.f32 %v1237, 1.0
  %v1254 = vadd.f32 %v1238, 1.0
  %v1255 = vadd.f32 %v1239, 1.0
  %v1256 = vadd.f32 %v1240, 1.0
  %v1257 = vadd.f32 %v1241, 1.0
  %v1258 = vadd.f32 %v1242, 1.0
  %v1259 = vadd.f32 %v1243, 1.0
  %v1260 = vadd.f32 %v1244, 1.0
  %v1261 = vadd.f32 %v1245, 1.0
  %v1262 = vadd.f32 %v1246, 1.0
  %v1263 = vadd.f32 %v1247, 1.0
  %v1264 = vadd.f32 %v1248, 1.0
  %v1265 = vadd.f32 %v1249, 1.0
  %v1266 = vadd.f32 %v1250, 1.0
  %v1267 = vadd.f32 %v1251, 1.0
  %v1268 = vmax.f32 %v1252, 0.0
  %v1269 = vmax.f32 %v1253, 0.0
  %v1270 = vmax.f32 %v1254, 0.0
  %v1271 = vmax.f32 %v1255, 0.0
  %v1272 = vmax.f32 %v1256, 0.0
  %v1273 = vmax.f32 %v1257, 0.0
  %v1274 = vmax.f32 %v1258, 0.0
  %v1275 = vmax.f32 %v1259, 0.0
  %v1276 = vmax.f32 %v1260, 0.0
  %v1277 = vmax.f32 %v1261, 0.0
  %v1278 = vmax.f32 %v1262, 0.0
  %v1279 = vmax.f32 %v1263, 0.0
  %v1280 = vmax.f32 %v1264, 0.0
  %v1281 = vmax.f32 %v1265, 0.0
  %v1282 = vmax.f32 %v1266, 0.0
  %v1283 = vmax.f32 %v1267, 0.0
  %v1284 = vmul.f32 %v1058, %v1268
  %v1285 = vmul.f32 %v1059, %v1269
  %v1286 = vmul.f32 %v1060, %v1270
  %v1287 = vmul.f32 %v1061, %v1271
  %v1288 = vmul.f32 %v1062, %v1272
  %v1289 = vmul.f32 %v1063, %v1273
  %v1290 = vmul.f32 %v1064, %v1274
  %v1291 = vmul.f32 %v1065, %v1275
  %v1292 = vmul.f32 %v1066, %v1276
  %v1293 = vmul.f32 %v1067, %v1277
  %v1294 = vmul.f32 %v1068, %v1278
  %v1295 = vmul.f32 %v1069, %v1279
  %v1296 = vmul.f32 %v1070, %v1280
  %v1297 = vmul.f32 %v1071, %v1281
  %v1298 = vmul.f32 %v1072, %v1282
  %v1299 = vmul.f32 %v1073, %v1283
  %1300 = vset.pattern.permute.xlu0 7
  %1301 = vperm.xlu0 %1300, %v194
  %v1302 = vpop.permute.xlu0 %1301
  %1304 = vset.pattern.permute.xlu0 7
  %1305 = vperm.xlu0 %1304, %v195
  %v1306 = vpop.permute.xlu0 %1305
  %1308 = vset.pattern.permute.xlu0 7
  %1309 = vperm.xlu0 %1308, %v196
  %v1310 = vpop.permute.xlu0 %1309
  %1312 = vset.pattern.permute.xlu0 7
  %1313 = vperm.xlu0 %1312, %v197
  %v1314 = vpop.permute.xlu0 %1313
  %1316 = vset.pattern.permute.xlu0 7
  %1317 = vperm.xlu0 %1316, %v198
  %v1318 = vpop.permute.xlu0 %1317
  %1320 = vset.pattern.permute.xlu0 7
  %1321 = vperm.xlu0 %1320, %v199
  %v1322 = vpop.permute.xlu0 %1321
  %1324 = vset.pattern.permute.xlu0 7
  %1325 = vperm.xlu0 %1324, %v200
  %v1326 = vpop.permute.xlu0 %1325
  %1328 = vset.pattern.permute.xlu0 7
  %1329 = vperm.xlu0 %1328, %v201
  %v1330 = vpop.permute.xlu0 %1329
  %1332 = vset.pattern.permute.xlu0 7
  %1333 = vperm.xlu0 %1332, %v202
  %v1334 = vpop.permute.xlu0 %1333
  %1336 = vset.pattern.permute.xlu0 7
  %1337 = vperm.xlu0 %1336, %v203
  %v1338 = vpop.permute.xlu0 %1337
  %1340 = vset.pattern.permute.xlu0 7
  %1341 = vperm.xlu0 %1340, %v204
  %v1342 = vpop.permute.xlu0 %1341
  %1344 = vset.pattern.permute.xlu0 7
  %1345 = vperm.xlu0 %1344, %v205
  %v1346 = vpop.permute.xlu0 %1345
  %1348 = vset.pattern.permute.xlu0 7
  %1349 = vperm.xlu0 %1348, %v206
  %v1350 = vpop.permute.xlu0 %1349
  %1352 = vset.pattern.permute.xlu0 7
  %1353 = vperm.xlu0 %1352, %v207
  %v1354 = vpop.permute.xlu0 %1353
  %1356 = vset.pattern.permute.xlu0 7
  %1357 = vperm.xlu0 %1356, %v208
  %v1358 = vpop.permute.xlu0 %1357
  %1360 = vset.pattern.permute.xlu0 7
  %1361 = vperm.xlu0 %1360, %v209
  %v1362 = vpop.permute.xlu0 %1361
  %v1364 = vperm.slane %v213, 6
  %v1365 = vadd.f32 %v1302, %v1364
  %v1366 = vadd.f32 %v1306, %v1364
  %v1367 = vadd.f32 %v1310, %v1364
  %v1368 = vadd.f32 %v1314, %v1364
  %v1369 = vadd.f32 %v1318, %v1364
  %v1370 = vadd.f32 %v1322, %v1364
  %v1371 = vadd.f32 %v1326, %v1364
  %v1372 = vadd.f32 %v1330, %v1364
  %v1373 = vadd.f32 %v1334, %v1364
  %v1374 = vadd.f32 %v1338, %v1364
  %v1375 = vadd.f32 %v1342, %v1364
  %v1376 = vadd.f32 %v1346, %v1364
  %v1377 = vadd.f32 %v1350, %v1364
  %v1378 = vadd.f32 %v1354, %v1364
  %v1379 = vadd.f32 %v1358, %v1364
  %v1380 = vadd.f32 %v1362, %v1364
  %v1381 = vsub.f32 %v1365, %v1284
  %v1382 = vsub.f32 %v1366, %v1285
  %v1383 = vsub.f32 %v1367, %v1286
  %v1384 = vsub.f32 %v1368, %v1287
  %v1385 = vsub.f32 %v1369, %v1288
  %v1386 = vsub.f32 %v1370, %v1289
  %v1387 = vsub.f32 %v1371, %v1290
  %v1388 = vsub.f32 %v1372, %v1291
  %v1389 = vsub.f32 %v1373, %v1292
  %v1390 = vsub.f32 %v1374, %v1293
  %v1391 = vsub.f32 %v1375, %v1294
  %v1392 = vsub.f32 %v1376, %v1295
  %v1393 = vsub.f32 %v1377, %v1296
  %v1394 = vsub.f32 %v1378, %v1297
  %v1395 = vsub.f32 %v1379, %v1298
  %v1396 = vsub.f32 %v1380, %v1299
  %v1397 = vmul.f32 %v634, %v1284
  %v1398 = vmul.f32 %v635, %v1285
  %v1399 = vmul.f32 %v636, %v1286
  %v1400 = vmul.f32 %v637, %v1287
  %v1401 = vmul.f32 %v638, %v1288
  %v1402 = vmul.f32 %v639, %v1289
  %v1403 = vmul.f32 %v640, %v1290
  %v1404 = vmul.f32 %v641, %v1291
  %v1405 = vmul.f32 %v642, %v1292
  %v1406 = vmul.f32 %v643, %v1293
  %v1407 = vmul.f32 %v644, %v1294
  %v1408 = vmul.f32 %v645, %v1295
  %v1409 = vmul.f32 %v646, %v1296
  %v1410 = vmul.f32 %v647, %v1297
  %v1411 = vmul.f32 %v648, %v1298
  %v1412 = vmul.f32 %v649, %v1299
  %v1413 = vmul.f32 %v747, %v1381
  %v1414 = vmul.f32 %v748, %v1382
  %v1415 = vmul.f32 %v749, %v1383
  %v1416 = vmul.f32 %v750, %v1384
  %v1417 = vmul.f32 %v751, %v1385
  %v1418 = vmul.f32 %v752, %v1386
  %v1419 = vmul.f32 %v753, %v1387
  %v1420 = vmul.f32 %v754, %v1388
  %v1421 = vmul.f32 %v755, %v1389
  %v1422 = vmul.f32 %v756, %v1390
  %v1423 = vmul.f32 %v757, %v1391
  %v1424 = vmul.f32 %v758, %v1392
  %v1425 = vmul.f32 %v759, %v1393
  %v1426 = vmul.f32 %v760, %v1394
  %v1427 = vmul.f32 %v761, %v1395
  %v1428 = vmul.f32 %v762, %v1396
  %v1429 = vrcp.pop %v1413
  %v1430 = vmul.f32 %v1413, %v1429
  %v1431 = vsub.f32 1.0, %v1430
  %v1432 = vmul.f32 %v1429, %v1431
  %v1433 = vadd.f32 %v1429, %v1432
  %vm1434 = vweird.f32 %v1413
  %vm1435 = vweird.f32 %v1429
  %vm1436 = vmor %vm1434, %vm1435
  %v1437 = vsel %vm1436, %v1429, %v1433
  %v1438 = vand.u32 2147483647, %v1413
  %vm1439 = vcmp.eq.f32.partialorder %v1438, 8.507059e+37
  %v1440 = vand.u32 %v1413, 2147483648
  %v1441 = vor.u32 1.1754944e-38, %v1440
  %v1442 = vsel %vm1439, %v1441, %v1437
  %v1443 = vmul.f32 %v1397, %v1442
  %v1444 = vrcp.pop %v1414
  %v1445 = vmul.f32 %v1414, %v1444
  %v1446 = vsub.f32 1.0, %v1445
  %v1447 = vmul.f32 %v1444, %v1446
  %v1448 = vadd.f32 %v1444, %v1447
  %vm1449 = vweird.f32 %v1414
  %vm1450 = vweird.f32 %v1444
  %vm1451 = vmor %vm1449, %vm1450
  %v1452 = vsel %vm1451, %v1444, %v1448
  %v1453 = vand.u32 2147483647, %v1414
  %vm1454 = vcmp.eq.f32.partialorder %v1453, 8.507059e+37
  %v1455 = vand.u32 %v1414, 2147483648
  %v1456 = vor.u32 1.1754944e-38, %v1455
  %v1457 = vsel %vm1454, %v1456, %v1452
  %v1458 = vmul.f32 %v1398, %v1457
  %v1459 = vrcp.pop %v1415
  %v1460 = vmul.f32 %v1415, %v1459
  %v1461 = vsub.f32 1.0, %v1460
  %v1462 = vmul.f32 %v1459, %v1461
  %v1463 = vadd.f32 %v1459, %v1462
  %vm1464 = vweird.f32 %v1415
  %vm1465 = vweird.f32 %v1459
  %vm1466 = vmor %vm1464, %vm1465
  %v1467 = vsel %vm1466, %v1459, %v1463
  %v1468 = vand.u32 2147483647, %v1415
  %vm1469 = vcmp.eq.f32.partialorder %v1468, 8.507059e+37
  %v1470 = vand.u32 %v1415, 2147483648
  %v1471 = vor.u32 1.1754944e-38, %v1470
  %v1472 = vsel %vm1469, %v1471, %v1467
  %v1473 = vmul.f32 %v1399, %v1472
  %v1474 = vrcp.pop %v1416
  %v1475 = vmul.f32 %v1416, %v1474
  %v1476 = vsub.f32 1.0, %v1475
  %v1477 = vmul.f32 %v1474, %v1476
  %v1478 = vadd.f32 %v1474, %v1477
  %vm1479 = vweird.f32 %v1416
  %vm1480 = vweird.f32 %v1474
  %vm1481 = vmor %vm1479, %vm1480
  %v1482 = vsel %vm1481, %v1474, %v1478
  %v1483 = vand.u32 2147483647, %v1416
  %vm1484 = vcmp.eq.f32.partialorder %v1483, 8.507059e+37
  %v1485 = vand.u32 %v1416, 2147483648
  %v1486 = vor.u32 1.1754944e-38, %v1485
  %v1487 = vsel %vm1484, %v1486, %v1482
  %v1488 = vmul.f32 %v1400, %v1487
  %v1489 = vrcp.pop %v1417
  %v1490 = vmul.f32 %v1417, %v1489
  %v1491 = vsub.f32 1.0, %v1490
  %v1492 = vmul.f32 %v1489, %v1491
  %v1493 = vadd.f32 %v1489, %v1492
  %vm1494 = vweird.f32 %v1417
  %vm1495 = vweird.f32 %v1489
  %vm1496 = vmor %vm1494, %vm1495
  %v1497 = vsel %vm1496, %v1489, %v1493
  %v1498 = vand.u32 2147483647, %v1417
  %vm1499 = vcmp.eq.f32.partialorder %v1498, 8.507059e+37
  %v1500 = vand.u32 %v1417, 2147483648
  %v1501 = vor.u32 1.1754944e-38, %v1500
  %v1502 = vsel %vm1499, %v1501, %v1497
  %v1503 = vmul.f32 %v1401, %v1502
  %v1504 = vrcp.pop %v1418
  %v1505 = vmul.f32 %v1418, %v1504
  %v1506 = vsub.f32 1.0, %v1505
  %v1507 = vmul.f32 %v1504, %v1506
  %v1508 = vadd.f32 %v1504, %v1507
  %vm1509 = vweird.f32 %v1418
  %vm1510 = vweird.f32 %v1504
  %vm1511 = vmor %vm1509, %vm1510
  %v1512 = vsel %vm1511, %v1504, %v1508
  %v1513 = vand.u32 2147483647, %v1418
  %vm1514 = vcmp.eq.f32.partialorder %v1513, 8.507059e+37
  %v1515 = vand.u32 %v1418, 2147483648
  %v1516 = vor.u32 1.1754944e-38, %v1515
  %v1517 = vsel %vm1514, %v1516, %v1512
  %v1518 = vmul.f32 %v1402, %v1517
  %v1519 = vrcp.pop %v1419
  %v1520 = vmul.f32 %v1419, %v1519
  %v1521 = vsub.f32 1.0, %v1520
  %v1522 = vmul.f32 %v1519, %v1521
  %v1523 = vadd.f32 %v1519, %v1522
  %vm1524 = vweird.f32 %v1419
  %vm1525 = vweird.f32 %v1519
  %vm1526 = vmor %vm1524, %vm1525
  %v1527 = vsel %vm1526, %v1519, %v1523
  %v1528 = vand.u32 2147483647, %v1419
  %vm1529 = vcmp.eq.f32.partialorder %v1528, 8.507059e+37
  %v1530 = vand.u32 %v1419, 2147483648
  %v1531 = vor.u32 1.1754944e-38, %v1530
  %v1532 = vsel %vm1529, %v1531, %v1527
  %v1533 = vmul.f32 %v1403, %v1532
  %v1534 = vrcp.pop %v1420
  %v1535 = vmul.f32 %v1420, %v1534
  %v1536 = vsub.f32 1.0, %v1535
  %v1537 = vmul.f32 %v1534, %v1536
  %v1538 = vadd.f32 %v1534, %v1537
  %vm1539 = vweird.f32 %v1420
  %vm1540 = vweird.f32 %v1534
  %vm1541 = vmor %vm1539, %vm1540
  %v1542 = vsel %vm1541, %v1534, %v1538
  %v1543 = vand.u32 2147483647, %v1420
  %vm1544 = vcmp.eq.f32.partialorder %v1543, 8.507059e+37
  %v1545 = vand.u32 %v1420, 2147483648
  %v1546 = vor.u32 1.1754944e-38, %v1545
  %v1547 = vsel %vm1544, %v1546, %v1542
  %v1548 = vmul.f32 %v1404, %v1547
  %v1549 = vrcp.pop %v1421
  %v1550 = vmul.f32 %v1421, %v1549
  %v1551 = vsub.f32 1.0, %v1550
  %v1552 = vmul.f32 %v1549, %v1551
  %v1553 = vadd.f32 %v1549, %v1552
  %vm1554 = vweird.f32 %v1421
  %vm1555 = vweird.f32 %v1549
  %vm1556 = vmor %vm1554, %vm1555
  %v1557 = vsel %vm1556, %v1549, %v1553
  %v1558 = vand.u32 2147483647, %v1421
  %vm1559 = vcmp.eq.f32.partialorder %v1558, 8.507059e+37
  %v1560 = vand.u32 %v1421, 2147483648
  %v1561 = vor.u32 1.1754944e-38, %v1560
  %v1562 = vsel %vm1559, %v1561, %v1557
  %v1563 = vmul.f32 %v1405, %v1562
  %v1564 = vrcp.pop %v1422
  %v1565 = vmul.f32 %v1422, %v1564
  %v1566 = vsub.f32 1.0, %v1565
  %v1567 = vmul.f32 %v1564, %v1566
  %v1568 = vadd.f32 %v1564, %v1567
  %vm1569 = vweird.f32 %v1422
  %vm1570 = vweird.f32 %v1564
  %vm1571 = vmor %vm1569, %vm1570
  %v1572 = vsel %vm1571, %v1564, %v1568
  %v1573 = vand.u32 2147483647, %v1422
  %vm1574 = vcmp.eq.f32.partialorder %v1573, 8.507059e+37
  %v1575 = vand.u32 %v1422, 2147483648
  %v1576 = vor.u32 1.1754944e-38, %v1575
  %v1577 = vsel %vm1574, %v1576, %v1572
  %v1578 = vmul.f32 %v1406, %v1577
  %v1579 = vrcp.pop %v1423
  %v1580 = vmul.f32 %v1423, %v1579
  %v1581 = vsub.f32 1.0, %v1580
  %v1582 = vmul.f32 %v1579, %v1581
  %v1583 = vadd.f32 %v1579, %v1582
  %vm1584 = vweird.f32 %v1423
  %vm1585 = vweird.f32 %v1579
  %vm1586 = vmor %vm1584, %vm1585
  %v1587 = vsel %vm1586, %v1579, %v1583
  %v1588 = vand.u32 2147483647, %v1423
  %vm1589 = vcmp.eq.f32.partialorder %v1588, 8.507059e+37
  %v1590 = vand.u32 %v1423, 2147483648
  %v1591 = vor.u32 1.1754944e-38, %v1590
  %v1592 = vsel %vm1589, %v1591, %v1587
  %v1593 = vmul.f32 %v1407, %v1592
  %v1594 = vrcp.pop %v1424
  %v1595 = vmul.f32 %v1424, %v1594
  %v1596 = vsub.f32 1.0, %v1595
  %v1597 = vmul.f32 %v1594, %v1596
  %v1598 = vadd.f32 %v1594, %v1597
  %vm1599 = vweird.f32 %v1424
  %vm1600 = vweird.f32 %v1594
  %vm1601 = vmor %vm1599, %vm1600
  %v1602 = vsel %vm1601, %v1594, %v1598
  %v1603 = vand.u32 2147483647, %v1424
  %vm1604 = vcmp.eq.f32.partialorder %v1603, 8.507059e+37
  %v1605 = vand.u32 %v1424, 2147483648
  %v1606 = vor.u32 1.1754944e-38, %v1605
  %v1607 = vsel %vm1604, %v1606, %v1602
  %v1608 = vmul.f32 %v1408, %v1607
  %v1609 = vrcp.pop %v1425
  %v1610 = vmul.f32 %v1425, %v1609
  %v1611 = vsub.f32 1.0, %v1610
  %v1612 = vmul.f32 %v1609, %v1611
  %v1613 = vadd.f32 %v1609, %v1612
  %vm1614 = vweird.f32 %v1425
  %vm1615 = vweird.f32 %v1609
  %vm1616 = vmor %vm1614, %vm1615
  %v1617 = vsel %vm1616, %v1609, %v1613
  %v1618 = vand.u32 2147483647, %v1425
  %vm1619 = vcmp.eq.f32.partialorder %v1618, 8.507059e+37
  %v1620 = vand.u32 %v1425, 2147483648
  %v1621 = vor.u32 1.1754944e-38, %v1620
  %v1622 = vsel %vm1619, %v1621, %v1617
  %v1623 = vmul.f32 %v1409, %v1622
  %v1624 = vrcp.pop %v1426
  %v1625 = vmul.f32 %v1426, %v1624
  %v1626 = vsub.f32 1.0, %v1625
  %v1627 = vmul.f32 %v1624, %v1626
  %v1628 = vadd.f32 %v1624, %v1627
  %vm1629 = vweird.f32 %v1426
  %vm1630 = vweird.f32 %v1624
  %vm1631 = vmor %vm1629, %vm1630
  %v1632 = vsel %vm1631, %v1624, %v1628
  %v1633 = vand.u32 2147483647, %v1426
  %vm1634 = vcmp.eq.f32.partialorder %v1633, 8.507059e+37
  %v1635 = vand.u32 %v1426, 2147483648
  %v1636 = vor.u32 1.1754944e-38, %v1635
  %v1637 = vsel %vm1634, %v1636, %v1632
  %v1638 = vmul.f32 %v1410, %v1637
  %v1639 = vrcp.pop %v1427
  %v1640 = vmul.f32 %v1427, %v1639
  %v1641 = vsub.f32 1.0, %v1640
  %v1642 = vmul.f32 %v1639, %v1641
  %v1643 = vadd.f32 %v1639, %v1642
  %vm1644 = vweird.f32 %v1427
  %vm1645 = vweird.f32 %v1639
  %vm1646 = vmor %vm1644, %vm1645
  %v1647 = vsel %vm1646, %v1639, %v1643
  %v1648 = vand.u32 2147483647, %v1427
  %vm1649 = vcmp.eq.f32.partialorder %v1648, 8.507059e+37
  %v1650 = vand.u32 %v1427, 2147483648
  %v1651 = vor.u32 1.1754944e-38, %v1650
  %v1652 = vsel %vm1649, %v1651, %v1647
  %v1653 = vmul.f32 %v1411, %v1652
  %v1654 = vrcp.pop %v1428
  %v1655 = vmul.f32 %v1428, %v1654
  %v1656 = vsub.f32 1.0, %v1655
  %v1657 = vmul.f32 %v1654, %v1656
  %v1658 = vadd.f32 %v1654, %v1657
  %vm1659 = vweird.f32 %v1428
  %vm1660 = vweird.f32 %v1654
  %vm1661 = vmor %vm1659, %vm1660
  %v1662 = vsel %vm1661, %v1654, %v1658
  %v1663 = vand.u32 2147483647, %v1428
  %vm1664 = vcmp.eq.f32.partialorder %v1663, 8.507059e+37
  %v1665 = vand.u32 %v1428, 2147483648
  %v1666 = vor.u32 1.1754944e-38, %v1665
  %v1667 = vsel %vm1664, %v1666, %v1662
  %v1668 = vmul.f32 %v1412, %v1667
  %v1669 = vsel %vm863, 1, 0
  %v1670 = vrot.slane %v1669, 4
  %vm1671 = vcmp.ne.s32.totalorder %v1670, 0
  %vm1672 = vmor %vm863, %vm1671
  %v1673 = vsel %vm1672, 1, 0
  %v1674 = vperm.slane %v1673, 2
  %vm1675 = vcmp.eq.s32.totalorder %v1674, 1
  %v1676 = vsel %vm1675, 0.0, %v1443
  %v1677 = vsel %vm1675, 0.0, %v1458
  %v1678 = vsel %vm1675, 0.0, %v1473
  %v1679 = vsel %vm1675, 0.0, %v1488
  %v1680 = vsel %vm1675, 0.0, %v1503
  %v1681 = vsel %vm1675, 0.0, %v1518
  %v1682 = vsel %vm1675, 0.0, %v1533
  %v1683 = vsel %vm1675, 0.0, %v1548
  %v1684 = vsel %vm1675, 0.0, %v1563
  %v1685 = vsel %vm1675, 0.0, %v1578
  %v1686 = vsel %vm1675, 0.0, %v1593
  %v1687 = vsel %vm1675, 0.0, %v1608
  %v1688 = vsel %vm1675, 0.0, %v1623
  %v1689 = vsel %vm1675, 0.0, %v1638
  %v1690 = vsel %vm1675, 0.0, %v1653
  %v1691 = vsel %vm1675, 0.0, %v1668
  %v1692 = vsel %vm843, 1, 0
  %v1693 = vsel %vm844, 1, 0
  %v1694 = vsel %vm845, 1, 0
  %v1695 = vsel %vm846, 1, 0
  %v1696 = vsel %vm847, 1, 0
  %v1697 = vsel %vm848, 1, 0
  %v1698 = vsel %vm849, 1, 0
  %v1699 = vsel %vm850, 1, 0
  %v1700 = vsel %vm851, 1, 0
  %v1701 = vsel %vm852, 1, 0
  %v1702 = vsel %vm853, 1, 0
  %v1703 = vsel %vm854, 1, 0
  %v1704 = vsel %vm855, 1, 0
  %v1705 = vsel %vm856, 1, 0
  %v1706 = vsel %vm857, 1, 0
  %v1707 = vsel %vm858, 1, 0
  %1708 = vrot.lane.b32.xlu0 %v1692, 124
  %v1709 = vpop.permute.xlu0 %1708
  %1710 = vrot.lane.b32.xlu0 %v1693, 124
  %v1711 = vpop.permute.xlu0 %1710
  %1712 = vrot.lane.b32.xlu0 %v1694, 124
  %v1713 = vpop.permute.xlu0 %1712
  %1714 = vrot.lane.b32.xlu0 %v1695, 124
  %v1715 = vpop.permute.xlu0 %1714
  %1716 = vrot.lane.b32.xlu0 %v1696, 124
  %v1717 = vpop.permute.xlu0 %1716
  %1718 = vrot.lane.b32.xlu0 %v1697, 124
  %v1719 = vpop.permute.xlu0 %1718
  %1720 = vrot.lane.b32.xlu0 %v1698, 124
  %v1721 = vpop.permute.xlu0 %1720
  %1722 = vrot.lane.b32.xlu0 %v1699, 124
  %v1723 = vpop.permute.xlu0 %1722
  %1724 = vrot.lane.b32.xlu0 %v1700, 124
  %v1725 = vpop.permute.xlu0 %1724
  %1726 = vrot.lane.b32.xlu0 %v1701, 124
  %v1727 = vpop.permute.xlu0 %1726
  %1728 = vrot.lane.b32.xlu0 %v1702, 124
  %v1729 = vpop.permute.xlu0 %1728
  %1730 = vrot.lane.b32.xlu0 %v1703, 124
  %v1731 = vpop.permute.xlu0 %1730
  %1732 = vrot.lane.b32.xlu0 %v1704, 124
  %v1733 = vpop.permute.xlu0 %1732
  %1734 = vrot.lane.b32.xlu0 %v1705, 124
  %v1735 = vpop.permute.xlu0 %1734
  %1736 = vrot.lane.b32.xlu0 %v1706, 124
  %v1737 = vpop.permute.xlu0 %1736
  %1738 = vrot.lane.b32.xlu0 %v1707, 124
  %v1739 = vpop.permute.xlu0 %1738
  %vm1740 = vcmp.ne.s32.totalorder %v1709, 0
  %vm1741 = vcmp.ne.s32.totalorder %v1711, 0
  %vm1742 = vcmp.ne.s32.totalorder %v1713, 0
  %vm1743 = vcmp.ne.s32.totalorder %v1715, 0
  %vm1744 = vcmp.ne.s32.totalorder %v1717, 0
  %vm1745 = vcmp.ne.s32.totalorder %v1719, 0
  %vm1746 = vcmp.ne.s32.totalorder %v1721, 0
  %vm1747 = vcmp.ne.s32.totalorder %v1723, 0
  %vm1748 = vcmp.ne.s32.totalorder %v1725, 0
  %vm1749 = vcmp.ne.s32.totalorder %v1727, 0
  %vm1750 = vcmp.ne.s32.totalorder %v1729, 0
  %vm1751 = vcmp.ne.s32.totalorder %v1731, 0
  %vm1752 = vcmp.ne.s32.totalorder %v1733, 0
  %vm1753 = vcmp.ne.s32.totalorder %v1735, 0
  %vm1754 = vcmp.ne.s32.totalorder %v1737, 0
  %vm1755 = vcmp.ne.s32.totalorder %v1739, 0
  %vm1756 = vmor %vm843, %vm1740
  %vm1757 = vmor %vm844, %vm1741
  %vm1758 = vmor %vm845, %vm1742
  %vm1759 = vmor %vm846, %vm1743
  %vm1760 = vmor %vm847, %vm1744
  %vm1761 = vmor %vm848, %vm1745
  %vm1762 = vmor %vm849, %vm1746
  %vm1763 = vmor %vm850, %vm1747
  %vm1764 = vmor %vm851, %vm1748
  %vm1765 = vmor %vm852, %vm1749
  %vm1766 = vmor %vm853, %vm1750
  %vm1767 = vmor %vm854, %vm1751
  %vm1768 = vmor %vm855, %vm1752
  %vm1769 = vmor %vm856, %vm1753
  %vm1770 = vmor %vm857, %vm1754
  %vm1771 = vmor %vm858, %vm1755
  %v1772 = vsel %vm1756, 1, 0
  %v1773 = vsel %vm1757, 1, 0
  %v1774 = vsel %vm1758, 1, 0
  %v1775 = vsel %vm1759, 1, 0
  %v1776 = vsel %vm1760, 1, 0
  %v1777 = vsel %vm1761, 1, 0
  %v1778 = vsel %vm1762, 1, 0
  %v1779 = vsel %vm1763, 1, 0
  %v1780 = vsel %vm1764, 1, 0
  %v1781 = vsel %vm1765, 1, 0
  %v1782 = vsel %vm1766, 1, 0
  %v1783 = vsel %vm1767, 1, 0
  %v1784 = vsel %vm1768, 1, 0
  %v1785 = vsel %vm1769, 1, 0
  %v1786 = vsel %vm1770, 1, 0
  %v1787 = vsel %vm1771, 1, 0
  %1788 = vset.pattern.permute.xlu0 3
  %1789 = vperm.xlu0 %1788, %v1772
  %v1790 = vpop.permute.xlu0 %1789
  %1791 = vset.pattern.permute.xlu0 3
  %1792 = vperm.xlu0 %1791, %v1773
  %v1793 = vpop.permute.xlu0 %1792
  %1794 = vset.pattern.permute.xlu0 3
  %1795 = vperm.xlu0 %1794, %v1774
  %v1796 = vpop.permute.xlu0 %1795
  %1797 = vset.pattern.permute.xlu0 3
  %1798 = vperm.xlu0 %1797, %v1775
  %v1799 = vpop.permute.xlu0 %1798
  %1800 = vset.pattern.permute.xlu0 3
  %1801 = vperm.xlu0 %1800, %v1776
  %v1802 = vpop.permute.xlu0 %1801
  %1803 = vset.pattern.permute.xlu0 3
  %1804 = vperm.xlu0 %1803, %v1777
  %v1805 = vpop.permute.xlu0 %1804
  %1806 = vset.pattern.permute.xlu0 3
  %1807 = vperm.xlu0 %1806, %v1778
  %v1808 = vpop.permute.xlu0 %1807
  %1809 = vset.pattern.permute.xlu0 3
  %1810 = vperm.xlu0 %1809, %v1779
  %v1811 = vpop.permute.xlu0 %1810
  %1812 = vset.pattern.permute.xlu0 3
  %1813 = vperm.xlu0 %1812, %v1780
  %v1814 = vpop.permute.xlu0 %1813
  %1815 = vset.pattern.permute.xlu0 3
  %1816 = vperm.xlu0 %1815, %v1781
  %v1817 = vpop.permute.xlu0 %1816
  %1818 = vset.pattern.permute.xlu0 3
  %1819 = vperm.xlu0 %1818, %v1782
  %v1820 = vpop.permute.xlu0 %1819
  %1821 = vset.pattern.permute.xlu0 3
  %1822 = vperm.xlu0 %1821, %v1783
  %v1823 = vpop.permute.xlu0 %1822
  %1824 = vset.pattern.permute.xlu0 3
  %1825 = vperm.xlu0 %1824, %v1784
  %v1826 = vpop.permute.xlu0 %1825
  %1827 = vset.pattern.permute.xlu0 3
  %1828 = vperm.xlu0 %1827, %v1785
  %v1829 = vpop.permute.xlu0 %1828
  %1830 = vset.pattern.permute.xlu0 3
  %1831 = vperm.xlu0 %1830, %v1786
  %v1832 = vpop.permute.xlu0 %1831
  %1833 = vset.pattern.permute.xlu0 3
  %1834 = vperm.xlu0 %1833, %v1787
  %v1835 = vpop.permute.xlu0 %1834
  %vm1836 = vcmp.eq.s32.totalorder %v1790, 1
  %vm1837 = vcmp.eq.s32.totalorder %v1793, 1
  %vm1838 = vcmp.eq.s32.totalorder %v1796, 1
  %vm1839 = vcmp.eq.s32.totalorder %v1799, 1
  %vm1840 = vcmp.eq.s32.totalorder %v1802, 1
  %vm1841 = vcmp.eq.s32.totalorder %v1805, 1
  %vm1842 = vcmp.eq.s32.totalorder %v1808, 1
  %vm1843 = vcmp.eq.s32.totalorder %v1811, 1
  %vm1844 = vcmp.eq.s32.totalorder %v1814, 1
  %vm1845 = vcmp.eq.s32.totalorder %v1817, 1
  %vm1846 = vcmp.eq.s32.totalorder %v1820, 1
  %vm1847 = vcmp.eq.s32.totalorder %v1823, 1
  %vm1848 = vcmp.eq.s32.totalorder %v1826, 1
  %vm1849 = vcmp.eq.s32.totalorder %v1829, 1
  %vm1850 = vcmp.eq.s32.totalorder %v1832, 1
  %vm1851 = vcmp.eq.s32.totalorder %v1835, 1
  %v1852 = vsel %vm1836, -1.0, %v1676
  %v1853 = vsel %vm1837, -1.0, %v1677
  %v1854 = vsel %vm1838, -1.0, %v1678
  %v1855 = vsel %vm1839, -1.0, %v1679
  %v1856 = vsel %vm1840, -1.0, %v1680
  %v1857 = vsel %vm1841, -1.0, %v1681
  %v1858 = vsel %vm1842, -1.0, %v1682
  %v1859 = vsel %vm1843, -1.0, %v1683
  %v1860 = vsel %vm1844, -1.0, %v1684
  %v1861 = vsel %vm1845, -1.0, %v1685
  %v1862 = vsel %vm1846, -1.0, %v1686
  %v1863 = vsel %vm1847, -1.0, %v1687
  %v1864 = vsel %vm1848, -1.0, %v1688
  %v1865 = vsel %vm1849, -1.0, %v1689
  %v1866 = vsel %vm1850, -1.0, %v1690
  %v1867 = vsel %vm1851, -1.0, %v1691
  %vm1868 = vcmask 130048
  %v1869 = vsel %vm1868, %v1852, -inf
  %1870 = vmax.xlane.f32.xlu0 %v1869
  %v1871 = vpop.xlane.xlu0 %1870
  %v1872 = vsel %vm1868, %v1853, -inf
  %1873 = vmax.xlane.f32.xlu0 %v1872
  %v1874 = vpop.xlane.xlu0 %1873
  %v1875 = vsel %vm1868, %v1854, -inf
  %1876 = vmax.xlane.f32.xlu0 %v1875
  %v1877 = vpop.xlane.xlu0 %1876
  %v1878 = vsel %vm1868, %v1855, -inf
  %1879 = vmax.xlane.f32.xlu0 %v1878
  %v1880 = vpop.xlane.xlu0 %1879
  %v1881 = vsel %vm1868, %v1856, -inf
  %1882 = vmax.xlane.f32.xlu0 %v1881
  %v1883 = vpop.xlane.xlu0 %1882
  %v1884 = vsel %vm1868, %v1857, -inf
  %1885 = vmax.xlane.f32.xlu0 %v1884
  %v1886 = vpop.xlane.xlu0 %1885
  %v1887 = vsel %vm1868, %v1858, -inf
  %1888 = vmax.xlane.f32.xlu0 %v1887
  %v1889 = vpop.xlane.xlu0 %1888
  %v1890 = vsel %vm1868, %v1859, -inf
  %1891 = vmax.xlane.f32.xlu0 %v1890
  %v1892 = vpop.xlane.xlu0 %1891
  %v1893 = vsel %vm1868, %v1860, -inf
  %1894 = vmax.xlane.f32.xlu0 %v1893
  %v1895 = vpop.xlane.xlu0 %1894
  %v1896 = vsel %vm1868, %v1861, -inf
  %1897 = vmax.xlane.f32.xlu0 %v1896
  %v1898 = vpop.xlane.xlu0 %1897
  %v1899 = vsel %vm1868, %v1862, -inf
  %1900 = vmax.xlane.f32.xlu0 %v1899
  %v1901 = vpop.xlane.xlu0 %1900
  %v1902 = vsel %vm1868, %v1863, -inf
  %1903 = vmax.xlane.f32.xlu0 %v1902
  %v1904 = vpop.xlane.xlu0 %1903
  %v1905 = vsel %vm1868, %v1864, -inf
  %1906 = vmax.xlane.f32.xlu0 %v1905
  %v1907 = vpop.xlane.xlu0 %1906
  %v1908 = vsel %vm1868, %v1865, -inf
  %1909 = vmax.xlane.f32.xlu0 %v1908
  %v1910 = vpop.xlane.xlu0 %1909
  %v1911 = vsel %vm1868, %v1866, -inf
  %1912 = vmax.xlane.f32.xlu0 %v1911
  %v1913 = vpop.xlane.xlu0 %1912
  %v1914 = vsel %vm1868, %v1867, -inf
  %1915 = vmax.xlane.f32.xlu0 %v1914
  %v1916 = vpop.xlane.xlu0 %1915
  %v1917 = vlaneseq
  %v1918 = vand.u32 %v1917, 127
  %vm1919 = vcmp.eq.f32.partialorder %v1852, %v1871
  %vm1920 = vcmp.eq.f32.partialorder %v1853, %v1874
  %vm1921 = vcmp.eq.f32.partialorder %v1854, %v1877
  %vm1922 = vcmp.eq.f32.partialorder %v1855, %v1880
  %vm1923 = vcmp.eq.f32.partialorder %v1856, %v1883
  %vm1924 = vcmp.eq.f32.partialorder %v1857, %v1886
  %vm1925 = vcmp.eq.f32.partialorder %v1858, %v1889
  %vm1926 = vcmp.eq.f32.partialorder %v1859, %v1892
  %vm1927 = vcmp.eq.f32.partialorder %v1860, %v1895
  %vm1928 = vcmp.eq.f32.partialorder %v1861, %v1898
  %vm1929 = vcmp.eq.f32.partialorder %v1862, %v1901
  %vm1930 = vcmp.eq.f32.partialorder %v1863, %v1904
  %vm1931 = vcmp.eq.f32.partialorder %v1864, %v1907
  %vm1932 = vcmp.eq.f32.partialorder %v1865, %v1910
  %vm1933 = vcmp.eq.f32.partialorder %v1866, %v1913
  %vm1934 = vcmp.eq.f32.partialorder %v1867, %v1916
  %v1935 = vsel %vm1919, %v1918, 16
  %v1936 = vsel %vm1920, %v1918, 16
  %v1937 = vsel %vm1921, %v1918, 16
  %v1938 = vsel %vm1922, %v1918, 16
  %v1939 = vsel %vm1923, %v1918, 16
  %v1940 = vsel %vm1924, %v1918, 16
  %v1941 = vsel %vm1925, %v1918, 16
  %v1942 = vsel %vm1926, %v1918, 16
  %v1943 = vsel %vm1927, %v1918, 16
  %v1944 = vsel %vm1928, %v1918, 16
  %v1945 = vsel %vm1929, %v1918, 16
  %v1946 = vsel %vm1930, %v1918, 16
  %v1947 = vsel %vm1931, %v1918, 16
  %v1948 = vsel %vm1932, %v1918, 16
  %v1949 = vsel %vm1933, %v1918, 16
  %v1950 = vsel %vm1934, %v1918, 16
  %v1951 = vsel %vm1868, %v1935, 2147483647
  %v1952 = vand.u32 %v1951, 65535
  %v1953 = vshra.s32 %v1951, 16
  %v1954 = vcvt.s32.f32 %v1952
  %v1955 = vcvt.s32.f32 %v1953
  %1956 = vmin.xlane.f32.xlu0 %v1955
  %v1957 = vpop.xlane.xlu0 %1956
  %vm1958 = vcmp.eq.f32.partialorder %v1955, %v1957
  %v1959 = vsel %vm1958, %v1954, inf
  %1960 = vmin.xlane.f32.xlu0 %v1959
  %v1961 = vpop.xlane.xlu0 %1960
  %v1962 = vcvt.f32.s32 %v1961
  %v1963 = vcvt.f32.s32 %v1957
  %v1964 = vshll.u32 %v1963, 16
  %v1965 = vadd.s32 %v1964, %v1962
  %v1966 = vsel %vm1868, %v1936, 2147483647
  %v1967 = vand.u32 %v1966, 65535
  %v1968 = vshra.s32 %v1966, 16
  %v1969 = vcvt.s32.f32 %v1967
  %v1970 = vcvt.s32.f32 %v1968
  %1971 = vmin.xlane.f32.xlu0 %v1970
  %v1972 = vpop.xlane.xlu0 %1971
  %vm1973 = vcmp.eq.f32.partialorder %v1970, %v1972
  %v1974 = vsel %vm1973, %v1969, inf
  %1975 = vmin.xlane.f32.xlu0 %v1974
  %v1976 = vpop.xlane.xlu0 %1975
  %v1977 = vcvt.f32.s32 %v1976
  %v1978 = vcvt.f32.s32 %v1972
  %v1979 = vshll.u32 %v1978, 16
  %v1980 = vadd.s32 %v1979, %v1977
  %v1981 = vsel %vm1868, %v1937, 2147483647
  %v1982 = vand.u32 %v1981, 65535
  %v1983 = vshra.s32 %v1981, 16
  %v1984 = vcvt.s32.f32 %v1982
  %v1985 = vcvt.s32.f32 %v1983
  %1986 = vmin.xlane.f32.xlu0 %v1985
  %v1987 = vpop.xlane.xlu0 %1986
  %vm1988 = vcmp.eq.f32.partialorder %v1985, %v1987
  %v1989 = vsel %vm1988, %v1984, inf
  %1990 = vmin.xlane.f32.xlu0 %v1989
  %v1991 = vpop.xlane.xlu0 %1990
  %v1992 = vcvt.f32.s32 %v1991
  %v1993 = vcvt.f32.s32 %v1987
  %v1994 = vshll.u32 %v1993, 16
  %v1995 = vadd.s32 %v1994, %v1992
  %v1996 = vsel %vm1868, %v1938, 2147483647
  %v1997 = vand.u32 %v1996, 65535
  %v1998 = vshra.s32 %v1996, 16
  %v1999 = vcvt.s32.f32 %v1997
  %v2000 = vcvt.s32.f32 %v1998
  %2001 = vmin.xlane.f32.xlu0 %v2000
  %v2002 = vpop.xlane.xlu0 %2001
  %vm2003 = vcmp.eq.f32.partialorder %v2000, %v2002
  %v2004 = vsel %vm2003, %v1999, inf
  %2005 = vmin.xlane.f32.xlu0 %v2004
  %v2006 = vpop.xlane.xlu0 %2005
  %v2007 = vcvt.f32.s32 %v2006
  %v2008 = vcvt.f32.s32 %v2002
  %v2009 = vshll.u32 %v2008, 16
  %v2010 = vadd.s32 %v2009, %v2007
  %v2011 = vsel %vm1868, %v1939, 2147483647
  %v2012 = vand.u32 %v2011, 65535
  %v2013 = vshra.s32 %v2011, 16
  %v2014 = vcvt.s32.f32 %v2012
  %v2015 = vcvt.s32.f32 %v2013
  %2016 = vmin.xlane.f32.xlu0 %v2015
  %v2017 = vpop.xlane.xlu0 %2016
  %vm2018 = vcmp.eq.f32.partialorder %v2015, %v2017
  %v2019 = vsel %vm2018, %v2014, inf
  %2020 = vmin.xlane.f32.xlu0 %v2019
  %v2021 = vpop.xlane.xlu0 %2020
  %v2022 = vcvt.f32.s32 %v2021
  %v2023 = vcvt.f32.s32 %v2017
  %v2024 = vshll.u32 %v2023, 16
  %v2025 = vadd.s32 %v2024, %v2022
  %v2026 = vsel %vm1868, %v1940, 2147483647
  %v2027 = vand.u32 %v2026, 65535
  %v2028 = vshra.s32 %v2026, 16
  %v2029 = vcvt.s32.f32 %v2027
  %v2030 = vcvt.s32.f32 %v2028
  %2031 = vmin.xlane.f32.xlu0 %v2030
  %v2032 = vpop.xlane.xlu0 %2031
  %vm2033 = vcmp.eq.f32.partialorder %v2030, %v2032
  %v2034 = vsel %vm2033, %v2029, inf
  %2035 = vmin.xlane.f32.xlu0 %v2034
  %v2036 = vpop.xlane.xlu0 %2035
  %v2037 = vcvt.f32.s32 %v2036
  %v2038 = vcvt.f32.s32 %v2032
  %v2039 = vshll.u32 %v2038, 16
  %v2040 = vadd.s32 %v2039, %v2037
  %v2041 = vsel %vm1868, %v1941, 2147483647
  %v2042 = vand.u32 %v2041, 65535
  %v2043 = vshra.s32 %v2041, 16
  %v2044 = vcvt.s32.f32 %v2042
  %v2045 = vcvt.s32.f32 %v2043
  %2046 = vmin.xlane.f32.xlu0 %v2045
  %v2047 = vpop.xlane.xlu0 %2046
  %vm2048 = vcmp.eq.f32.partialorder %v2045, %v2047
  %v2049 = vsel %vm2048, %v2044, inf
  %2050 = vmin.xlane.f32.xlu0 %v2049
  %v2051 = vpop.xlane.xlu0 %2050
  %v2052 = vcvt.f32.s32 %v2051
  %v2053 = vcvt.f32.s32 %v2047
  %v2054 = vshll.u32 %v2053, 16
  %v2055 = vadd.s32 %v2054, %v2052
  %v2056 = vsel %vm1868, %v1942, 2147483647
  %v2057 = vand.u32 %v2056, 65535
  %v2058 = vshra.s32 %v2056, 16
  %v2059 = vcvt.s32.f32 %v2057
  %v2060 = vcvt.s32.f32 %v2058
  %2061 = vmin.xlane.f32.xlu0 %v2060
  %v2062 = vpop.xlane.xlu0 %2061
  %vm2063 = vcmp.eq.f32.partialorder %v2060, %v2062
  %v2064 = vsel %vm2063, %v2059, inf
  %2065 = vmin.xlane.f32.xlu0 %v2064
  %v2066 = vpop.xlane.xlu0 %2065
  %v2067 = vcvt.f32.s32 %v2066
  %v2068 = vcvt.f32.s32 %v2062
  %v2069 = vshll.u32 %v2068, 16
  %v2070 = vadd.s32 %v2069, %v2067
  %v2071 = vsel %vm1868, %v1943, 2147483647
  %v2072 = vand.u32 %v2071, 65535
  %v2073 = vshra.s32 %v2071, 16
  %v2074 = vcvt.s32.f32 %v2072
  %v2075 = vcvt.s32.f32 %v2073
  %2076 = vmin.xlane.f32.xlu0 %v2075
  %v2077 = vpop.xlane.xlu0 %2076
  %vm2078 = vcmp.eq.f32.partialorder %v2075, %v2077
  %v2079 = vsel %vm2078, %v2074, inf
  %2080 = vmin.xlane.f32.xlu0 %v2079
  %v2081 = vpop.xlane.xlu0 %2080
  %v2082 = vcvt.f32.s32 %v2081
  %v2083 = vcvt.f32.s32 %v2077
  %v2084 = vshll.u32 %v2083, 16
  %v2085 = vadd.s32 %v2084, %v2082
  %v2086 = vsel %vm1868, %v1944, 2147483647
  %v2087 = vand.u32 %v2086, 65535
  %v2088 = vshra.s32 %v2086, 16
  %v2089 = vcvt.s32.f32 %v2087
  %v2090 = vcvt.s32.f32 %v2088
  %2091 = vmin.xlane.f32.xlu0 %v2090
  %v2092 = vpop.xlane.xlu0 %2091
  %vm2093 = vcmp.eq.f32.partialorder %v2090, %v2092
  %v2094 = vsel %vm2093, %v2089, inf
  %2095 = vmin.xlane.f32.xlu0 %v2094
  %v2096 = vpop.xlane.xlu0 %2095
  %v2097 = vcvt.f32.s32 %v2096
  %v2098 = vcvt.f32.s32 %v2092
  %v2099 = vshll.u32 %v2098, 16
  %v2100 = vadd.s32 %v2099, %v2097
  %v2101 = vsel %vm1868, %v1945, 2147483647
  %v2102 = vand.u32 %v2101, 65535
  %v2103 = vshra.s32 %v2101, 16
  %v2104 = vcvt.s32.f32 %v2102
  %v2105 = vcvt.s32.f32 %v2103
  %2106 = vmin.xlane.f32.xlu0 %v2105
  %v2107 = vpop.xlane.xlu0 %2106
  %vm2108 = vcmp.eq.f32.partialorder %v2105, %v2107
  %v2109 = vsel %vm2108, %v2104, inf
  %2110 = vmin.xlane.f32.xlu0 %v2109
  %v2111 = vpop.xlane.xlu0 %2110
  %v2112 = vcvt.f32.s32 %v2111
  %v2113 = vcvt.f32.s32 %v2107
  %v2114 = vshll.u32 %v2113, 16
  %v2115 = vadd.s32 %v2114, %v2112
  %v2116 = vsel %vm1868, %v1946, 2147483647
  %v2117 = vand.u32 %v2116, 65535
  %v2118 = vshra.s32 %v2116, 16
  %v2119 = vcvt.s32.f32 %v2117
  %v2120 = vcvt.s32.f32 %v2118
  %2121 = vmin.xlane.f32.xlu0 %v2120
  %v2122 = vpop.xlane.xlu0 %2121
  %vm2123 = vcmp.eq.f32.partialorder %v2120, %v2122
  %v2124 = vsel %vm2123, %v2119, inf
  %2125 = vmin.xlane.f32.xlu0 %v2124
  %v2126 = vpop.xlane.xlu0 %2125
  %v2127 = vcvt.f32.s32 %v2126
  %v2128 = vcvt.f32.s32 %v2122
  %v2129 = vshll.u32 %v2128, 16
  %v2130 = vadd.s32 %v2129, %v2127
  %v2131 = vsel %vm1868, %v1947, 2147483647
  %v2132 = vand.u32 %v2131, 65535
  %v2133 = vshra.s32 %v2131, 16
  %v2134 = vcvt.s32.f32 %v2132
  %v2135 = vcvt.s32.f32 %v2133
  %2136 = vmin.xlane.f32.xlu0 %v2135
  %v2137 = vpop.xlane.xlu0 %2136
  %vm2138 = vcmp.eq.f32.partialorder %v2135, %v2137
  %v2139 = vsel %vm2138, %v2134, inf
  %2140 = vmin.xlane.f32.xlu0 %v2139
  %v2141 = vpop.xlane.xlu0 %2140
  %v2142 = vcvt.f32.s32 %v2141
  %v2143 = vcvt.f32.s32 %v2137
  %v2144 = vshll.u32 %v2143, 16
  %v2145 = vadd.s32 %v2144, %v2142
  %v2146 = vsel %vm1868, %v1948, 2147483647
  %v2147 = vand.u32 %v2146, 65535
  %v2148 = vshra.s32 %v2146, 16
  %v2149 = vcvt.s32.f32 %v2147
  %v2150 = vcvt.s32.f32 %v2148
  %2151 = vmin.xlane.f32.xlu0 %v2150
  %v2152 = vpop.xlane.xlu0 %2151
  %vm2153 = vcmp.eq.f32.partialorder %v2150, %v2152
  %v2154 = vsel %vm2153, %v2149, inf
  %2155 = vmin.xlane.f32.xlu0 %v2154
  %v2156 = vpop.xlane.xlu0 %2155
  %v2157 = vcvt.f32.s32 %v2156
  %v2158 = vcvt.f32.s32 %v2152
  %v2159 = vshll.u32 %v2158, 16
  %v2160 = vadd.s32 %v2159, %v2157
  %v2161 = vsel %vm1868, %v1949, 2147483647
  %v2162 = vand.u32 %v2161, 65535
  %v2163 = vshra.s32 %v2161, 16
  %v2164 = vcvt.s32.f32 %v2162
  %v2165 = vcvt.s32.f32 %v2163
  %2166 = vmin.xlane.f32.xlu0 %v2165
  %v2167 = vpop.xlane.xlu0 %2166
  %vm2168 = vcmp.eq.f32.partialorder %v2165, %v2167
  %v2169 = vsel %vm2168, %v2164, inf
  %2170 = vmin.xlane.f32.xlu0 %v2169
  %v2171 = vpop.xlane.xlu0 %2170
  %v2172 = vcvt.f32.s32 %v2171
  %v2173 = vcvt.f32.s32 %v2167
  %v2174 = vshll.u32 %v2173, 16
  %v2175 = vadd.s32 %v2174, %v2172
  %v2176 = vsel %vm1868, %v1950, 2147483647
  %v2177 = vand.u32 %v2176, 65535
  %v2178 = vshra.s32 %v2176, 16
  %v2179 = vcvt.s32.f32 %v2177
  %v2180 = vcvt.s32.f32 %v2178
  %2181 = vmin.xlane.f32.xlu0 %v2180
  %v2182 = vpop.xlane.xlu0 %2181
  %vm2183 = vcmp.eq.f32.partialorder %v2180, %v2182
  %v2184 = vsel %vm2183, %v2179, inf
  %2185 = vmin.xlane.f32.xlu0 %v2184
  %v2186 = vpop.xlane.xlu0 %2185
  %v2187 = vcvt.f32.s32 %v2186
  %v2188 = vcvt.f32.s32 %v2182
  %v2189 = vshll.u32 %v2188, 16
  %v2190 = vadd.s32 %v2189, %v2187
  %vm2191 = vcmp.eq.s32.totalorder %v1918, %v1965
  %vm2192 = vcmp.eq.s32.totalorder %v1918, %v1980
  %vm2193 = vcmp.eq.s32.totalorder %v1918, %v1995
  %vm2194 = vcmp.eq.s32.totalorder %v1918, %v2010
  %vm2195 = vcmp.eq.s32.totalorder %v1918, %v2025
  %vm2196 = vcmp.eq.s32.totalorder %v1918, %v2040
  %vm2197 = vcmp.eq.s32.totalorder %v1918, %v2055
  %vm2198 = vcmp.eq.s32.totalorder %v1918, %v2070
  %vm2199 = vcmp.eq.s32.totalorder %v1918, %v2085
  %vm2200 = vcmp.eq.s32.totalorder %v1918, %v2100
  %vm2201 = vcmp.eq.s32.totalorder %v1918, %v2115
  %vm2202 = vcmp.eq.s32.totalorder %v1918, %v2130
  %vm2203 = vcmp.eq.s32.totalorder %v1918, %v2145
  %vm2204 = vcmp.eq.s32.totalorder %v1918, %v2160
  %vm2205 = vcmp.eq.s32.totalorder %v1918, %v2175
  %vm2206 = vcmp.eq.s32.totalorder %v1918, %v2190
  %v2207 = vperm.slane %v28, 0
  %v2208 = vsel %vm2191, %v2207, 0.0
  %v2209 = vsel %vm2192, %v2207, 0.0
  %v2210 = vsel %vm2193, %v2207, 0.0
  %v2211 = vsel %vm2194, %v2207, 0.0
  %v2212 = vsel %vm2195, %v2207, 0.0
  %v2213 = vsel %vm2196, %v2207, 0.0
  %v2214 = vsel %vm2197, %v2207, 0.0
  %v2215 = vsel %vm2198, %v2207, 0.0
  %v2216 = vsel %vm2199, %v2207, 0.0
  %v2217 = vsel %vm2200, %v2207, 0.0
  %v2218 = vsel %vm2201, %v2207, 0.0
  %v2219 = vsel %vm2202, %v2207, 0.0
  %v2220 = vsel %vm2203, %v2207, 0.0
  %v2221 = vsel %vm2204, %v2207, 0.0
  %v2222 = vsel %vm2205, %v2207, 0.0
  %v2223 = vsel %vm2206, %v2207, 0.0
  %v2224 = vsel %vm1868, %v2208, 0.0
  %2225 = vadd.xlane.f32.xlu0 %v2224
  %v2226 = vpop.xlane.xlu0 %2225
  %v2227 = vsel %vm1868, %v2209, 0.0
  %2228 = vadd.xlane.f32.xlu0 %v2227
  %v2229 = vpop.xlane.xlu0 %2228
  %v2230 = vsel %vm1868, %v2210, 0.0
  %2231 = vadd.xlane.f32.xlu0 %v2230
  %v2232 = vpop.xlane.xlu0 %2231
  %v2233 = vsel %vm1868, %v2211, 0.0
  %2234 = vadd.xlane.f32.xlu0 %v2233
  %v2235 = vpop.xlane.xlu0 %2234
  %v2236 = vsel %vm1868, %v2212, 0.0
  %2237 = vadd.xlane.f32.xlu0 %v2236
  %v2238 = vpop.xlane.xlu0 %2237
  %v2239 = vsel %vm1868, %v2213, 0.0
  %2240 = vadd.xlane.f32.xlu0 %v2239
  %v2241 = vpop.xlane.xlu0 %2240
  %v2242 = vsel %vm1868, %v2214, 0.0
  %2243 = vadd.xlane.f32.xlu0 %v2242
  %v2244 = vpop.xlane.xlu0 %2243
  %v2245 = vsel %vm1868, %v2215, 0.0
  %2246 = vadd.xlane.f32.xlu0 %v2245
  %v2247 = vpop.xlane.xlu0 %2246
  %v2248 = vsel %vm1868, %v2216, 0.0
  %2249 = vadd.xlane.f32.xlu0 %v2248
  %v2250 = vpop.xlane.xlu0 %2249
  %v2251 = vsel %vm1868, %v2217, 0.0
  %2252 = vadd.xlane.f32.xlu0 %v2251
  %v2253 = vpop.xlane.xlu0 %2252
  %v2254 = vsel %vm1868, %v2218, 0.0
  %2255 = vadd.xlane.f32.xlu0 %v2254
  %v2256 = vpop.xlane.xlu0 %2255
  %v2257 = vsel %vm1868, %v2219, 0.0
  %2258 = vadd.xlane.f32.xlu0 %v2257
  %v2259 = vpop.xlane.xlu0 %2258
  %v2260 = vsel %vm1868, %v2220, 0.0
  %2261 = vadd.xlane.f32.xlu0 %v2260
  %v2262 = vpop.xlane.xlu0 %2261
  %v2263 = vsel %vm1868, %v2221, 0.0
  %2264 = vadd.xlane.f32.xlu0 %v2263
  %v2265 = vpop.xlane.xlu0 %2264
  %v2266 = vsel %vm1868, %v2222, 0.0
  %2267 = vadd.xlane.f32.xlu0 %v2266
  %v2268 = vpop.xlane.xlu0 %2267
  %v2269 = vsel %vm1868, %v2223, 0.0
  %2270 = vadd.xlane.f32.xlu0 %v2269
  %v2271 = vpop.xlane.xlu0 %2270
  %vm2272 = vcmask 7168
  %2273 = vst.msk [vmem:[%s2] sm:$0xff] %vm2272, %v1871
  %2274 = vst.msk [vmem:[%s2 + $0x8] sm:$0xff] %vm2272, %v1874
  %2275 = vst.msk [vmem:[%s2 + $0x10] sm:$0xff] %vm2272, %v1877
  %2276 = vst.msk [vmem:[%s2 + $0x18] sm:$0xff] %vm2272, %v1880
  %2277 = vst.msk [vmem:[%s2 + $0x20] sm:$0xff] %vm2272, %v1883
  %2278 = vst.msk [vmem:[%s2 + $0x28] sm:$0xff] %vm2272, %v1886
  %2279 = vst.msk [vmem:[%s2 + $0x30] sm:$0xff] %vm2272, %v1889
  %2280 = vst.msk [vmem:[%s2 + $0x38] sm:$0xff] %vm2272, %v1892
  %2281 = vst.msk [vmem:[%s2 + $0x40] sm:$0xff] %vm2272, %v1895
  %2282 = vst.msk [vmem:[%s2 + $0x48] sm:$0xff] %vm2272, %v1898
  %2283 = vst.msk [vmem:[%s2 + $0x50] sm:$0xff] %vm2272, %v1901
  %2284 = vst.msk [vmem:[%s2 + $0x58] sm:$0xff] %vm2272, %v1904
  %2285 = vst.msk [vmem:[%s2 + $0x60] sm:$0xff] %vm2272, %v1907
  %2286 = vst.msk [vmem:[%s2 + $0x68] sm:$0xff] %vm2272, %v1910
  %2287 = vst.msk [vmem:[%s2 + $0x70] sm:$0xff] %vm2272, %v1913
  %2288 = vst.msk [vmem:[%s2 + $0x78] sm:$0xff] %vm2272, %v1916
  %vm2289 = vcmask 15368
  %2290 = vst.msk [vmem:[%s2] sm:$0xff] %vm2289, %v2226
  %2291 = vst.msk [vmem:[%s2 + $0x8] sm:$0xff] %vm2289, %v2229
  %2292 = vst.msk [vmem:[%s2 + $0x10] sm:$0xff] %vm2289, %v2232
  %2293 = vst.msk [vmem:[%s2 + $0x18] sm:$0xff] %vm2289, %v2235
  %2294 = vst.msk [vmem:[%s2 + $0x20] sm:$0xff] %vm2289, %v2238
  %2295 = vst.msk [vmem:[%s2 + $0x28] sm:$0xff] %vm2289, %v2241
  %2296 = vst.msk [vmem:[%s2 + $0x30] sm:$0xff] %vm2289, %v2244
  %2297 = vst.msk [vmem:[%s2 + $0x38] sm:$0xff] %vm2289, %v2247
  %2298 = vst.msk [vmem:[%s2 + $0x40] sm:$0xff] %vm2289, %v2250
  %2299 = vst.msk [vmem:[%s2 + $0x48] sm:$0xff] %vm2289, %v2253
  %2300 = vst.msk [vmem:[%s2 + $0x50] sm:$0xff] %vm2289, %v2256
  %2301 = vst.msk [vmem:[%s2 + $0x58] sm:$0xff] %vm2289, %v2259
  %2302 = vst.msk [vmem:[%s2 + $0x60] sm:$0xff] %vm2289, %v2262
  %2303 = vst.msk [vmem:[%s2 + $0x68] sm:$0xff] %vm2289, %v2265
  %2304 = vst.msk [vmem:[%s2 + $0x70] sm:$0xff] %vm2289, %v2268
  %2305 = vst.msk [vmem:[%s2 + $0x78] sm:$0xff] %vm2289, %v2271
  %s2306 = scalar_lea.vmem %s0, 128
  %v2307 = vld [vmem:[%s2306] sm:$0xff]
  %v2308 = vld [vmem:[%s2306 + $0x8] sm:$0xff]
  %v2309 = vld [vmem:[%s2306 + $0x10] sm:$0xff]
  %v2310 = vld [vmem:[%s2306 + $0x18] sm:$0xff]
  %v2311 = vld [vmem:[%s2306 + $0x20] sm:$0xff]
  %v2312 = vld [vmem:[%s2306 + $0x28] sm:$0xff]
  %v2313 = vld [vmem:[%s2306 + $0x30] sm:$0xff]
  %v2314 = vld [vmem:[%s2306 + $0x38] sm:$0xff]
  %v2315 = vld [vmem:[%s2306 + $0x40] sm:$0xff]
  %v2316 = vld [vmem:[%s2306 + $0x48] sm:$0xff]
  %v2317 = vld [vmem:[%s2306 + $0x50] sm:$0xff]
  %v2318 = vld [vmem:[%s2306 + $0x58] sm:$0xff]
  %v2319 = vld [vmem:[%s2306 + $0x60] sm:$0xff]
  %v2320 = vld [vmem:[%s2306 + $0x68] sm:$0xff]
  %v2321 = vld [vmem:[%s2306 + $0x70] sm:$0xff]
  %v2322 = vld [vmem:[%s2306 + $0x78] sm:$0xff]
  %s2323 = scalar_lea.vmem %s1, 16
  %v2324 = vld [vmem:[%s2323] sm:$0xff]
  %v2325 = vld [vmem:[%s2323 + $0x8] sm:$0x1]
  %2342 = vrot.lane.b32.xlu0 %v2307, 2
  %v2343 = vpop.permute.xlu0 %2342
  %2344 = vrot.lane.b32.xlu0 %v2308, 2
  %v2345 = vpop.permute.xlu0 %2344
  %2346 = vrot.lane.b32.xlu0 %v2309, 2
  %v2347 = vpop.permute.xlu0 %2346
  %2348 = vrot.lane.b32.xlu0 %v2310, 2
  %v2349 = vpop.permute.xlu0 %2348
  %2350 = vrot.lane.b32.xlu0 %v2311, 2
  %v2351 = vpop.permute.xlu0 %2350
  %2352 = vrot.lane.b32.xlu0 %v2312, 2
  %v2353 = vpop.permute.xlu0 %2352
  %2354 = vrot.lane.b32.xlu0 %v2313, 2
  %v2355 = vpop.permute.xlu0 %2354
  %2356 = vrot.lane.b32.xlu0 %v2314, 2
  %v2357 = vpop.permute.xlu0 %2356
  %2358 = vrot.lane.b32.xlu0 %v2315, 2
  %v2359 = vpop.permute.xlu0 %2358
  %2360 = vrot.lane.b32.xlu0 %v2316, 2
  %v2361 = vpop.permute.xlu0 %2360
  %2362 = vrot.lane.b32.xlu0 %v2317, 2
  %v2363 = vpop.permute.xlu0 %2362
  %2364 = vrot.lane.b32.xlu0 %v2318, 2
  %v2365 = vpop.permute.xlu0 %2364
  %2366 = vrot.lane.b32.xlu0 %v2319, 2
  %v2367 = vpop.permute.xlu0 %2366
  %2368 = vrot.lane.b32.xlu0 %v2320, 2
  %v2369 = vpop.permute.xlu0 %2368
  %2370 = vrot.lane.b32.xlu0 %v2321, 2
  %v2371 = vpop.permute.xlu0 %2370
  %2372 = vrot.lane.b32.xlu0 %v2322, 2
  %v2373 = vpop.permute.xlu0 %2372
  %v2390 = vsub.f32 %v2307, %v2343
  %v2391 = vsub.f32 %v2308, %v2345
  %v2392 = vsub.f32 %v2309, %v2347
  %v2393 = vsub.f32 %v2310, %v2349
  %v2394 = vsub.f32 %v2311, %v2351
  %v2395 = vsub.f32 %v2312, %v2353
  %v2396 = vsub.f32 %v2313, %v2355
  %v2397 = vsub.f32 %v2314, %v2357
  %v2398 = vsub.f32 %v2315, %v2359
  %v2399 = vsub.f32 %v2316, %v2361
  %v2400 = vsub.f32 %v2317, %v2363
  %v2401 = vsub.f32 %v2318, %v2365
  %v2402 = vsub.f32 %v2319, %v2367
  %v2403 = vsub.f32 %v2320, %v2369
  %v2404 = vsub.f32 %v2321, %v2371
  %v2405 = vsub.f32 %v2322, %v2373
  %v2406 = vadd.f32 %v2390, 1.0
  %v2407 = vadd.f32 %v2391, 1.0
  %v2408 = vadd.f32 %v2392, 1.0
  %v2409 = vadd.f32 %v2393, 1.0
  %v2410 = vadd.f32 %v2394, 1.0
  %v2411 = vadd.f32 %v2395, 1.0
  %v2412 = vadd.f32 %v2396, 1.0
  %v2413 = vadd.f32 %v2397, 1.0
  %v2414 = vadd.f32 %v2398, 1.0
  %v2415 = vadd.f32 %v2399, 1.0
  %v2416 = vadd.f32 %v2400, 1.0
  %v2417 = vadd.f32 %v2401, 1.0
  %v2418 = vadd.f32 %v2402, 1.0
  %v2419 = vadd.f32 %v2403, 1.0
  %v2420 = vadd.f32 %v2404, 1.0
  %v2421 = vadd.f32 %v2405, 1.0
  %v2423 = vrot.slane %v2324, 6
  %v2425 = vsub.f32 %v2324, %v2423
  %v2426 = vadd.f32 %v2425, 1.0
  %2443 = vrot.lane.b32.xlu0 %v2406, 127
  %v2444 = vpop.permute.xlu0 %2443
  %2445 = vrot.lane.b32.xlu0 %v2407, 127
  %v2446 = vpop.permute.xlu0 %2445
  %2447 = vrot.lane.b32.xlu0 %v2408, 127
  %v2448 = vpop.permute.xlu0 %2447
  %2449 = vrot.lane.b32.xlu0 %v2409, 127
  %v2450 = vpop.permute.xlu0 %2449
  %2451 = vrot.lane.b32.xlu0 %v2410, 127
  %v2452 = vpop.permute.xlu0 %2451
  %2453 = vrot.lane.b32.xlu0 %v2411, 127
  %v2454 = vpop.permute.xlu0 %2453
  %2455 = vrot.lane.b32.xlu0 %v2412, 127
  %v2456 = vpop.permute.xlu0 %2455
  %2457 = vrot.lane.b32.xlu0 %v2413, 127
  %v2458 = vpop.permute.xlu0 %2457
  %2459 = vrot.lane.b32.xlu0 %v2414, 127
  %v2460 = vpop.permute.xlu0 %2459
  %2461 = vrot.lane.b32.xlu0 %v2415, 127
  %v2462 = vpop.permute.xlu0 %2461
  %2463 = vrot.lane.b32.xlu0 %v2416, 127
  %v2464 = vpop.permute.xlu0 %2463
  %2465 = vrot.lane.b32.xlu0 %v2417, 127
  %v2466 = vpop.permute.xlu0 %2465
  %2467 = vrot.lane.b32.xlu0 %v2418, 127
  %v2468 = vpop.permute.xlu0 %2467
  %2469 = vrot.lane.b32.xlu0 %v2419, 127
  %v2470 = vpop.permute.xlu0 %2469
  %2471 = vrot.lane.b32.xlu0 %v2420, 127
  %v2472 = vpop.permute.xlu0 %2471
  %2473 = vrot.lane.b32.xlu0 %v2421, 127
  %v2474 = vpop.permute.xlu0 %2473
  %v2491 = vmul.f32 %v2406, %v2444
  %v2492 = vmul.f32 %v2407, %v2446
  %v2493 = vmul.f32 %v2408, %v2448
  %v2494 = vmul.f32 %v2409, %v2450
  %v2495 = vmul.f32 %v2410, %v2452
  %v2496 = vmul.f32 %v2411, %v2454
  %v2497 = vmul.f32 %v2412, %v2456
  %v2498 = vmul.f32 %v2413, %v2458
  %v2499 = vmul.f32 %v2414, %v2460
  %v2500 = vmul.f32 %v2415, %v2462
  %v2501 = vmul.f32 %v2416, %v2464
  %v2502 = vmul.f32 %v2417, %v2466
  %v2503 = vmul.f32 %v2418, %v2468
  %v2504 = vmul.f32 %v2419, %v2470
  %v2505 = vmul.f32 %v2420, %v2472
  %v2506 = vmul.f32 %v2421, %v2474
  %v2508 = vrot.slane %v2426, 1
  %v2510 = vmul.f32 %v2426, %v2508
  %2511 = vset.pattern.permute.xlu0 3
  %2512 = vperm.xlu0 %2511, %v2307
  %v2513 = vpop.permute.xlu0 %2512
  %2515 = vset.pattern.permute.xlu0 3
  %2516 = vperm.xlu0 %2515, %v2308
  %v2517 = vpop.permute.xlu0 %2516
  %2519 = vset.pattern.permute.xlu0 3
  %2520 = vperm.xlu0 %2519, %v2309
  %v2521 = vpop.permute.xlu0 %2520
  %2523 = vset.pattern.permute.xlu0 3
  %2524 = vperm.xlu0 %2523, %v2310
  %v2525 = vpop.permute.xlu0 %2524
  %2527 = vset.pattern.permute.xlu0 3
  %2528 = vperm.xlu0 %2527, %v2311
  %v2529 = vpop.permute.xlu0 %2528
  %2531 = vset.pattern.permute.xlu0 3
  %2532 = vperm.xlu0 %2531, %v2312
  %v2533 = vpop.permute.xlu0 %2532
  %2535 = vset.pattern.permute.xlu0 3
  %2536 = vperm.xlu0 %2535, %v2313
  %v2537 = vpop.permute.xlu0 %2536
  %2539 = vset.pattern.permute.xlu0 3
  %2540 = vperm.xlu0 %2539, %v2314
  %v2541 = vpop.permute.xlu0 %2540
  %2543 = vset.pattern.permute.xlu0 3
  %2544 = vperm.xlu0 %2543, %v2315
  %v2545 = vpop.permute.xlu0 %2544
  %2547 = vset.pattern.permute.xlu0 3
  %2548 = vperm.xlu0 %2547, %v2316
  %v2549 = vpop.permute.xlu0 %2548
  %2551 = vset.pattern.permute.xlu0 3
  %2552 = vperm.xlu0 %2551, %v2317
  %v2553 = vpop.permute.xlu0 %2552
  %2555 = vset.pattern.permute.xlu0 3
  %2556 = vperm.xlu0 %2555, %v2318
  %v2557 = vpop.permute.xlu0 %2556
  %2559 = vset.pattern.permute.xlu0 3
  %2560 = vperm.xlu0 %2559, %v2319
  %v2561 = vpop.permute.xlu0 %2560
  %2563 = vset.pattern.permute.xlu0 3
  %2564 = vperm.xlu0 %2563, %v2320
  %v2565 = vpop.permute.xlu0 %2564
  %2567 = vset.pattern.permute.xlu0 3
  %2568 = vperm.xlu0 %2567, %v2321
  %v2569 = vpop.permute.xlu0 %2568
  %2571 = vset.pattern.permute.xlu0 3
  %2572 = vperm.xlu0 %2571, %v2322
  %v2573 = vpop.permute.xlu0 %2572
  %v2575 = vperm.slane %v2324, 2
  %v2576 = vmin.f32 %v2513, %v2575
  %v2577 = vmin.f32 %v2517, %v2575
  %v2578 = vmin.f32 %v2521, %v2575
  %v2579 = vmin.f32 %v2525, %v2575
  %v2580 = vmin.f32 %v2529, %v2575
  %v2581 = vmin.f32 %v2533, %v2575
  %v2582 = vmin.f32 %v2537, %v2575
  %v2583 = vmin.f32 %v2541, %v2575
  %v2584 = vmin.f32 %v2545, %v2575
  %v2585 = vmin.f32 %v2549, %v2575
  %v2586 = vmin.f32 %v2553, %v2575
  %v2587 = vmin.f32 %v2557, %v2575
  %v2588 = vmin.f32 %v2561, %v2575
  %v2589 = vmin.f32 %v2565, %v2575
  %v2590 = vmin.f32 %v2569, %v2575
  %v2591 = vmin.f32 %v2573, %v2575
  %2592 = vset.pattern.permute.xlu0 1
  %2593 = vperm.xlu0 %2592, %v2307
  %v2594 = vpop.permute.xlu0 %2593
  %2596 = vset.pattern.permute.xlu0 1
  %2597 = vperm.xlu0 %2596, %v2308
  %v2598 = vpop.permute.xlu0 %2597
  %2600 = vset.pattern.permute.xlu0 1
  %2601 = vperm.xlu0 %2600, %v2309
  %v2602 = vpop.permute.xlu0 %2601
  %2604 = vset.pattern.permute.xlu0 1
  %2605 = vperm.xlu0 %2604, %v2310
  %v2606 = vpop.permute.xlu0 %2605
  %2608 = vset.pattern.permute.xlu0 1
  %2609 = vperm.xlu0 %2608, %v2311
  %v2610 = vpop.permute.xlu0 %2609
  %2612 = vset.pattern.permute.xlu0 1
  %2613 = vperm.xlu0 %2612, %v2312
  %v2614 = vpop.permute.xlu0 %2613
  %2616 = vset.pattern.permute.xlu0 1
  %2617 = vperm.xlu0 %2616, %v2313
  %v2618 = vpop.permute.xlu0 %2617
  %2620 = vset.pattern.permute.xlu0 1
  %2621 = vperm.xlu0 %2620, %v2314
  %v2622 = vpop.permute.xlu0 %2621
  %2624 = vset.pattern.permute.xlu0 1
  %2625 = vperm.xlu0 %2624, %v2315
  %v2626 = vpop.permute.xlu0 %2625
  %2628 = vset.pattern.permute.xlu0 1
  %2629 = vperm.xlu0 %2628, %v2316
  %v2630 = vpop.permute.xlu0 %2629
  %2632 = vset.pattern.permute.xlu0 1
  %2633 = vperm.xlu0 %2632, %v2317
  %v2634 = vpop.permute.xlu0 %2633
  %2636 = vset.pattern.permute.xlu0 1
  %2637 = vperm.xlu0 %2636, %v2318
  %v2638 = vpop.permute.xlu0 %2637
  %2640 = vset.pattern.permute.xlu0 1
  %2641 = vperm.xlu0 %2640, %v2319
  %v2642 = vpop.permute.xlu0 %2641
  %2644 = vset.pattern.permute.xlu0 1
  %2645 = vperm.xlu0 %2644, %v2320
  %v2646 = vpop.permute.xlu0 %2645
  %2648 = vset.pattern.permute.xlu0 1
  %2649 = vperm.xlu0 %2648, %v2321
  %v2650 = vpop.permute.xlu0 %2649
  %2652 = vset.pattern.permute.xlu0 1
  %2653 = vperm.xlu0 %2652, %v2322
  %v2654 = vpop.permute.xlu0 %2653
  %v2656 = vperm.slane %v2324, 0
  %v2657 = vmax.f32 %v2594, %v2656
  %v2658 = vmax.f32 %v2598, %v2656
  %v2659 = vmax.f32 %v2602, %v2656
  %v2660 = vmax.f32 %v2606, %v2656
  %v2661 = vmax.f32 %v2610, %v2656
  %v2662 = vmax.f32 %v2614, %v2656
  %v2663 = vmax.f32 %v2618, %v2656
  %v2664 = vmax.f32 %v2622, %v2656
  %v2665 = vmax.f32 %v2626, %v2656
  %v2666 = vmax.f32 %v2630, %v2656
  %v2667 = vmax.f32 %v2634, %v2656
  %v2668 = vmax.f32 %v2638, %v2656
  %v2669 = vmax.f32 %v2642, %v2656
  %v2670 = vmax.f32 %v2646, %v2656
  %v2671 = vmax.f32 %v2650, %v2656
  %v2672 = vmax.f32 %v2654, %v2656
  %v2673 = vsub.f32 %v2576, %v2657
  %v2674 = vsub.f32 %v2577, %v2658
  %v2675 = vsub.f32 %v2578, %v2659
  %v2676 = vsub.f32 %v2579, %v2660
  %v2677 = vsub.f32 %v2580, %v2661
  %v2678 = vsub.f32 %v2581, %v2662
  %v2679 = vsub.f32 %v2582, %v2663
  %v2680 = vsub.f32 %v2583, %v2664
  %v2681 = vsub.f32 %v2584, %v2665
  %v2682 = vsub.f32 %v2585, %v2666
  %v2683 = vsub.f32 %v2586, %v2667
  %v2684 = vsub.f32 %v2587, %v2668
  %v2685 = vsub.f32 %v2588, %v2669
  %v2686 = vsub.f32 %v2589, %v2670
  %v2687 = vsub.f32 %v2590, %v2671
  %v2688 = vsub.f32 %v2591, %v2672
  %v2689 = vadd.f32 %v2673, 1.0
  %v2690 = vadd.f32 %v2674, 1.0
  %v2691 = vadd.f32 %v2675, 1.0
  %v2692 = vadd.f32 %v2676, 1.0
  %v2693 = vadd.f32 %v2677, 1.0
  %v2694 = vadd.f32 %v2678, 1.0
  %v2695 = vadd.f32 %v2679, 1.0
  %v2696 = vadd.f32 %v2680, 1.0
  %v2697 = vadd.f32 %v2681, 1.0
  %v2698 = vadd.f32 %v2682, 1.0
  %v2699 = vadd.f32 %v2683, 1.0
  %v2700 = vadd.f32 %v2684, 1.0
  %v2701 = vadd.f32 %v2685, 1.0
  %v2702 = vadd.f32 %v2686, 1.0
  %v2703 = vadd.f32 %v2687, 1.0
  %v2704 = vadd.f32 %v2688, 1.0
  %v2705 = vmax.f32 %v2689, 0.0
  %v2706 = vmax.f32 %v2690, 0.0
  %v2707 = vmax.f32 %v2691, 0.0
  %v2708 = vmax.f32 %v2692, 0.0
  %v2709 = vmax.f32 %v2693, 0.0
  %v2710 = vmax.f32 %v2694, 0.0
  %v2711 = vmax.f32 %v2695, 0.0
  %v2712 = vmax.f32 %v2696, 0.0
  %v2713 = vmax.f32 %v2697, 0.0
  %v2714 = vmax.f32 %v2698, 0.0
  %v2715 = vmax.f32 %v2699, 0.0
  %v2716 = vmax.f32 %v2700, 0.0
  %v2717 = vmax.f32 %v2701, 0.0
  %v2718 = vmax.f32 %v2702, 0.0
  %v2719 = vmax.f32 %v2703, 0.0
  %v2720 = vmax.f32 %v2704, 0.0
  %2721 = vset.pattern.permute.xlu0 4
  %2722 = vperm.xlu0 %2721, %v2307
  %v2723 = vpop.permute.xlu0 %2722
  %2725 = vset.pattern.permute.xlu0 4
  %2726 = vperm.xlu0 %2725, %v2308
  %v2727 = vpop.permute.xlu0 %2726
  %2729 = vset.pattern.permute.xlu0 4
  %2730 = vperm.xlu0 %2729, %v2309
  %v2731 = vpop.permute.xlu0 %2730
  %2733 = vset.pattern.permute.xlu0 4
  %2734 = vperm.xlu0 %2733, %v2310
  %v2735 = vpop.permute.xlu0 %2734
  %2737 = vset.pattern.permute.xlu0 4
  %2738 = vperm.xlu0 %2737, %v2311
  %v2739 = vpop.permute.xlu0 %2738
  %2741 = vset.pattern.permute.xlu0 4
  %2742 = vperm.xlu0 %2741, %v2312
  %v2743 = vpop.permute.xlu0 %2742
  %2745 = vset.pattern.permute.xlu0 4
  %2746 = vperm.xlu0 %2745, %v2313
  %v2747 = vpop.permute.xlu0 %2746
  %2749 = vset.pattern.permute.xlu0 4
  %2750 = vperm.xlu0 %2749, %v2314
  %v2751 = vpop.permute.xlu0 %2750
  %2753 = vset.pattern.permute.xlu0 4
  %2754 = vperm.xlu0 %2753, %v2315
  %v2755 = vpop.permute.xlu0 %2754
  %2757 = vset.pattern.permute.xlu0 4
  %2758 = vperm.xlu0 %2757, %v2316
  %v2759 = vpop.permute.xlu0 %2758
  %2761 = vset.pattern.permute.xlu0 4
  %2762 = vperm.xlu0 %2761, %v2317
  %v2763 = vpop.permute.xlu0 %2762
  %2765 = vset.pattern.permute.xlu0 4
  %2766 = vperm.xlu0 %2765, %v2318
  %v2767 = vpop.permute.xlu0 %2766
  %2769 = vset.pattern.permute.xlu0 4
  %2770 = vperm.xlu0 %2769, %v2319
  %v2771 = vpop.permute.xlu0 %2770
  %2773 = vset.pattern.permute.xlu0 4
  %2774 = vperm.xlu0 %2773, %v2320
  %v2775 = vpop.permute.xlu0 %2774
  %2777 = vset.pattern.permute.xlu0 4
  %2778 = vperm.xlu0 %2777, %v2321
  %v2779 = vpop.permute.xlu0 %2778
  %2781 = vset.pattern.permute.xlu0 4
  %2782 = vperm.xlu0 %2781, %v2322
  %v2783 = vpop.permute.xlu0 %2782
  %v2785 = vperm.slane %v2324, 3
  %v2786 = vmin.f32 %v2723, %v2785
  %v2787 = vmin.f32 %v2727, %v2785
  %v2788 = vmin.f32 %v2731, %v2785
  %v2789 = vmin.f32 %v2735, %v2785
  %v2790 = vmin.f32 %v2739, %v2785
  %v2791 = vmin.f32 %v2743, %v2785
  %v2792 = vmin.f32 %v2747, %v2785
  %v2793 = vmin.f32 %v2751, %v2785
  %v2794 = vmin.f32 %v2755, %v2785
  %v2795 = vmin.f32 %v2759, %v2785
  %v2796 = vmin.f32 %v2763, %v2785
  %v2797 = vmin.f32 %v2767, %v2785
  %v2798 = vmin.f32 %v2771, %v2785
  %v2799 = vmin.f32 %v2775, %v2785
  %v2800 = vmin.f32 %v2779, %v2785
  %v2801 = vmin.f32 %v2783, %v2785
  %2802 = vset.pattern.permute.xlu0 2
  %2803 = vperm.xlu0 %2802, %v2307
  %v2804 = vpop.permute.xlu0 %2803
  %2806 = vset.pattern.permute.xlu0 2
  %2807 = vperm.xlu0 %2806, %v2308
  %v2808 = vpop.permute.xlu0 %2807
  %2810 = vset.pattern.permute.xlu0 2
  %2811 = vperm.xlu0 %2810, %v2309
  %v2812 = vpop.permute.xlu0 %2811
  %2814 = vset.pattern.permute.xlu0 2
  %2815 = vperm.xlu0 %2814, %v2310
  %v2816 = vpop.permute.xlu0 %2815
  %2818 = vset.pattern.permute.xlu0 2
  %2819 = vperm.xlu0 %2818, %v2311
  %v2820 = vpop.permute.xlu0 %2819
  %2822 = vset.pattern.permute.xlu0 2
  %2823 = vperm.xlu0 %2822, %v2312
  %v2824 = vpop.permute.xlu0 %2823
  %2826 = vset.pattern.permute.xlu0 2
  %2827 = vperm.xlu0 %2826, %v2313
  %v2828 = vpop.permute.xlu0 %2827
  %2830 = vset.pattern.permute.xlu0 2
  %2831 = vperm.xlu0 %2830, %v2314
  %v2832 = vpop.permute.xlu0 %2831
  %2834 = vset.pattern.permute.xlu0 2
  %2835 = vperm.xlu0 %2834, %v2315
  %v2836 = vpop.permute.xlu0 %2835
  %2838 = vset.pattern.permute.xlu0 2
  %2839 = vperm.xlu0 %2838, %v2316
  %v2840 = vpop.permute.xlu0 %2839
  %2842 = vset.pattern.permute.xlu0 2
  %2843 = vperm.xlu0 %2842, %v2317
  %v2844 = vpop.permute.xlu0 %2843
  %2846 = vset.pattern.permute.xlu0 2
  %2847 = vperm.xlu0 %2846, %v2318
  %v2848 = vpop.permute.xlu0 %2847
  %2850 = vset.pattern.permute.xlu0 2
  %2851 = vperm.xlu0 %2850, %v2319
  %v2852 = vpop.permute.xlu0 %2851
  %2854 = vset.pattern.permute.xlu0 2
  %2855 = vperm.xlu0 %2854, %v2320
  %v2856 = vpop.permute.xlu0 %2855
  %2858 = vset.pattern.permute.xlu0 2
  %2859 = vperm.xlu0 %2858, %v2321
  %v2860 = vpop.permute.xlu0 %2859
  %2862 = vset.pattern.permute.xlu0 2
  %2863 = vperm.xlu0 %2862, %v2322
  %v2864 = vpop.permute.xlu0 %2863
  %v2866 = vperm.slane %v2324, 1
  %v2867 = vmax.f32 %v2804, %v2866
  %v2868 = vmax.f32 %v2808, %v2866
  %v2869 = vmax.f32 %v2812, %v2866
  %v2870 = vmax.f32 %v2816, %v2866
  %v2871 = vmax.f32 %v2820, %v2866
  %v2872 = vmax.f32 %v2824, %v2866
  %v2873 = vmax.f32 %v2828, %v2866
  %v2874 = vmax.f32 %v2832, %v2866
  %v2875 = vmax.f32 %v2836, %v2866
  %v2876 = vmax.f32 %v2840, %v2866
  %v2877 = vmax.f32 %v2844, %v2866
  %v2878 = vmax.f32 %v2848, %v2866
  %v2879 = vmax.f32 %v2852, %v2866
  %v2880 = vmax.f32 %v2856, %v2866
  %v2881 = vmax.f32 %v2860, %v2866
  %v2882 = vmax.f32 %v2864, %v2866
  %v2883 = vsub.f32 %v2786, %v2867
  %v2884 = vsub.f32 %v2787, %v2868
  %v2885 = vsub.f32 %v2788, %v2869
  %v2886 = vsub.f32 %v2789, %v2870
  %v2887 = vsub.f32 %v2790, %v2871
  %v2888 = vsub.f32 %v2791, %v2872
  %v2889 = vsub.f32 %v2792, %v2873
  %v2890 = vsub.f32 %v2793, %v2874
  %v2891 = vsub.f32 %v2794, %v2875
  %v2892 = vsub.f32 %v2795, %v2876
  %v2893 = vsub.f32 %v2796, %v2877
  %v2894 = vsub.f32 %v2797, %v2878
  %v2895 = vsub.f32 %v2798, %v2879
  %v2896 = vsub.f32 %v2799, %v2880
  %v2897 = vsub.f32 %v2800, %v2881
  %v2898 = vsub.f32 %v2801, %v2882
  %v2899 = vadd.f32 %v2883, 1.0
  %v2900 = vadd.f32 %v2884, 1.0
  %v2901 = vadd.f32 %v2885, 1.0
  %v2902 = vadd.f32 %v2886, 1.0
  %v2903 = vadd.f32 %v2887, 1.0
  %v2904 = vadd.f32 %v2888, 1.0
  %v2905 = vadd.f32 %v2889, 1.0
  %v2906 = vadd.f32 %v2890, 1.0
  %v2907 = vadd.f32 %v2891, 1.0
  %v2908 = vadd.f32 %v2892, 1.0
  %v2909 = vadd.f32 %v2893, 1.0
  %v2910 = vadd.f32 %v2894, 1.0
  %v2911 = vadd.f32 %v2895, 1.0
  %v2912 = vadd.f32 %v2896, 1.0
  %v2913 = vadd.f32 %v2897, 1.0
  %v2914 = vadd.f32 %v2898, 1.0
  %v2915 = vmax.f32 %v2899, 0.0
  %v2916 = vmax.f32 %v2900, 0.0
  %v2917 = vmax.f32 %v2901, 0.0
  %v2918 = vmax.f32 %v2902, 0.0
  %v2919 = vmax.f32 %v2903, 0.0
  %v2920 = vmax.f32 %v2904, 0.0
  %v2921 = vmax.f32 %v2905, 0.0
  %v2922 = vmax.f32 %v2906, 0.0
  %v2923 = vmax.f32 %v2907, 0.0
  %v2924 = vmax.f32 %v2908, 0.0
  %v2925 = vmax.f32 %v2909, 0.0
  %v2926 = vmax.f32 %v2910, 0.0
  %v2927 = vmax.f32 %v2911, 0.0
  %v2928 = vmax.f32 %v2912, 0.0
  %v2929 = vmax.f32 %v2913, 0.0
  %v2930 = vmax.f32 %v2914, 0.0
  %v2931 = vmul.f32 %v2705, %v2915
  %v2932 = vmul.f32 %v2706, %v2916
  %v2933 = vmul.f32 %v2707, %v2917
  %v2934 = vmul.f32 %v2708, %v2918
  %v2935 = vmul.f32 %v2709, %v2919
  %v2936 = vmul.f32 %v2710, %v2920
  %v2937 = vmul.f32 %v2711, %v2921
  %v2938 = vmul.f32 %v2712, %v2922
  %v2939 = vmul.f32 %v2713, %v2923
  %v2940 = vmul.f32 %v2714, %v2924
  %v2941 = vmul.f32 %v2715, %v2925
  %v2942 = vmul.f32 %v2716, %v2926
  %v2943 = vmul.f32 %v2717, %v2927
  %v2944 = vmul.f32 %v2718, %v2928
  %v2945 = vmul.f32 %v2719, %v2929
  %v2946 = vmul.f32 %v2720, %v2930
  %2948 = vset.pattern.permute.xlu0 3
  %2949 = vperm.xlu0 %2948, %v2491
  %v2950 = vpop.permute.xlu0 %2949
  %2953 = vset.pattern.permute.xlu0 3
  %2954 = vperm.xlu0 %2953, %v2492
  %v2955 = vpop.permute.xlu0 %2954
  %2958 = vset.pattern.permute.xlu0 3
  %2959 = vperm.xlu0 %2958, %v2493
  %v2960 = vpop.permute.xlu0 %2959
  %2963 = vset.pattern.permute.xlu0 3
  %2964 = vperm.xlu0 %2963, %v2494
  %v2965 = vpop.permute.xlu0 %2964
  %2968 = vset.pattern.permute.xlu0 3
  %2969 = vperm.xlu0 %2968, %v2495
  %v2970 = vpop.permute.xlu0 %2969
  %2973 = vset.pattern.permute.xlu0 3
  %2974 = vperm.xlu0 %2973, %v2496
  %v2975 = vpop.permute.xlu0 %2974
  %2978 = vset.pattern.permute.xlu0 3
  %2979 = vperm.xlu0 %2978, %v2497
  %v2980 = vpop.permute.xlu0 %2979
  %2983 = vset.pattern.permute.xlu0 3
  %2984 = vperm.xlu0 %2983, %v2498
  %v2985 = vpop.permute.xlu0 %2984
  %2988 = vset.pattern.permute.xlu0 3
  %2989 = vperm.xlu0 %2988, %v2499
  %v2990 = vpop.permute.xlu0 %2989
  %2993 = vset.pattern.permute.xlu0 3
  %2994 = vperm.xlu0 %2993, %v2500
  %v2995 = vpop.permute.xlu0 %2994
  %2998 = vset.pattern.permute.xlu0 3
  %2999 = vperm.xlu0 %2998, %v2501
  %v3000 = vpop.permute.xlu0 %2999
  %3003 = vset.pattern.permute.xlu0 3
  %3004 = vperm.xlu0 %3003, %v2502
  %v3005 = vpop.permute.xlu0 %3004
  %3008 = vset.pattern.permute.xlu0 3
  %3009 = vperm.xlu0 %3008, %v2503
  %v3010 = vpop.permute.xlu0 %3009
  %3013 = vset.pattern.permute.xlu0 3
  %3014 = vperm.xlu0 %3013, %v2504
  %v3015 = vpop.permute.xlu0 %3014
  %3018 = vset.pattern.permute.xlu0 3
  %3019 = vperm.xlu0 %3018, %v2505
  %v3020 = vpop.permute.xlu0 %3019
  %3023 = vset.pattern.permute.xlu0 3
  %3024 = vperm.xlu0 %3023, %v2506
  %v3025 = vpop.permute.xlu0 %3024
  %v3027 = vperm.slane %v2510, 2
  %v3028 = vadd.f32 %v2950, %v3027
  %v3029 = vadd.f32 %v2955, %v3027
  %v3030 = vadd.f32 %v2960, %v3027
  %v3031 = vadd.f32 %v2965, %v3027
  %v3032 = vadd.f32 %v2970, %v3027
  %v3033 = vadd.f32 %v2975, %v3027
  %v3034 = vadd.f32 %v2980, %v3027
  %v3035 = vadd.f32 %v2985, %v3027
  %v3036 = vadd.f32 %v2990, %v3027
  %v3037 = vadd.f32 %v2995, %v3027
  %v3038 = vadd.f32 %v3000, %v3027
  %v3039 = vadd.f32 %v3005, %v3027
  %v3040 = vadd.f32 %v3010, %v3027
  %v3041 = vadd.f32 %v3015, %v3027
  %v3042 = vadd.f32 %v3020, %v3027
  %v3043 = vadd.f32 %v3025, %v3027
  %v3044 = vsub.f32 %v3028, %v2931
  %v3045 = vsub.f32 %v3029, %v2932
  %v3046 = vsub.f32 %v3030, %v2933
  %v3047 = vsub.f32 %v3031, %v2934
  %v3048 = vsub.f32 %v3032, %v2935
  %v3049 = vsub.f32 %v3033, %v2936
  %v3050 = vsub.f32 %v3034, %v2937
  %v3051 = vsub.f32 %v3035, %v2938
  %v3052 = vsub.f32 %v3036, %v2939
  %v3053 = vsub.f32 %v3037, %v2940
  %v3054 = vsub.f32 %v3038, %v2941
  %v3055 = vsub.f32 %v3039, %v2942
  %v3056 = vsub.f32 %v3040, %v2943
  %v3057 = vsub.f32 %v3041, %v2944
  %v3058 = vsub.f32 %v3042, %v2945
  %v3059 = vsub.f32 %v3043, %v2946
  %vm3060 = vcmp.eq.f32.partialorder %v2406, 1.0
  %vm3061 = vcmp.eq.f32.partialorder %v2407, 1.0
  %vm3062 = vcmp.eq.f32.partialorder %v2408, 1.0
  %vm3063 = vcmp.eq.f32.partialorder %v2409, 1.0
  %vm3064 = vcmp.eq.f32.partialorder %v2410, 1.0
  %vm3065 = vcmp.eq.f32.partialorder %v2411, 1.0
  %vm3066 = vcmp.eq.f32.partialorder %v2412, 1.0
  %vm3067 = vcmp.eq.f32.partialorder %v2413, 1.0
  %vm3068 = vcmp.eq.f32.partialorder %v2414, 1.0
  %vm3069 = vcmp.eq.f32.partialorder %v2415, 1.0
  %vm3070 = vcmp.eq.f32.partialorder %v2416, 1.0
  %vm3071 = vcmp.eq.f32.partialorder %v2417, 1.0
  %vm3072 = vcmp.eq.f32.partialorder %v2418, 1.0
  %vm3073 = vcmp.eq.f32.partialorder %v2419, 1.0
  %vm3074 = vcmp.eq.f32.partialorder %v2420, 1.0
  %vm3075 = vcmp.eq.f32.partialorder %v2421, 1.0
  %v3076 = vsel %vm3060, 1, 0
  %v3077 = vsel %vm3061, 1, 0
  %v3078 = vsel %vm3062, 1, 0
  %v3079 = vsel %vm3063, 1, 0
  %v3080 = vsel %vm3064, 1, 0
  %v3081 = vsel %vm3065, 1, 0
  %v3082 = vsel %vm3066, 1, 0
  %v3083 = vsel %vm3067, 1, 0
  %v3084 = vsel %vm3068, 1, 0
  %v3085 = vsel %vm3069, 1, 0
  %v3086 = vsel %vm3070, 1, 0
  %v3087 = vsel %vm3071, 1, 0
  %v3088 = vsel %vm3072, 1, 0
  %v3089 = vsel %vm3073, 1, 0
  %v3090 = vsel %vm3074, 1, 0
  %v3091 = vsel %vm3075, 1, 0
  %3092 = vrot.lane.b32.xlu0 %v3076, 127
  %v3093 = vpop.permute.xlu0 %3092
  %3094 = vrot.lane.b32.xlu0 %v3077, 127
  %v3095 = vpop.permute.xlu0 %3094
  %3096 = vrot.lane.b32.xlu0 %v3078, 127
  %v3097 = vpop.permute.xlu0 %3096
  %3098 = vrot.lane.b32.xlu0 %v3079, 127
  %v3099 = vpop.permute.xlu0 %3098
  %3100 = vrot.lane.b32.xlu0 %v3080, 127
  %v3101 = vpop.permute.xlu0 %3100
  %3102 = vrot.lane.b32.xlu0 %v3081, 127
  %v3103 = vpop.permute.xlu0 %3102
  %3104 = vrot.lane.b32.xlu0 %v3082, 127
  %v3105 = vpop.permute.xlu0 %3104
  %3106 = vrot.lane.b32.xlu0 %v3083, 127
  %v3107 = vpop.permute.xlu0 %3106
  %3108 = vrot.lane.b32.xlu0 %v3084, 127
  %v3109 = vpop.permute.xlu0 %3108
  %3110 = vrot.lane.b32.xlu0 %v3085, 127
  %v3111 = vpop.permute.xlu0 %3110
  %3112 = vrot.lane.b32.xlu0 %v3086, 127
  %v3113 = vpop.permute.xlu0 %3112
  %3114 = vrot.lane.b32.xlu0 %v3087, 127
  %v3115 = vpop.permute.xlu0 %3114
  %3116 = vrot.lane.b32.xlu0 %v3088, 127
  %v3117 = vpop.permute.xlu0 %3116
  %3118 = vrot.lane.b32.xlu0 %v3089, 127
  %v3119 = vpop.permute.xlu0 %3118
  %3120 = vrot.lane.b32.xlu0 %v3090, 127
  %v3121 = vpop.permute.xlu0 %3120
  %3122 = vrot.lane.b32.xlu0 %v3091, 127
  %v3123 = vpop.permute.xlu0 %3122
  %vm3124 = vcmp.ne.s32.totalorder %v3093, 0
  %vm3125 = vcmp.ne.s32.totalorder %v3095, 0
  %vm3126 = vcmp.ne.s32.totalorder %v3097, 0
  %vm3127 = vcmp.ne.s32.totalorder %v3099, 0
  %vm3128 = vcmp.ne.s32.totalorder %v3101, 0
  %vm3129 = vcmp.ne.s32.totalorder %v3103, 0
  %vm3130 = vcmp.ne.s32.totalorder %v3105, 0
  %vm3131 = vcmp.ne.s32.totalorder %v3107, 0
  %vm3132 = vcmp.ne.s32.totalorder %v3109, 0
  %vm3133 = vcmp.ne.s32.totalorder %v3111, 0
  %vm3134 = vcmp.ne.s32.totalorder %v3113, 0
  %vm3135 = vcmp.ne.s32.totalorder %v3115, 0
  %vm3136 = vcmp.ne.s32.totalorder %v3117, 0
  %vm3137 = vcmp.ne.s32.totalorder %v3119, 0
  %vm3138 = vcmp.ne.s32.totalorder %v3121, 0
  %vm3139 = vcmp.ne.s32.totalorder %v3123, 0
  %vm3140 = vmand %vm3060, %vm3124
  %vm3141 = vmand %vm3061, %vm3125
  %vm3142 = vmand %vm3062, %vm3126
  %vm3143 = vmand %vm3063, %vm3127
  %vm3144 = vmand %vm3064, %vm3128
  %vm3145 = vmand %vm3065, %vm3129
  %vm3146 = vmand %vm3066, %vm3130
  %vm3147 = vmand %vm3067, %vm3131
  %vm3148 = vmand %vm3068, %vm3132
  %vm3149 = vmand %vm3069, %vm3133
  %vm3150 = vmand %vm3070, %vm3134
  %vm3151 = vmand %vm3071, %vm3135
  %vm3152 = vmand %vm3072, %vm3136
  %vm3153 = vmand %vm3073, %vm3137
  %vm3154 = vmand %vm3074, %vm3138
  %vm3155 = vmand %vm3075, %vm3139
  %vm3156 = vcmp.eq.f32.partialorder %v2426, 1.0
  %v3157 = vsel %vm3156, 1, 0
  %v3158 = vrot.slane %v3157, 1
  %vm3159 = vcmp.ne.s32.totalorder %v3158, 0
  %vm3160 = vmand %vm3156, %vm3159
  %3161 = vset.pattern.permute.xlu0 7
  %3162 = vperm.xlu0 %3161, %v2307
  %v3163 = vpop.permute.xlu0 %3162
  %3165 = vset.pattern.permute.xlu0 7
  %3166 = vperm.xlu0 %3165, %v2308
  %v3167 = vpop.permute.xlu0 %3166
  %3169 = vset.pattern.permute.xlu0 7
  %3170 = vperm.xlu0 %3169, %v2309
  %v3171 = vpop.permute.xlu0 %3170
  %3173 = vset.pattern.permute.xlu0 7
  %3174 = vperm.xlu0 %3173, %v2310
  %v3175 = vpop.permute.xlu0 %3174
  %3177 = vset.pattern.permute.xlu0 7
  %3178 = vperm.xlu0 %3177, %v2311
  %v3179 = vpop.permute.xlu0 %3178
  %3181 = vset.pattern.permute.xlu0 7
  %3182 = vperm.xlu0 %3181, %v2312
  %v3183 = vpop.permute.xlu0 %3182
  %3185 = vset.pattern.permute.xlu0 7
  %3186 = vperm.xlu0 %3185, %v2313
  %v3187 = vpop.permute.xlu0 %3186
  %3189 = vset.pattern.permute.xlu0 7
  %3190 = vperm.xlu0 %3189, %v2314
  %v3191 = vpop.permute.xlu0 %3190
  %3193 = vset.pattern.permute.xlu0 7
  %3194 = vperm.xlu0 %3193, %v2315
  %v3195 = vpop.permute.xlu0 %3194
  %3197 = vset.pattern.permute.xlu0 7
  %3198 = vperm.xlu0 %3197, %v2316
  %v3199 = vpop.permute.xlu0 %3198
  %3201 = vset.pattern.permute.xlu0 7
  %3202 = vperm.xlu0 %3201, %v2317
  %v3203 = vpop.permute.xlu0 %3202
  %3205 = vset.pattern.permute.xlu0 7
  %3206 = vperm.xlu0 %3205, %v2318
  %v3207 = vpop.permute.xlu0 %3206
  %3209 = vset.pattern.permute.xlu0 7
  %3210 = vperm.xlu0 %3209, %v2319
  %v3211 = vpop.permute.xlu0 %3210
  %3213 = vset.pattern.permute.xlu0 7
  %3214 = vperm.xlu0 %3213, %v2320
  %v3215 = vpop.permute.xlu0 %3214
  %3217 = vset.pattern.permute.xlu0 7
  %3218 = vperm.xlu0 %3217, %v2321
  %v3219 = vpop.permute.xlu0 %3218
  %3221 = vset.pattern.permute.xlu0 7
  %3222 = vperm.xlu0 %3221, %v2322
  %v3223 = vpop.permute.xlu0 %3222
  %v3225 = vperm.slane %v2324, 6
  %v3226 = vmin.f32 %v3163, %v3225
  %v3227 = vmin.f32 %v3167, %v3225
  %v3228 = vmin.f32 %v3171, %v3225
  %v3229 = vmin.f32 %v3175, %v3225
  %v3230 = vmin.f32 %v3179, %v3225
  %v3231 = vmin.f32 %v3183, %v3225
  %v3232 = vmin.f32 %v3187, %v3225
  %v3233 = vmin.f32 %v3191, %v3225
  %v3234 = vmin.f32 %v3195, %v3225
  %v3235 = vmin.f32 %v3199, %v3225
  %v3236 = vmin.f32 %v3203, %v3225
  %v3237 = vmin.f32 %v3207, %v3225
  %v3238 = vmin.f32 %v3211, %v3225
  %v3239 = vmin.f32 %v3215, %v3225
  %v3240 = vmin.f32 %v3219, %v3225
  %v3241 = vmin.f32 %v3223, %v3225
  %3242 = vset.pattern.permute.xlu0 5
  %3243 = vperm.xlu0 %3242, %v2307
  %v3244 = vpop.permute.xlu0 %3243
  %3246 = vset.pattern.permute.xlu0 5
  %3247 = vperm.xlu0 %3246, %v2308
  %v3248 = vpop.permute.xlu0 %3247
  %3250 = vset.pattern.permute.xlu0 5
  %3251 = vperm.xlu0 %3250, %v2309
  %v3252 = vpop.permute.xlu0 %3251
  %3254 = vset.pattern.permute.xlu0 5
  %3255 = vperm.xlu0 %3254, %v2310
  %v3256 = vpop.permute.xlu0 %3255
  %3258 = vset.pattern.permute.xlu0 5
  %3259 = vperm.xlu0 %3258, %v2311
  %v3260 = vpop.permute.xlu0 %3259
  %3262 = vset.pattern.permute.xlu0 5
  %3263 = vperm.xlu0 %3262, %v2312
  %v3264 = vpop.permute.xlu0 %3263
  %3266 = vset.pattern.permute.xlu0 5
  %3267 = vperm.xlu0 %3266, %v2313
  %v3268 = vpop.permute.xlu0 %3267
  %3270 = vset.pattern.permute.xlu0 5
  %3271 = vperm.xlu0 %3270, %v2314
  %v3272 = vpop.permute.xlu0 %3271
  %3274 = vset.pattern.permute.xlu0 5
  %3275 = vperm.xlu0 %3274, %v2315
  %v3276 = vpop.permute.xlu0 %3275
  %3278 = vset.pattern.permute.xlu0 5
  %3279 = vperm.xlu0 %3278, %v2316
  %v3280 = vpop.permute.xlu0 %3279
  %3282 = vset.pattern.permute.xlu0 5
  %3283 = vperm.xlu0 %3282, %v2317
  %v3284 = vpop.permute.xlu0 %3283
  %3286 = vset.pattern.permute.xlu0 5
  %3287 = vperm.xlu0 %3286, %v2318
  %v3288 = vpop.permute.xlu0 %3287
  %3290 = vset.pattern.permute.xlu0 5
  %3291 = vperm.xlu0 %3290, %v2319
  %v3292 = vpop.permute.xlu0 %3291
  %3294 = vset.pattern.permute.xlu0 5
  %3295 = vperm.xlu0 %3294, %v2320
  %v3296 = vpop.permute.xlu0 %3295
  %3298 = vset.pattern.permute.xlu0 5
  %3299 = vperm.xlu0 %3298, %v2321
  %v3300 = vpop.permute.xlu0 %3299
  %3302 = vset.pattern.permute.xlu0 5
  %3303 = vperm.xlu0 %3302, %v2322
  %v3304 = vpop.permute.xlu0 %3303
  %v3306 = vperm.slane %v2324, 4
  %v3307 = vmax.f32 %v3244, %v3306
  %v3308 = vmax.f32 %v3248, %v3306
  %v3309 = vmax.f32 %v3252, %v3306
  %v3310 = vmax.f32 %v3256, %v3306
  %v3311 = vmax.f32 %v3260, %v3306
  %v3312 = vmax.f32 %v3264, %v3306
  %v3313 = vmax.f32 %v3268, %v3306
  %v3314 = vmax.f32 %v3272, %v3306
  %v3315 = vmax.f32 %v3276, %v3306
  %v3316 = vmax.f32 %v3280, %v3306
  %v3317 = vmax.f32 %v3284, %v3306
  %v3318 = vmax.f32 %v3288, %v3306
  %v3319 = vmax.f32 %v3292, %v3306
  %v3320 = vmax.f32 %v3296, %v3306
  %v3321 = vmax.f32 %v3300, %v3306
  %v3322 = vmax.f32 %v3304, %v3306
  %v3323 = vsub.f32 %v3226, %v3307
  %v3324 = vsub.f32 %v3227, %v3308
  %v3325 = vsub.f32 %v3228, %v3309
  %v3326 = vsub.f32 %v3229, %v3310
  %v3327 = vsub.f32 %v3230, %v3311
  %v3328 = vsub.f32 %v3231, %v3312
  %v3329 = vsub.f32 %v3232, %v3313
  %v3330 = vsub.f32 %v3233, %v3314
  %v3331 = vsub.f32 %v3234, %v3315
  %v3332 = vsub.f32 %v3235, %v3316
  %v3333 = vsub.f32 %v3236, %v3317
  %v3334 = vsub.f32 %v3237, %v3318
  %v3335 = vsub.f32 %v3238, %v3319
  %v3336 = vsub.f32 %v3239, %v3320
  %v3337 = vsub.f32 %v3240, %v3321
  %v3338 = vsub.f32 %v3241, %v3322
  %v3339 = vadd.f32 %v3323, 1.0
  %v3340 = vadd.f32 %v3324, 1.0
  %v3341 = vadd.f32 %v3325, 1.0
  %v3342 = vadd.f32 %v3326, 1.0
  %v3343 = vadd.f32 %v3327, 1.0
  %v3344 = vadd.f32 %v3328, 1.0
  %v3345 = vadd.f32 %v3329, 1.0
  %v3346 = vadd.f32 %v3330, 1.0
  %v3347 = vadd.f32 %v3331, 1.0
  %v3348 = vadd.f32 %v3332, 1.0
  %v3349 = vadd.f32 %v3333, 1.0
  %v3350 = vadd.f32 %v3334, 1.0
  %v3351 = vadd.f32 %v3335, 1.0
  %v3352 = vadd.f32 %v3336, 1.0
  %v3353 = vadd.f32 %v3337, 1.0
  %v3354 = vadd.f32 %v3338, 1.0
  %v3355 = vmax.f32 %v3339, 0.0
  %v3356 = vmax.f32 %v3340, 0.0
  %v3357 = vmax.f32 %v3341, 0.0
  %v3358 = vmax.f32 %v3342, 0.0
  %v3359 = vmax.f32 %v3343, 0.0
  %v3360 = vmax.f32 %v3344, 0.0
  %v3361 = vmax.f32 %v3345, 0.0
  %v3362 = vmax.f32 %v3346, 0.0
  %v3363 = vmax.f32 %v3347, 0.0
  %v3364 = vmax.f32 %v3348, 0.0
  %v3365 = vmax.f32 %v3349, 0.0
  %v3366 = vmax.f32 %v3350, 0.0
  %v3367 = vmax.f32 %v3351, 0.0
  %v3368 = vmax.f32 %v3352, 0.0
  %v3369 = vmax.f32 %v3353, 0.0
  %v3370 = vmax.f32 %v3354, 0.0
  %3371 = vset.pattern.permute.xlu0 8
  %3372 = vperm.xlu0 %3371, %v2307
  %v3373 = vpop.permute.xlu0 %3372
  %3375 = vset.pattern.permute.xlu0 8
  %3376 = vperm.xlu0 %3375, %v2308
  %v3377 = vpop.permute.xlu0 %3376
  %3379 = vset.pattern.permute.xlu0 8
  %3380 = vperm.xlu0 %3379, %v2309
  %v3381 = vpop.permute.xlu0 %3380
  %3383 = vset.pattern.permute.xlu0 8
  %3384 = vperm.xlu0 %3383, %v2310
  %v3385 = vpop.permute.xlu0 %3384
  %3387 = vset.pattern.permute.xlu0 8
  %3388 = vperm.xlu0 %3387, %v2311
  %v3389 = vpop.permute.xlu0 %3388
  %3391 = vset.pattern.permute.xlu0 8
  %3392 = vperm.xlu0 %3391, %v2312
  %v3393 = vpop.permute.xlu0 %3392
  %3395 = vset.pattern.permute.xlu0 8
  %3396 = vperm.xlu0 %3395, %v2313
  %v3397 = vpop.permute.xlu0 %3396
  %3399 = vset.pattern.permute.xlu0 8
  %3400 = vperm.xlu0 %3399, %v2314
  %v3401 = vpop.permute.xlu0 %3400
  %3403 = vset.pattern.permute.xlu0 8
  %3404 = vperm.xlu0 %3403, %v2315
  %v3405 = vpop.permute.xlu0 %3404
  %3407 = vset.pattern.permute.xlu0 8
  %3408 = vperm.xlu0 %3407, %v2316
  %v3409 = vpop.permute.xlu0 %3408
  %3411 = vset.pattern.permute.xlu0 8
  %3412 = vperm.xlu0 %3411, %v2317
  %v3413 = vpop.permute.xlu0 %3412
  %3415 = vset.pattern.permute.xlu0 8
  %3416 = vperm.xlu0 %3415, %v2318
  %v3417 = vpop.permute.xlu0 %3416
  %3419 = vset.pattern.permute.xlu0 8
  %3420 = vperm.xlu0 %3419, %v2319
  %v3421 = vpop.permute.xlu0 %3420
  %3423 = vset.pattern.permute.xlu0 8
  %3424 = vperm.xlu0 %3423, %v2320
  %v3425 = vpop.permute.xlu0 %3424
  %3427 = vset.pattern.permute.xlu0 8
  %3428 = vperm.xlu0 %3427, %v2321
  %v3429 = vpop.permute.xlu0 %3428
  %3431 = vset.pattern.permute.xlu0 8
  %3432 = vperm.xlu0 %3431, %v2322
  %v3433 = vpop.permute.xlu0 %3432
  %v3435 = vperm.slane %v2324, 7
  %v3436 = vmin.f32 %v3373, %v3435
  %v3437 = vmin.f32 %v3377, %v3435
  %v3438 = vmin.f32 %v3381, %v3435
  %v3439 = vmin.f32 %v3385, %v3435
  %v3440 = vmin.f32 %v3389, %v3435
  %v3441 = vmin.f32 %v3393, %v3435
  %v3442 = vmin.f32 %v3397, %v3435
  %v3443 = vmin.f32 %v3401, %v3435
  %v3444 = vmin.f32 %v3405, %v3435
  %v3445 = vmin.f32 %v3409, %v3435
  %v3446 = vmin.f32 %v3413, %v3435
  %v3447 = vmin.f32 %v3417, %v3435
  %v3448 = vmin.f32 %v3421, %v3435
  %v3449 = vmin.f32 %v3425, %v3435
  %v3450 = vmin.f32 %v3429, %v3435
  %v3451 = vmin.f32 %v3433, %v3435
  %3452 = vset.pattern.permute.xlu0 6
  %3453 = vperm.xlu0 %3452, %v2307
  %v3454 = vpop.permute.xlu0 %3453
  %3456 = vset.pattern.permute.xlu0 6
  %3457 = vperm.xlu0 %3456, %v2308
  %v3458 = vpop.permute.xlu0 %3457
  %3460 = vset.pattern.permute.xlu0 6
  %3461 = vperm.xlu0 %3460, %v2309
  %v3462 = vpop.permute.xlu0 %3461
  %3464 = vset.pattern.permute.xlu0 6
  %3465 = vperm.xlu0 %3464, %v2310
  %v3466 = vpop.permute.xlu0 %3465
  %3468 = vset.pattern.permute.xlu0 6
  %3469 = vperm.xlu0 %3468, %v2311
  %v3470 = vpop.permute.xlu0 %3469
  %3472 = vset.pattern.permute.xlu0 6
  %3473 = vperm.xlu0 %3472, %v2312
  %v3474 = vpop.permute.xlu0 %3473
  %3476 = vset.pattern.permute.xlu0 6
  %3477 = vperm.xlu0 %3476, %v2313
  %v3478 = vpop.permute.xlu0 %3477
  %3480 = vset.pattern.permute.xlu0 6
  %3481 = vperm.xlu0 %3480, %v2314
  %v3482 = vpop.permute.xlu0 %3481
  %3484 = vset.pattern.permute.xlu0 6
  %3485 = vperm.xlu0 %3484, %v2315
  %v3486 = vpop.permute.xlu0 %3485
  %3488 = vset.pattern.permute.xlu0 6
  %3489 = vperm.xlu0 %3488, %v2316
  %v3490 = vpop.permute.xlu0 %3489
  %3492 = vset.pattern.permute.xlu0 6
  %3493 = vperm.xlu0 %3492, %v2317
  %v3494 = vpop.permute.xlu0 %3493
  %3496 = vset.pattern.permute.xlu0 6
  %3497 = vperm.xlu0 %3496, %v2318
  %v3498 = vpop.permute.xlu0 %3497
  %3500 = vset.pattern.permute.xlu0 6
  %3501 = vperm.xlu0 %3500, %v2319
  %v3502 = vpop.permute.xlu0 %3501
  %3504 = vset.pattern.permute.xlu0 6
  %3505 = vperm.xlu0 %3504, %v2320
  %v3506 = vpop.permute.xlu0 %3505
  %3508 = vset.pattern.permute.xlu0 6
  %3509 = vperm.xlu0 %3508, %v2321
  %v3510 = vpop.permute.xlu0 %3509
  %3512 = vset.pattern.permute.xlu0 6
  %3513 = vperm.xlu0 %3512, %v2322
  %v3514 = vpop.permute.xlu0 %3513
  %v3516 = vperm.slane %v2324, 5
  %v3517 = vmax.f32 %v3454, %v3516
  %v3518 = vmax.f32 %v3458, %v3516
  %v3519 = vmax.f32 %v3462, %v3516
  %v3520 = vmax.f32 %v3466, %v3516
  %v3521 = vmax.f32 %v3470, %v3516
  %v3522 = vmax.f32 %v3474, %v3516
  %v3523 = vmax.f32 %v3478, %v3516
  %v3524 = vmax.f32 %v3482, %v3516
  %v3525 = vmax.f32 %v3486, %v3516
  %v3526 = vmax.f32 %v3490, %v3516
  %v3527 = vmax.f32 %v3494, %v3516
  %v3528 = vmax.f32 %v3498, %v3516
  %v3529 = vmax.f32 %v3502, %v3516
  %v3530 = vmax.f32 %v3506, %v3516
  %v3531 = vmax.f32 %v3510, %v3516
  %v3532 = vmax.f32 %v3514, %v3516
  %v3533 = vsub.f32 %v3436, %v3517
  %v3534 = vsub.f32 %v3437, %v3518
  %v3535 = vsub.f32 %v3438, %v3519
  %v3536 = vsub.f32 %v3439, %v3520
  %v3537 = vsub.f32 %v3440, %v3521
  %v3538 = vsub.f32 %v3441, %v3522
  %v3539 = vsub.f32 %v3442, %v3523
  %v3540 = vsub.f32 %v3443, %v3524
  %v3541 = vsub.f32 %v3444, %v3525
  %v3542 = vsub.f32 %v3445, %v3526
  %v3543 = vsub.f32 %v3446, %v3527
  %v3544 = vsub.f32 %v3447, %v3528
  %v3545 = vsub.f32 %v3448, %v3529
  %v3546 = vsub.f32 %v3449, %v3530
  %v3547 = vsub.f32 %v3450, %v3531
  %v3548 = vsub.f32 %v3451, %v3532
  %v3549 = vadd.f32 %v3533, 1.0
  %v3550 = vadd.f32 %v3534, 1.0
  %v3551 = vadd.f32 %v3535, 1.0
  %v3552 = vadd.f32 %v3536, 1.0
  %v3553 = vadd.f32 %v3537, 1.0
  %v3554 = vadd.f32 %v3538, 1.0
  %v3555 = vadd.f32 %v3539, 1.0
  %v3556 = vadd.f32 %v3540, 1.0
  %v3557 = vadd.f32 %v3541, 1.0
  %v3558 = vadd.f32 %v3542, 1.0
  %v3559 = vadd.f32 %v3543, 1.0
  %v3560 = vadd.f32 %v3544, 1.0
  %v3561 = vadd.f32 %v3545, 1.0
  %v3562 = vadd.f32 %v3546, 1.0
  %v3563 = vadd.f32 %v3547, 1.0
  %v3564 = vadd.f32 %v3548, 1.0
  %v3565 = vmax.f32 %v3549, 0.0
  %v3566 = vmax.f32 %v3550, 0.0
  %v3567 = vmax.f32 %v3551, 0.0
  %v3568 = vmax.f32 %v3552, 0.0
  %v3569 = vmax.f32 %v3553, 0.0
  %v3570 = vmax.f32 %v3554, 0.0
  %v3571 = vmax.f32 %v3555, 0.0
  %v3572 = vmax.f32 %v3556, 0.0
  %v3573 = vmax.f32 %v3557, 0.0
  %v3574 = vmax.f32 %v3558, 0.0
  %v3575 = vmax.f32 %v3559, 0.0
  %v3576 = vmax.f32 %v3560, 0.0
  %v3577 = vmax.f32 %v3561, 0.0
  %v3578 = vmax.f32 %v3562, 0.0
  %v3579 = vmax.f32 %v3563, 0.0
  %v3580 = vmax.f32 %v3564, 0.0
  %v3581 = vmul.f32 %v3355, %v3565
  %v3582 = vmul.f32 %v3356, %v3566
  %v3583 = vmul.f32 %v3357, %v3567
  %v3584 = vmul.f32 %v3358, %v3568
  %v3585 = vmul.f32 %v3359, %v3569
  %v3586 = vmul.f32 %v3360, %v3570
  %v3587 = vmul.f32 %v3361, %v3571
  %v3588 = vmul.f32 %v3362, %v3572
  %v3589 = vmul.f32 %v3363, %v3573
  %v3590 = vmul.f32 %v3364, %v3574
  %v3591 = vmul.f32 %v3365, %v3575
  %v3592 = vmul.f32 %v3366, %v3576
  %v3593 = vmul.f32 %v3367, %v3577
  %v3594 = vmul.f32 %v3368, %v3578
  %v3595 = vmul.f32 %v3369, %v3579
  %v3596 = vmul.f32 %v3370, %v3580
  %3597 = vset.pattern.permute.xlu0 7
  %3598 = vperm.xlu0 %3597, %v2491
  %v3599 = vpop.permute.xlu0 %3598
  %3601 = vset.pattern.permute.xlu0 7
  %3602 = vperm.xlu0 %3601, %v2492
  %v3603 = vpop.permute.xlu0 %3602
  %3605 = vset.pattern.permute.xlu0 7
  %3606 = vperm.xlu0 %3605, %v2493
  %v3607 = vpop.permute.xlu0 %3606
  %3609 = vset.pattern.permute.xlu0 7
  %3610 = vperm.xlu0 %3609, %v2494
  %v3611 = vpop.permute.xlu0 %3610
  %3613 = vset.pattern.permute.xlu0 7
  %3614 = vperm.xlu0 %3613, %v2495
  %v3615 = vpop.permute.xlu0 %3614
  %3617 = vset.pattern.permute.xlu0 7
  %3618 = vperm.xlu0 %3617, %v2496
  %v3619 = vpop.permute.xlu0 %3618
  %3621 = vset.pattern.permute.xlu0 7
  %3622 = vperm.xlu0 %3621, %v2497
  %v3623 = vpop.permute.xlu0 %3622
  %3625 = vset.pattern.permute.xlu0 7
  %3626 = vperm.xlu0 %3625, %v2498
  %v3627 = vpop.permute.xlu0 %3626
  %3629 = vset.pattern.permute.xlu0 7
  %3630 = vperm.xlu0 %3629, %v2499
  %v3631 = vpop.permute.xlu0 %3630
  %3633 = vset.pattern.permute.xlu0 7
  %3634 = vperm.xlu0 %3633, %v2500
  %v3635 = vpop.permute.xlu0 %3634
  %3637 = vset.pattern.permute.xlu0 7
  %3638 = vperm.xlu0 %3637, %v2501
  %v3639 = vpop.permute.xlu0 %3638
  %3641 = vset.pattern.permute.xlu0 7
  %3642 = vperm.xlu0 %3641, %v2502
  %v3643 = vpop.permute.xlu0 %3642
  %3645 = vset.pattern.permute.xlu0 7
  %3646 = vperm.xlu0 %3645, %v2503
  %v3647 = vpop.permute.xlu0 %3646
  %3649 = vset.pattern.permute.xlu0 7
  %3650 = vperm.xlu0 %3649, %v2504
  %v3651 = vpop.permute.xlu0 %3650
  %3653 = vset.pattern.permute.xlu0 7
  %3654 = vperm.xlu0 %3653, %v2505
  %v3655 = vpop.permute.xlu0 %3654
  %3657 = vset.pattern.permute.xlu0 7
  %3658 = vperm.xlu0 %3657, %v2506
  %v3659 = vpop.permute.xlu0 %3658
  %v3661 = vperm.slane %v2510, 6
  %v3662 = vadd.f32 %v3599, %v3661
  %v3663 = vadd.f32 %v3603, %v3661
  %v3664 = vadd.f32 %v3607, %v3661
  %v3665 = vadd.f32 %v3611, %v3661
  %v3666 = vadd.f32 %v3615, %v3661
  %v3667 = vadd.f32 %v3619, %v3661
  %v3668 = vadd.f32 %v3623, %v3661
  %v3669 = vadd.f32 %v3627, %v3661
  %v3670 = vadd.f32 %v3631, %v3661
  %v3671 = vadd.f32 %v3635, %v3661
  %v3672 = vadd.f32 %v3639, %v3661
  %v3673 = vadd.f32 %v3643, %v3661
  %v3674 = vadd.f32 %v3647, %v3661
  %v3675 = vadd.f32 %v3651, %v3661
  %v3676 = vadd.f32 %v3655, %v3661
  %v3677 = vadd.f32 %v3659, %v3661
  %v3678 = vsub.f32 %v3662, %v3581
  %v3679 = vsub.f32 %v3663, %v3582
  %v3680 = vsub.f32 %v3664, %v3583
  %v3681 = vsub.f32 %v3665, %v3584
  %v3682 = vsub.f32 %v3666, %v3585
  %v3683 = vsub.f32 %v3667, %v3586
  %v3684 = vsub.f32 %v3668, %v3587
  %v3685 = vsub.f32 %v3669, %v3588
  %v3686 = vsub.f32 %v3670, %v3589
  %v3687 = vsub.f32 %v3671, %v3590
  %v3688 = vsub.f32 %v3672, %v3591
  %v3689 = vsub.f32 %v3673, %v3592
  %v3690 = vsub.f32 %v3674, %v3593
  %v3691 = vsub.f32 %v3675, %v3594
  %v3692 = vsub.f32 %v3676, %v3595
  %v3693 = vsub.f32 %v3677, %v3596
  %v3694 = vmul.f32 %v2931, %v3581
  %v3695 = vmul.f32 %v2932, %v3582
  %v3696 = vmul.f32 %v2933, %v3583
  %v3697 = vmul.f32 %v2934, %v3584
  %v3698 = vmul.f32 %v2935, %v3585
  %v3699 = vmul.f32 %v2936, %v3586
  %v3700 = vmul.f32 %v2937, %v3587
  %v3701 = vmul.f32 %v2938, %v3588
  %v3702 = vmul.f32 %v2939, %v3589
  %v3703 = vmul.f32 %v2940, %v3590
  %v3704 = vmul.f32 %v2941, %v3591
  %v3705 = vmul.f32 %v2942, %v3592
  %v3706 = vmul.f32 %v2943, %v3593
  %v3707 = vmul.f32 %v2944, %v3594
  %v3708 = vmul.f32 %v2945, %v3595
  %v3709 = vmul.f32 %v2946, %v3596
  %v3710 = vmul.f32 %v3044, %v3678
  %v3711 = vmul.f32 %v3045, %v3679
  %v3712 = vmul.f32 %v3046, %v3680
  %v3713 = vmul.f32 %v3047, %v3681
  %v3714 = vmul.f32 %v3048, %v3682
  %v3715 = vmul.f32 %v3049, %v3683
  %v3716 = vmul.f32 %v3050, %v3684
  %v3717 = vmul.f32 %v3051, %v3685
  %v3718 = vmul.f32 %v3052, %v3686
  %v3719 = vmul.f32 %v3053, %v3687
  %v3720 = vmul.f32 %v3054, %v3688
  %v3721 = vmul.f32 %v3055, %v3689
  %v3722 = vmul.f32 %v3056, %v3690
  %v3723 = vmul.f32 %v3057, %v3691
  %v3724 = vmul.f32 %v3058, %v3692
  %v3725 = vmul.f32 %v3059, %v3693
  %v3726 = vrcp.pop %v3710
  %v3727 = vmul.f32 %v3710, %v3726
  %v3728 = vsub.f32 1.0, %v3727
  %v3729 = vmul.f32 %v3726, %v3728
  %v3730 = vadd.f32 %v3726, %v3729
  %vm3731 = vweird.f32 %v3710
  %vm3732 = vweird.f32 %v3726
  %vm3733 = vmor %vm3731, %vm3732
  %v3734 = vsel %vm3733, %v3726, %v3730
  %v3735 = vand.u32 2147483647, %v3710
  %vm3736 = vcmp.eq.f32.partialorder %v3735, 8.507059e+37
  %v3737 = vand.u32 %v3710, 2147483648
  %v3738 = vor.u32 1.1754944e-38, %v3737
  %v3739 = vsel %vm3736, %v3738, %v3734
  %v3740 = vmul.f32 %v3694, %v3739
  %v3741 = vrcp.pop %v3711
  %v3742 = vmul.f32 %v3711, %v3741
  %v3743 = vsub.f32 1.0, %v3742
  %v3744 = vmul.f32 %v3741, %v3743
  %v3745 = vadd.f32 %v3741, %v3744
  %vm3746 = vweird.f32 %v3711
  %vm3747 = vweird.f32 %v3741
  %vm3748 = vmor %vm3746, %vm3747
  %v3749 = vsel %vm3748, %v3741, %v3745
  %v3750 = vand.u32 2147483647, %v3711
  %vm3751 = vcmp.eq.f32.partialorder %v3750, 8.507059e+37
  %v3752 = vand.u32 %v3711, 2147483648
  %v3753 = vor.u32 1.1754944e-38, %v3752
  %v3754 = vsel %vm3751, %v3753, %v3749
  %v3755 = vmul.f32 %v3695, %v3754
  %v3756 = vrcp.pop %v3712
  %v3757 = vmul.f32 %v3712, %v3756
  %v3758 = vsub.f32 1.0, %v3757
  %v3759 = vmul.f32 %v3756, %v3758
  %v3760 = vadd.f32 %v3756, %v3759
  %vm3761 = vweird.f32 %v3712
  %vm3762 = vweird.f32 %v3756
  %vm3763 = vmor %vm3761, %vm3762
  %v3764 = vsel %vm3763, %v3756, %v3760
  %v3765 = vand.u32 2147483647, %v3712
  %vm3766 = vcmp.eq.f32.partialorder %v3765, 8.507059e+37
  %v3767 = vand.u32 %v3712, 2147483648
  %v3768 = vor.u32 1.1754944e-38, %v3767
  %v3769 = vsel %vm3766, %v3768, %v3764
  %v3770 = vmul.f32 %v3696, %v3769
  %v3771 = vrcp.pop %v3713
  %v3772 = vmul.f32 %v3713, %v3771
  %v3773 = vsub.f32 1.0, %v3772
  %v3774 = vmul.f32 %v3771, %v3773
  %v3775 = vadd.f32 %v3771, %v3774
  %vm3776 = vweird.f32 %v3713
  %vm3777 = vweird.f32 %v3771
  %vm3778 = vmor %vm3776, %vm3777
  %v3779 = vsel %vm3778, %v3771, %v3775
  %v3780 = vand.u32 2147483647, %v3713
  %vm3781 = vcmp.eq.f32.partialorder %v3780, 8.507059e+37
  %v3782 = vand.u32 %v3713, 2147483648
  %v3783 = vor.u32 1.1754944e-38, %v3782
  %v3784 = vsel %vm3781, %v3783, %v3779
  %v3785 = vmul.f32 %v3697, %v3784
  %v3786 = vrcp.pop %v3714
  %v3787 = vmul.f32 %v3714, %v3786
  %v3788 = vsub.f32 1.0, %v3787
  %v3789 = vmul.f32 %v3786, %v3788
  %v3790 = vadd.f32 %v3786, %v3789
  %vm3791 = vweird.f32 %v3714
  %vm3792 = vweird.f32 %v3786
  %vm3793 = vmor %vm3791, %vm3792
  %v3794 = vsel %vm3793, %v3786, %v3790
  %v3795 = vand.u32 2147483647, %v3714
  %vm3796 = vcmp.eq.f32.partialorder %v3795, 8.507059e+37
  %v3797 = vand.u32 %v3714, 2147483648
  %v3798 = vor.u32 1.1754944e-38, %v3797
  %v3799 = vsel %vm3796, %v3798, %v3794
  %v3800 = vmul.f32 %v3698, %v3799
  %v3801 = vrcp.pop %v3715
  %v3802 = vmul.f32 %v3715, %v3801
  %v3803 = vsub.f32 1.0, %v3802
  %v3804 = vmul.f32 %v3801, %v3803
  %v3805 = vadd.f32 %v3801, %v3804
  %vm3806 = vweird.f32 %v3715
  %vm3807 = vweird.f32 %v3801
  %vm3808 = vmor %vm3806, %vm3807
  %v3809 = vsel %vm3808, %v3801, %v3805
  %v3810 = vand.u32 2147483647, %v3715
  %vm3811 = vcmp.eq.f32.partialorder %v3810, 8.507059e+37
  %v3812 = vand.u32 %v3715, 2147483648
  %v3813 = vor.u32 1.1754944e-38, %v3812
  %v3814 = vsel %vm3811, %v3813, %v3809
  %v3815 = vmul.f32 %v3699, %v3814
  %v3816 = vrcp.pop %v3716
  %v3817 = vmul.f32 %v3716, %v3816
  %v3818 = vsub.f32 1.0, %v3817
  %v3819 = vmul.f32 %v3816, %v3818
  %v3820 = vadd.f32 %v3816, %v3819
  %vm3821 = vweird.f32 %v3716
  %vm3822 = vweird.f32 %v3816
  %vm3823 = vmor %vm3821, %vm3822
  %v3824 = vsel %vm3823, %v3816, %v3820
  %v3825 = vand.u32 2147483647, %v3716
  %vm3826 = vcmp.eq.f32.partialorder %v3825, 8.507059e+37
  %v3827 = vand.u32 %v3716, 2147483648
  %v3828 = vor.u32 1.1754944e-38, %v3827
  %v3829 = vsel %vm3826, %v3828, %v3824
  %v3830 = vmul.f32 %v3700, %v3829
  %v3831 = vrcp.pop %v3717
  %v3832 = vmul.f32 %v3717, %v3831
  %v3833 = vsub.f32 1.0, %v3832
  %v3834 = vmul.f32 %v3831, %v3833
  %v3835 = vadd.f32 %v3831, %v3834
  %vm3836 = vweird.f32 %v3717
  %vm3837 = vweird.f32 %v3831
  %vm3838 = vmor %vm3836, %vm3837
  %v3839 = vsel %vm3838, %v3831, %v3835
  %v3840 = vand.u32 2147483647, %v3717
  %vm3841 = vcmp.eq.f32.partialorder %v3840, 8.507059e+37
  %v3842 = vand.u32 %v3717, 2147483648
  %v3843 = vor.u32 1.1754944e-38, %v3842
  %v3844 = vsel %vm3841, %v3843, %v3839
  %v3845 = vmul.f32 %v3701, %v3844
  %v3846 = vrcp.pop %v3718
  %v3847 = vmul.f32 %v3718, %v3846
  %v3848 = vsub.f32 1.0, %v3847
  %v3849 = vmul.f32 %v3846, %v3848
  %v3850 = vadd.f32 %v3846, %v3849
  %vm3851 = vweird.f32 %v3718
  %vm3852 = vweird.f32 %v3846
  %vm3853 = vmor %vm3851, %vm3852
  %v3854 = vsel %vm3853, %v3846, %v3850
  %v3855 = vand.u32 2147483647, %v3718
  %vm3856 = vcmp.eq.f32.partialorder %v3855, 8.507059e+37
  %v3857 = vand.u32 %v3718, 2147483648
  %v3858 = vor.u32 1.1754944e-38, %v3857
  %v3859 = vsel %vm3856, %v3858, %v3854
  %v3860 = vmul.f32 %v3702, %v3859
  %v3861 = vrcp.pop %v3719
  %v3862 = vmul.f32 %v3719, %v3861
  %v3863 = vsub.f32 1.0, %v3862
  %v3864 = vmul.f32 %v3861, %v3863
  %v3865 = vadd.f32 %v3861, %v3864
  %vm3866 = vweird.f32 %v3719
  %vm3867 = vweird.f32 %v3861
  %vm3868 = vmor %vm3866, %vm3867
  %v3869 = vsel %vm3868, %v3861, %v3865
  %v3870 = vand.u32 2147483647, %v3719
  %vm3871 = vcmp.eq.f32.partialorder %v3870, 8.507059e+37
  %v3872 = vand.u32 %v3719, 2147483648
  %v3873 = vor.u32 1.1754944e-38, %v3872
  %v3874 = vsel %vm3871, %v3873, %v3869
  %v3875 = vmul.f32 %v3703, %v3874
  %v3876 = vrcp.pop %v3720
  %v3877 = vmul.f32 %v3720, %v3876
  %v3878 = vsub.f32 1.0, %v3877
  %v3879 = vmul.f32 %v3876, %v3878
  %v3880 = vadd.f32 %v3876, %v3879
  %vm3881 = vweird.f32 %v3720
  %vm3882 = vweird.f32 %v3876
  %vm3883 = vmor %vm3881, %vm3882
  %v3884 = vsel %vm3883, %v3876, %v3880
  %v3885 = vand.u32 2147483647, %v3720
  %vm3886 = vcmp.eq.f32.partialorder %v3885, 8.507059e+37
  %v3887 = vand.u32 %v3720, 2147483648
  %v3888 = vor.u32 1.1754944e-38, %v3887
  %v3889 = vsel %vm3886, %v3888, %v3884
  %v3890 = vmul.f32 %v3704, %v3889
  %v3891 = vrcp.pop %v3721
  %v3892 = vmul.f32 %v3721, %v3891
  %v3893 = vsub.f32 1.0, %v3892
  %v3894 = vmul.f32 %v3891, %v3893
  %v3895 = vadd.f32 %v3891, %v3894
  %vm3896 = vweird.f32 %v3721
  %vm3897 = vweird.f32 %v3891
  %vm3898 = vmor %vm3896, %vm3897
  %v3899 = vsel %vm3898, %v3891, %v3895
  %v3900 = vand.u32 2147483647, %v3721
  %vm3901 = vcmp.eq.f32.partialorder %v3900, 8.507059e+37
  %v3902 = vand.u32 %v3721, 2147483648
  %v3903 = vor.u32 1.1754944e-38, %v3902
  %v3904 = vsel %vm3901, %v3903, %v3899
  %v3905 = vmul.f32 %v3705, %v3904
  %v3906 = vrcp.pop %v3722
  %v3907 = vmul.f32 %v3722, %v3906
  %v3908 = vsub.f32 1.0, %v3907
  %v3909 = vmul.f32 %v3906, %v3908
  %v3910 = vadd.f32 %v3906, %v3909
  %vm3911 = vweird.f32 %v3722
  %vm3912 = vweird.f32 %v3906
  %vm3913 = vmor %vm3911, %vm3912
  %v3914 = vsel %vm3913, %v3906, %v3910
  %v3915 = vand.u32 2147483647, %v3722
  %vm3916 = vcmp.eq.f32.partialorder %v3915, 8.507059e+37
  %v3917 = vand.u32 %v3722, 2147483648
  %v3918 = vor.u32 1.1754944e-38, %v3917
  %v3919 = vsel %vm3916, %v3918, %v3914
  %v3920 = vmul.f32 %v3706, %v3919
  %v3921 = vrcp.pop %v3723
  %v3922 = vmul.f32 %v3723, %v3921
  %v3923 = vsub.f32 1.0, %v3922
  %v3924 = vmul.f32 %v3921, %v3923
  %v3925 = vadd.f32 %v3921, %v3924
  %vm3926 = vweird.f32 %v3723
  %vm3927 = vweird.f32 %v3921
  %vm3928 = vmor %vm3926, %vm3927
  %v3929 = vsel %vm3928, %v3921, %v3925
  %v3930 = vand.u32 2147483647, %v3723
  %vm3931 = vcmp.eq.f32.partialorder %v3930, 8.507059e+37
  %v3932 = vand.u32 %v3723, 2147483648
  %v3933 = vor.u32 1.1754944e-38, %v3932
  %v3934 = vsel %vm3931, %v3933, %v3929
  %v3935 = vmul.f32 %v3707, %v3934
  %v3936 = vrcp.pop %v3724
  %v3937 = vmul.f32 %v3724, %v3936
  %v3938 = vsub.f32 1.0, %v3937
  %v3939 = vmul.f32 %v3936, %v3938
  %v3940 = vadd.f32 %v3936, %v3939
  %vm3941 = vweird.f32 %v3724
  %vm3942 = vweird.f32 %v3936
  %vm3943 = vmor %vm3941, %vm3942
  %v3944 = vsel %vm3943, %v3936, %v3940
  %v3945 = vand.u32 2147483647, %v3724
  %vm3946 = vcmp.eq.f32.partialorder %v3945, 8.507059e+37
  %v3947 = vand.u32 %v3724, 2147483648
  %v3948 = vor.u32 1.1754944e-38, %v3947
  %v3949 = vsel %vm3946, %v3948, %v3944
  %v3950 = vmul.f32 %v3708, %v3949
  %v3951 = vrcp.pop %v3725
  %v3952 = vmul.f32 %v3725, %v3951
  %v3953 = vsub.f32 1.0, %v3952
  %v3954 = vmul.f32 %v3951, %v3953
  %v3955 = vadd.f32 %v3951, %v3954
  %vm3956 = vweird.f32 %v3725
  %vm3957 = vweird.f32 %v3951
  %vm3958 = vmor %vm3956, %vm3957
  %v3959 = vsel %vm3958, %v3951, %v3955
  %v3960 = vand.u32 2147483647, %v3725
  %vm3961 = vcmp.eq.f32.partialorder %v3960, 8.507059e+37
  %v3962 = vand.u32 %v3725, 2147483648
  %v3963 = vor.u32 1.1754944e-38, %v3962
  %v3964 = vsel %vm3961, %v3963, %v3959
  %v3965 = vmul.f32 %v3709, %v3964
  %v3966 = vsel %vm3160, 1, 0
  %v3967 = vrot.slane %v3966, 4
  %vm3968 = vcmp.ne.s32.totalorder %v3967, 0
  %vm3969 = vmor %vm3160, %vm3968
  %v3970 = vsel %vm3969, 1, 0
  %v3971 = vperm.slane %v3970, 2
  %vm3972 = vcmp.eq.s32.totalorder %v3971, 1
  %v3973 = vsel %vm3972, 0.0, %v3740
  %v3974 = vsel %vm3972, 0.0, %v3755
  %v3975 = vsel %vm3972, 0.0, %v3770
  %v3976 = vsel %vm3972, 0.0, %v3785
  %v3977 = vsel %vm3972, 0.0, %v3800
  %v3978 = vsel %vm3972, 0.0, %v3815
  %v3979 = vsel %vm3972, 0.0, %v3830
  %v3980 = vsel %vm3972, 0.0, %v3845
  %v3981 = vsel %vm3972, 0.0, %v3860
  %v3982 = vsel %vm3972, 0.0, %v3875
  %v3983 = vsel %vm3972, 0.0, %v3890
  %v3984 = vsel %vm3972, 0.0, %v3905
  %v3985 = vsel %vm3972, 0.0, %v3920
  %v3986 = vsel %vm3972, 0.0, %v3935
  %v3987 = vsel %vm3972, 0.0, %v3950
  %v3988 = vsel %vm3972, 0.0, %v3965
  %v3989 = vsel %vm3140, 1, 0
  %v3990 = vsel %vm3141, 1, 0
  %v3991 = vsel %vm3142, 1, 0
  %v3992 = vsel %vm3143, 1, 0
  %v3993 = vsel %vm3144, 1, 0
  %v3994 = vsel %vm3145, 1, 0
  %v3995 = vsel %vm3146, 1, 0
  %v3996 = vsel %vm3147, 1, 0
  %v3997 = vsel %vm3148, 1, 0
  %v3998 = vsel %vm3149, 1, 0
  %v3999 = vsel %vm3150, 1, 0
  %v4000 = vsel %vm3151, 1, 0
  %v4001 = vsel %vm3152, 1, 0
  %v4002 = vsel %vm3153, 1, 0
  %v4003 = vsel %vm3154, 1, 0
  %v4004 = vsel %vm3155, 1, 0
  %4005 = vrot.lane.b32.xlu0 %v3989, 124
  %v4006 = vpop.permute.xlu0 %4005
  %4007 = vrot.lane.b32.xlu0 %v3990, 124
  %v4008 = vpop.permute.xlu0 %4007
  %4009 = vrot.lane.b32.xlu0 %v3991, 124
  %v4010 = vpop.permute.xlu0 %4009
  %4011 = vrot.lane.b32.xlu0 %v3992, 124
  %v4012 = vpop.permute.xlu0 %4011
  %4013 = vrot.lane.b32.xlu0 %v3993, 124
  %v4014 = vpop.permute.xlu0 %4013
  %4015 = vrot.lane.b32.xlu0 %v3994, 124
  %v4016 = vpop.permute.xlu0 %4015
  %4017 = vrot.lane.b32.xlu0 %v3995, 124
  %v4018 = vpop.permute.xlu0 %4017
  %4019 = vrot.lane.b32.xlu0 %v3996, 124
  %v4020 = vpop.permute.xlu0 %4019
  %4021 = vrot.lane.b32.xlu0 %v3997, 124
  %v4022 = vpop.permute.xlu0 %4021
  %4023 = vrot.lane.b32.xlu0 %v3998, 124
  %v4024 = vpop.permute.xlu0 %4023
  %4025 = vrot.lane.b32.xlu0 %v3999, 124
  %v4026 = vpop.permute.xlu0 %4025
  %4027 = vrot.lane.b32.xlu0 %v4000, 124
  %v4028 = vpop.permute.xlu0 %4027
  %4029 = vrot.lane.b32.xlu0 %v4001, 124
  %v4030 = vpop.permute.xlu0 %4029
  %4031 = vrot.lane.b32.xlu0 %v4002, 124
  %v4032 = vpop.permute.xlu0 %4031
  %4033 = vrot.lane.b32.xlu0 %v4003, 124
  %v4034 = vpop.permute.xlu0 %4033
  %4035 = vrot.lane.b32.xlu0 %v4004, 124
  %v4036 = vpop.permute.xlu0 %4035
  %vm4037 = vcmp.ne.s32.totalorder %v4006, 0
  %vm4038 = vcmp.ne.s32.totalorder %v4008, 0
  %vm4039 = vcmp.ne.s32.totalorder %v4010, 0
  %vm4040 = vcmp.ne.s32.totalorder %v4012, 0
  %vm4041 = vcmp.ne.s32.totalorder %v4014, 0
  %vm4042 = vcmp.ne.s32.totalorder %v4016, 0
  %vm4043 = vcmp.ne.s32.totalorder %v4018, 0
  %vm4044 = vcmp.ne.s32.totalorder %v4020, 0
  %vm4045 = vcmp.ne.s32.totalorder %v4022, 0
  %vm4046 = vcmp.ne.s32.totalorder %v4024, 0
  %vm4047 = vcmp.ne.s32.totalorder %v4026, 0
  %vm4048 = vcmp.ne.s32.totalorder %v4028, 0
  %vm4049 = vcmp.ne.s32.totalorder %v4030, 0
  %vm4050 = vcmp.ne.s32.totalorder %v4032, 0
  %vm4051 = vcmp.ne.s32.totalorder %v4034, 0
  %vm4052 = vcmp.ne.s32.totalorder %v4036, 0
  %vm4053 = vmor %vm3140, %vm4037
  %vm4054 = vmor %vm3141, %vm4038
  %vm4055 = vmor %vm3142, %vm4039
  %vm4056 = vmor %vm3143, %vm4040
  %vm4057 = vmor %vm3144, %vm4041
  %vm4058 = vmor %vm3145, %vm4042
  %vm4059 = vmor %vm3146, %vm4043
  %vm4060 = vmor %vm3147, %vm4044
  %vm4061 = vmor %vm3148, %vm4045
  %vm4062 = vmor %vm3149, %vm4046
  %vm4063 = vmor %vm3150, %vm4047
  %vm4064 = vmor %vm3151, %vm4048
  %vm4065 = vmor %vm3152, %vm4049
  %vm4066 = vmor %vm3153, %vm4050
  %vm4067 = vmor %vm3154, %vm4051
  %vm4068 = vmor %vm3155, %vm4052
  %v4069 = vsel %vm4053, 1, 0
  %v4070 = vsel %vm4054, 1, 0
  %v4071 = vsel %vm4055, 1, 0
  %v4072 = vsel %vm4056, 1, 0
  %v4073 = vsel %vm4057, 1, 0
  %v4074 = vsel %vm4058, 1, 0
  %v4075 = vsel %vm4059, 1, 0
  %v4076 = vsel %vm4060, 1, 0
  %v4077 = vsel %vm4061, 1, 0
  %v4078 = vsel %vm4062, 1, 0
  %v4079 = vsel %vm4063, 1, 0
  %v4080 = vsel %vm4064, 1, 0
  %v4081 = vsel %vm4065, 1, 0
  %v4082 = vsel %vm4066, 1, 0
  %v4083 = vsel %vm4067, 1, 0
  %v4084 = vsel %vm4068, 1, 0
  %4085 = vset.pattern.permute.xlu0 3
  %4086 = vperm.xlu0 %4085, %v4069
  %v4087 = vpop.permute.xlu0 %4086
  %4088 = vset.pattern.permute.xlu0 3
  %4089 = vperm.xlu0 %4088, %v4070
  %v4090 = vpop.permute.xlu0 %4089
  %4091 = vset.pattern.permute.xlu0 3
  %4092 = vperm.xlu0 %4091, %v4071
  %v4093 = vpop.permute.xlu0 %4092
  %4094 = vset.pattern.permute.xlu0 3
  %4095 = vperm.xlu0 %4094, %v4072
  %v4096 = vpop.permute.xlu0 %4095
  %4097 = vset.pattern.permute.xlu0 3
  %4098 = vperm.xlu0 %4097, %v4073
  %v4099 = vpop.permute.xlu0 %4098
  %4100 = vset.pattern.permute.xlu0 3
  %4101 = vperm.xlu0 %4100, %v4074
  %v4102 = vpop.permute.xlu0 %4101
  %4103 = vset.pattern.permute.xlu0 3
  %4104 = vperm.xlu0 %4103, %v4075
  %v4105 = vpop.permute.xlu0 %4104
  %4106 = vset.pattern.permute.xlu0 3
  %4107 = vperm.xlu0 %4106, %v4076
  %v4108 = vpop.permute.xlu0 %4107
  %4109 = vset.pattern.permute.xlu0 3
  %4110 = vperm.xlu0 %4109, %v4077
  %v4111 = vpop.permute.xlu0 %4110
  %4112 = vset.pattern.permute.xlu0 3
  %4113 = vperm.xlu0 %4112, %v4078
  %v4114 = vpop.permute.xlu0 %4113
  %4115 = vset.pattern.permute.xlu0 3
  %4116 = vperm.xlu0 %4115, %v4079
  %v4117 = vpop.permute.xlu0 %4116
  %4118 = vset.pattern.permute.xlu0 3
  %4119 = vperm.xlu0 %4118, %v4080
  %v4120 = vpop.permute.xlu0 %4119
  %4121 = vset.pattern.permute.xlu0 3
  %4122 = vperm.xlu0 %4121, %v4081
  %v4123 = vpop.permute.xlu0 %4122
  %4124 = vset.pattern.permute.xlu0 3
  %4125 = vperm.xlu0 %4124, %v4082
  %v4126 = vpop.permute.xlu0 %4125
  %4127 = vset.pattern.permute.xlu0 3
  %4128 = vperm.xlu0 %4127, %v4083
  %v4129 = vpop.permute.xlu0 %4128
  %4130 = vset.pattern.permute.xlu0 3
  %4131 = vperm.xlu0 %4130, %v4084
  %v4132 = vpop.permute.xlu0 %4131
  %vm4133 = vcmp.eq.s32.totalorder %v4087, 1
  %vm4134 = vcmp.eq.s32.totalorder %v4090, 1
  %vm4135 = vcmp.eq.s32.totalorder %v4093, 1
  %vm4136 = vcmp.eq.s32.totalorder %v4096, 1
  %vm4137 = vcmp.eq.s32.totalorder %v4099, 1
  %vm4138 = vcmp.eq.s32.totalorder %v4102, 1
  %vm4139 = vcmp.eq.s32.totalorder %v4105, 1
  %vm4140 = vcmp.eq.s32.totalorder %v4108, 1
  %vm4141 = vcmp.eq.s32.totalorder %v4111, 1
  %vm4142 = vcmp.eq.s32.totalorder %v4114, 1
  %vm4143 = vcmp.eq.s32.totalorder %v4117, 1
  %vm4144 = vcmp.eq.s32.totalorder %v4120, 1
  %vm4145 = vcmp.eq.s32.totalorder %v4123, 1
  %vm4146 = vcmp.eq.s32.totalorder %v4126, 1
  %vm4147 = vcmp.eq.s32.totalorder %v4129, 1
  %vm4148 = vcmp.eq.s32.totalorder %v4132, 1
  %v4149 = vsel %vm4133, -1.0, %v3973
  %v4150 = vsel %vm4134, -1.0, %v3974
  %v4151 = vsel %vm4135, -1.0, %v3975
  %v4152 = vsel %vm4136, -1.0, %v3976
  %v4153 = vsel %vm4137, -1.0, %v3977
  %v4154 = vsel %vm4138, -1.0, %v3978
  %v4155 = vsel %vm4139, -1.0, %v3979
  %v4156 = vsel %vm4140, -1.0, %v3980
  %v4157 = vsel %vm4141, -1.0, %v3981
  %v4158 = vsel %vm4142, -1.0, %v3982
  %v4159 = vsel %vm4143, -1.0, %v3983
  %v4160 = vsel %vm4144, -1.0, %v3984
  %v4161 = vsel %vm4145, -1.0, %v3985
  %v4162 = vsel %vm4146, -1.0, %v3986
  %v4163 = vsel %vm4147, -1.0, %v3987
  %v4164 = vsel %vm4148, -1.0, %v3988
  %v4165 = vsel %vm1868, %v4149, -inf
  %4166 = vmax.xlane.f32.xlu0 %v4165
  %v4167 = vpop.xlane.xlu0 %4166
  %v4168 = vsel %vm1868, %v4150, -inf
  %4169 = vmax.xlane.f32.xlu0 %v4168
  %v4170 = vpop.xlane.xlu0 %4169
  %v4171 = vsel %vm1868, %v4151, -inf
  %4172 = vmax.xlane.f32.xlu0 %v4171
  %v4173 = vpop.xlane.xlu0 %4172
  %v4174 = vsel %vm1868, %v4152, -inf
  %4175 = vmax.xlane.f32.xlu0 %v4174
  %v4176 = vpop.xlane.xlu0 %4175
  %v4177 = vsel %vm1868, %v4153, -inf
  %4178 = vmax.xlane.f32.xlu0 %v4177
  %v4179 = vpop.xlane.xlu0 %4178
  %v4180 = vsel %vm1868, %v4154, -inf
  %4181 = vmax.xlane.f32.xlu0 %v4180
  %v4182 = vpop.xlane.xlu0 %4181
  %v4183 = vsel %vm1868, %v4155, -inf
  %4184 = vmax.xlane.f32.xlu0 %v4183
  %v4185 = vpop.xlane.xlu0 %4184
  %v4186 = vsel %vm1868, %v4156, -inf
  %4187 = vmax.xlane.f32.xlu0 %v4186
  %v4188 = vpop.xlane.xlu0 %4187
  %v4189 = vsel %vm1868, %v4157, -inf
  %4190 = vmax.xlane.f32.xlu0 %v4189
  %v4191 = vpop.xlane.xlu0 %4190
  %v4192 = vsel %vm1868, %v4158, -inf
  %4193 = vmax.xlane.f32.xlu0 %v4192
  %v4194 = vpop.xlane.xlu0 %4193
  %v4195 = vsel %vm1868, %v4159, -inf
  %4196 = vmax.xlane.f32.xlu0 %v4195
  %v4197 = vpop.xlane.xlu0 %4196
  %v4198 = vsel %vm1868, %v4160, -inf
  %4199 = vmax.xlane.f32.xlu0 %v4198
  %v4200 = vpop.xlane.xlu0 %4199
  %v4201 = vsel %vm1868, %v4161, -inf
  %4202 = vmax.xlane.f32.xlu0 %v4201
  %v4203 = vpop.xlane.xlu0 %4202
  %v4204 = vsel %vm1868, %v4162, -inf
  %4205 = vmax.xlane.f32.xlu0 %v4204
  %v4206 = vpop.xlane.xlu0 %4205
  %v4207 = vsel %vm1868, %v4163, -inf
  %4208 = vmax.xlane.f32.xlu0 %v4207
  %v4209 = vpop.xlane.xlu0 %4208
  %v4210 = vsel %vm1868, %v4164, -inf
  %4211 = vmax.xlane.f32.xlu0 %v4210
  %v4212 = vpop.xlane.xlu0 %4211
  %vm4213 = vcmp.eq.f32.partialorder %v4149, %v4167
  %vm4214 = vcmp.eq.f32.partialorder %v4150, %v4170
  %vm4215 = vcmp.eq.f32.partialorder %v4151, %v4173
  %vm4216 = vcmp.eq.f32.partialorder %v4152, %v4176
  %vm4217 = vcmp.eq.f32.partialorder %v4153, %v4179
  %vm4218 = vcmp.eq.f32.partialorder %v4154, %v4182
  %vm4219 = vcmp.eq.f32.partialorder %v4155, %v4185
  %vm4220 = vcmp.eq.f32.partialorder %v4156, %v4188
  %vm4221 = vcmp.eq.f32.partialorder %v4157, %v4191
  %vm4222 = vcmp.eq.f32.partialorder %v4158, %v4194
  %vm4223 = vcmp.eq.f32.partialorder %v4159, %v4197
  %vm4224 = vcmp.eq.f32.partialorder %v4160, %v4200
  %vm4225 = vcmp.eq.f32.partialorder %v4161, %v4203
  %vm4226 = vcmp.eq.f32.partialorder %v4162, %v4206
  %vm4227 = vcmp.eq.f32.partialorder %v4163, %v4209
  %vm4228 = vcmp.eq.f32.partialorder %v4164, %v4212
  %v4229 = vsel %vm4213, %v1918, 16
  %v4230 = vsel %vm4214, %v1918, 16
  %v4231 = vsel %vm4215, %v1918, 16
  %v4232 = vsel %vm4216, %v1918, 16
  %v4233 = vsel %vm4217, %v1918, 16
  %v4234 = vsel %vm4218, %v1918, 16
  %v4235 = vsel %vm4219, %v1918, 16
  %v4236 = vsel %vm4220, %v1918, 16
  %v4237 = vsel %vm4221, %v1918, 16
  %v4238 = vsel %vm4222, %v1918, 16
  %v4239 = vsel %vm4223, %v1918, 16
  %v4240 = vsel %vm4224, %v1918, 16
  %v4241 = vsel %vm4225, %v1918, 16
  %v4242 = vsel %vm4226, %v1918, 16
  %v4243 = vsel %vm4227, %v1918, 16
  %v4244 = vsel %vm4228, %v1918, 16
  %v4245 = vsel %vm1868, %v4229, 2147483647
  %v4246 = vand.u32 %v4245, 65535
  %v4247 = vshra.s32 %v4245, 16
  %v4248 = vcvt.s32.f32 %v4246
  %v4249 = vcvt.s32.f32 %v4247
  %4250 = vmin.xlane.f32.xlu0 %v4249
  %v4251 = vpop.xlane.xlu0 %4250
  %vm4252 = vcmp.eq.f32.partialorder %v4249, %v4251
  %v4253 = vsel %vm4252, %v4248, inf
  %4254 = vmin.xlane.f32.xlu0 %v4253
  %v4255 = vpop.xlane.xlu0 %4254
  %v4256 = vcvt.f32.s32 %v4255
  %v4257 = vcvt.f32.s32 %v4251
  %v4258 = vshll.u32 %v4257, 16
  %v4259 = vadd.s32 %v4258, %v4256
  %v4260 = vsel %vm1868, %v4230, 2147483647
  %v4261 = vand.u32 %v4260, 65535
  %v4262 = vshra.s32 %v4260, 16
  %v4263 = vcvt.s32.f32 %v4261
  %v4264 = vcvt.s32.f32 %v4262
  %4265 = vmin.xlane.f32.xlu0 %v4264
  %v4266 = vpop.xlane.xlu0 %4265
  %vm4267 = vcmp.eq.f32.partialorder %v4264, %v4266
  %v4268 = vsel %vm4267, %v4263, inf
  %4269 = vmin.xlane.f32.xlu0 %v4268
  %v4270 = vpop.xlane.xlu0 %4269
  %v4271 = vcvt.f32.s32 %v4270
  %v4272 = vcvt.f32.s32 %v4266
  %v4273 = vshll.u32 %v4272, 16
  %v4274 = vadd.s32 %v4273, %v4271
  %v4275 = vsel %vm1868, %v4231, 2147483647
  %v4276 = vand.u32 %v4275, 65535
  %v4277 = vshra.s32 %v4275, 16
  %v4278 = vcvt.s32.f32 %v4276
  %v4279 = vcvt.s32.f32 %v4277
  %4280 = vmin.xlane.f32.xlu0 %v4279
  %v4281 = vpop.xlane.xlu0 %4280
  %vm4282 = vcmp.eq.f32.partialorder %v4279, %v4281
  %v4283 = vsel %vm4282, %v4278, inf
  %4284 = vmin.xlane.f32.xlu0 %v4283
  %v4285 = vpop.xlane.xlu0 %4284
  %v4286 = vcvt.f32.s32 %v4285
  %v4287 = vcvt.f32.s32 %v4281
  %v4288 = vshll.u32 %v4287, 16
  %v4289 = vadd.s32 %v4288, %v4286
  %v4290 = vsel %vm1868, %v4232, 2147483647
  %v4291 = vand.u32 %v4290, 65535
  %v4292 = vshra.s32 %v4290, 16
  %v4293 = vcvt.s32.f32 %v4291
  %v4294 = vcvt.s32.f32 %v4292
  %4295 = vmin.xlane.f32.xlu0 %v4294
  %v4296 = vpop.xlane.xlu0 %4295
  %vm4297 = vcmp.eq.f32.partialorder %v4294, %v4296
  %v4298 = vsel %vm4297, %v4293, inf
  %4299 = vmin.xlane.f32.xlu0 %v4298
  %v4300 = vpop.xlane.xlu0 %4299
  %v4301 = vcvt.f32.s32 %v4300
  %v4302 = vcvt.f32.s32 %v4296
  %v4303 = vshll.u32 %v4302, 16
  %v4304 = vadd.s32 %v4303, %v4301
  %v4305 = vsel %vm1868, %v4233, 2147483647
  %v4306 = vand.u32 %v4305, 65535
  %v4307 = vshra.s32 %v4305, 16
  %v4308 = vcvt.s32.f32 %v4306
  %v4309 = vcvt.s32.f32 %v4307
  %4310 = vmin.xlane.f32.xlu0 %v4309
  %v4311 = vpop.xlane.xlu0 %4310
  %vm4312 = vcmp.eq.f32.partialorder %v4309, %v4311
  %v4313 = vsel %vm4312, %v4308, inf
  %4314 = vmin.xlane.f32.xlu0 %v4313
  %v4315 = vpop.xlane.xlu0 %4314
  %v4316 = vcvt.f32.s32 %v4315
  %v4317 = vcvt.f32.s32 %v4311
  %v4318 = vshll.u32 %v4317, 16
  %v4319 = vadd.s32 %v4318, %v4316
  %v4320 = vsel %vm1868, %v4234, 2147483647
  %v4321 = vand.u32 %v4320, 65535
  %v4322 = vshra.s32 %v4320, 16
  %v4323 = vcvt.s32.f32 %v4321
  %v4324 = vcvt.s32.f32 %v4322
  %4325 = vmin.xlane.f32.xlu0 %v4324
  %v4326 = vpop.xlane.xlu0 %4325
  %vm4327 = vcmp.eq.f32.partialorder %v4324, %v4326
  %v4328 = vsel %vm4327, %v4323, inf
  %4329 = vmin.xlane.f32.xlu0 %v4328
  %v4330 = vpop.xlane.xlu0 %4329
  %v4331 = vcvt.f32.s32 %v4330
  %v4332 = vcvt.f32.s32 %v4326
  %v4333 = vshll.u32 %v4332, 16
  %v4334 = vadd.s32 %v4333, %v4331
  %v4335 = vsel %vm1868, %v4235, 2147483647
  %v4336 = vand.u32 %v4335, 65535
  %v4337 = vshra.s32 %v4335, 16
  %v4338 = vcvt.s32.f32 %v4336
  %v4339 = vcvt.s32.f32 %v4337
  %4340 = vmin.xlane.f32.xlu0 %v4339
  %v4341 = vpop.xlane.xlu0 %4340
  %vm4342 = vcmp.eq.f32.partialorder %v4339, %v4341
  %v4343 = vsel %vm4342, %v4338, inf
  %4344 = vmin.xlane.f32.xlu0 %v4343
  %v4345 = vpop.xlane.xlu0 %4344
  %v4346 = vcvt.f32.s32 %v4345
  %v4347 = vcvt.f32.s32 %v4341
  %v4348 = vshll.u32 %v4347, 16
  %v4349 = vadd.s32 %v4348, %v4346
  %v4350 = vsel %vm1868, %v4236, 2147483647
  %v4351 = vand.u32 %v4350, 65535
  %v4352 = vshra.s32 %v4350, 16
  %v4353 = vcvt.s32.f32 %v4351
  %v4354 = vcvt.s32.f32 %v4352
  %4355 = vmin.xlane.f32.xlu0 %v4354
  %v4356 = vpop.xlane.xlu0 %4355
  %vm4357 = vcmp.eq.f32.partialorder %v4354, %v4356
  %v4358 = vsel %vm4357, %v4353, inf
  %4359 = vmin.xlane.f32.xlu0 %v4358
  %v4360 = vpop.xlane.xlu0 %4359
  %v4361 = vcvt.f32.s32 %v4360
  %v4362 = vcvt.f32.s32 %v4356
  %v4363 = vshll.u32 %v4362, 16
  %v4364 = vadd.s32 %v4363, %v4361
  %v4365 = vsel %vm1868, %v4237, 2147483647
  %v4366 = vand.u32 %v4365, 65535
  %v4367 = vshra.s32 %v4365, 16
  %v4368 = vcvt.s32.f32 %v4366
  %v4369 = vcvt.s32.f32 %v4367
  %4370 = vmin.xlane.f32.xlu0 %v4369
  %v4371 = vpop.xlane.xlu0 %4370
  %vm4372 = vcmp.eq.f32.partialorder %v4369, %v4371
  %v4373 = vsel %vm4372, %v4368, inf
  %4374 = vmin.xlane.f32.xlu0 %v4373
  %v4375 = vpop.xlane.xlu0 %4374
  %v4376 = vcvt.f32.s32 %v4375
  %v4377 = vcvt.f32.s32 %v4371
  %v4378 = vshll.u32 %v4377, 16
  %v4379 = vadd.s32 %v4378, %v4376
  %v4380 = vsel %vm1868, %v4238, 2147483647
  %v4381 = vand.u32 %v4380, 65535
  %v4382 = vshra.s32 %v4380, 16
  %v4383 = vcvt.s32.f32 %v4381
  %v4384 = vcvt.s32.f32 %v4382
  %4385 = vmin.xlane.f32.xlu0 %v4384
  %v4386 = vpop.xlane.xlu0 %4385
  %vm4387 = vcmp.eq.f32.partialorder %v4384, %v4386
  %v4388 = vsel %vm4387, %v4383, inf
  %4389 = vmin.xlane.f32.xlu0 %v4388
  %v4390 = vpop.xlane.xlu0 %4389
  %v4391 = vcvt.f32.s32 %v4390
  %v4392 = vcvt.f32.s32 %v4386
  %v4393 = vshll.u32 %v4392, 16
  %v4394 = vadd.s32 %v4393, %v4391
  %v4395 = vsel %vm1868, %v4239, 2147483647
  %v4396 = vand.u32 %v4395, 65535
  %v4397 = vshra.s32 %v4395, 16
  %v4398 = vcvt.s32.f32 %v4396
  %v4399 = vcvt.s32.f32 %v4397
  %4400 = vmin.xlane.f32.xlu0 %v4399
  %v4401 = vpop.xlane.xlu0 %4400
  %vm4402 = vcmp.eq.f32.partialorder %v4399, %v4401
  %v4403 = vsel %vm4402, %v4398, inf
  %4404 = vmin.xlane.f32.xlu0 %v4403
  %v4405 = vpop.xlane.xlu0 %4404
  %v4406 = vcvt.f32.s32 %v4405
  %v4407 = vcvt.f32.s32 %v4401
  %v4408 = vshll.u32 %v4407, 16
  %v4409 = vadd.s32 %v4408, %v4406
  %v4410 = vsel %vm1868, %v4240, 2147483647
  %v4411 = vand.u32 %v4410, 65535
  %v4412 = vshra.s32 %v4410, 16
  %v4413 = vcvt.s32.f32 %v4411
  %v4414 = vcvt.s32.f32 %v4412
  %4415 = vmin.xlane.f32.xlu0 %v4414
  %v4416 = vpop.xlane.xlu0 %4415
  %vm4417 = vcmp.eq.f32.partialorder %v4414, %v4416
  %v4418 = vsel %vm4417, %v4413, inf
  %4419 = vmin.xlane.f32.xlu0 %v4418
  %v4420 = vpop.xlane.xlu0 %4419
  %v4421 = vcvt.f32.s32 %v4420
  %v4422 = vcvt.f32.s32 %v4416
  %v4423 = vshll.u32 %v4422, 16
  %v4424 = vadd.s32 %v4423, %v4421
  %v4425 = vsel %vm1868, %v4241, 2147483647
  %v4426 = vand.u32 %v4425, 65535
  %v4427 = vshra.s32 %v4425, 16
  %v4428 = vcvt.s32.f32 %v4426
  %v4429 = vcvt.s32.f32 %v4427
  %4430 = vmin.xlane.f32.xlu0 %v4429
  %v4431 = vpop.xlane.xlu0 %4430
  %vm4432 = vcmp.eq.f32.partialorder %v4429, %v4431
  %v4433 = vsel %vm4432, %v4428, inf
  %4434 = vmin.xlane.f32.xlu0 %v4433
  %v4435 = vpop.xlane.xlu0 %4434
  %v4436 = vcvt.f32.s32 %v4435
  %v4437 = vcvt.f32.s32 %v4431
  %v4438 = vshll.u32 %v4437, 16
  %v4439 = vadd.s32 %v4438, %v4436
  %v4440 = vsel %vm1868, %v4242, 2147483647
  %v4441 = vand.u32 %v4440, 65535
  %v4442 = vshra.s32 %v4440, 16
  %v4443 = vcvt.s32.f32 %v4441
  %v4444 = vcvt.s32.f32 %v4442
  %4445 = vmin.xlane.f32.xlu0 %v4444
  %v4446 = vpop.xlane.xlu0 %4445
  %vm4447 = vcmp.eq.f32.partialorder %v4444, %v4446
  %v4448 = vsel %vm4447, %v4443, inf
  %4449 = vmin.xlane.f32.xlu0 %v4448
  %v4450 = vpop.xlane.xlu0 %4449
  %v4451 = vcvt.f32.s32 %v4450
  %v4452 = vcvt.f32.s32 %v4446
  %v4453 = vshll.u32 %v4452, 16
  %v4454 = vadd.s32 %v4453, %v4451
  %v4455 = vsel %vm1868, %v4243, 2147483647
  %v4456 = vand.u32 %v4455, 65535
  %v4457 = vshra.s32 %v4455, 16
  %v4458 = vcvt.s32.f32 %v4456
  %v4459 = vcvt.s32.f32 %v4457
  %4460 = vmin.xlane.f32.xlu0 %v4459
  %v4461 = vpop.xlane.xlu0 %4460
  %vm4462 = vcmp.eq.f32.partialorder %v4459, %v4461
  %v4463 = vsel %vm4462, %v4458, inf
  %4464 = vmin.xlane.f32.xlu0 %v4463
  %v4465 = vpop.xlane.xlu0 %4464
  %v4466 = vcvt.f32.s32 %v4465
  %v4467 = vcvt.f32.s32 %v4461
  %v4468 = vshll.u32 %v4467, 16
  %v4469 = vadd.s32 %v4468, %v4466
  %v4470 = vsel %vm1868, %v4244, 2147483647
  %v4471 = vand.u32 %v4470, 65535
  %v4472 = vshra.s32 %v4470, 16
  %v4473 = vcvt.s32.f32 %v4471
  %v4474 = vcvt.s32.f32 %v4472
  %4475 = vmin.xlane.f32.xlu0 %v4474
  %v4476 = vpop.xlane.xlu0 %4475
  %vm4477 = vcmp.eq.f32.partialorder %v4474, %v4476
  %v4478 = vsel %vm4477, %v4473, inf
  %4479 = vmin.xlane.f32.xlu0 %v4478
  %v4480 = vpop.xlane.xlu0 %4479
  %v4481 = vcvt.f32.s32 %v4480
  %v4482 = vcvt.f32.s32 %v4476
  %v4483 = vshll.u32 %v4482, 16
  %v4484 = vadd.s32 %v4483, %v4481
  %vm4485 = vcmp.eq.s32.totalorder %v1918, %v4259
  %vm4486 = vcmp.eq.s32.totalorder %v1918, %v4274
  %vm4487 = vcmp.eq.s32.totalorder %v1918, %v4289
  %vm4488 = vcmp.eq.s32.totalorder %v1918, %v4304
  %vm4489 = vcmp.eq.s32.totalorder %v1918, %v4319
  %vm4490 = vcmp.eq.s32.totalorder %v1918, %v4334
  %vm4491 = vcmp.eq.s32.totalorder %v1918, %v4349
  %vm4492 = vcmp.eq.s32.totalorder %v1918, %v4364
  %vm4493 = vcmp.eq.s32.totalorder %v1918, %v4379
  %vm4494 = vcmp.eq.s32.totalorder %v1918, %v4394
  %vm4495 = vcmp.eq.s32.totalorder %v1918, %v4409
  %vm4496 = vcmp.eq.s32.totalorder %v1918, %v4424
  %vm4497 = vcmp.eq.s32.totalorder %v1918, %v4439
  %vm4498 = vcmp.eq.s32.totalorder %v1918, %v4454
  %vm4499 = vcmp.eq.s32.totalorder %v1918, %v4469
  %vm4500 = vcmp.eq.s32.totalorder %v1918, %v4484
  %v4501 = vperm.slane %v2325, 0
  %v4502 = vsel %vm4485, %v4501, 0.0
  %v4503 = vsel %vm4486, %v4501, 0.0
  %v4504 = vsel %vm4487, %v4501, 0.0
  %v4505 = vsel %vm4488, %v4501, 0.0
  %v4506 = vsel %vm4489, %v4501, 0.0
  %v4507 = vsel %vm4490, %v4501, 0.0
  %v4508 = vsel %vm4491, %v4501, 0.0
  %v4509 = vsel %vm4492, %v4501, 0.0
  %v4510 = vsel %vm4493, %v4501, 0.0
  %v4511 = vsel %vm4494, %v4501, 0.0
  %v4512 = vsel %vm4495, %v4501, 0.0
  %v4513 = vsel %vm4496, %v4501, 0.0
  %v4514 = vsel %vm4497, %v4501, 0.0
  %v4515 = vsel %vm4498, %v4501, 0.0
  %v4516 = vsel %vm4499, %v4501, 0.0
  %v4517 = vsel %vm4500, %v4501, 0.0
  %v4518 = vsel %vm1868, %v4502, 0.0
  %4519 = vadd.xlane.f32.xlu0 %v4518
  %v4520 = vpop.xlane.xlu0 %4519
  %v4521 = vsel %vm1868, %v4503, 0.0
  %4522 = vadd.xlane.f32.xlu0 %v4521
  %v4523 = vpop.xlane.xlu0 %4522
  %v4524 = vsel %vm1868, %v4504, 0.0
  %4525 = vadd.xlane.f32.xlu0 %v4524
  %v4526 = vpop.xlane.xlu0 %4525
  %v4527 = vsel %vm1868, %v4505, 0.0
  %4528 = vadd.xlane.f32.xlu0 %v4527
  %v4529 = vpop.xlane.xlu0 %4528
  %v4530 = vsel %vm1868, %v4506, 0.0
  %4531 = vadd.xlane.f32.xlu0 %v4530
  %v4532 = vpop.xlane.xlu0 %4531
  %v4533 = vsel %vm1868, %v4507, 0.0
  %4534 = vadd.xlane.f32.xlu0 %v4533
  %v4535 = vpop.xlane.xlu0 %4534
  %v4536 = vsel %vm1868, %v4508, 0.0
  %4537 = vadd.xlane.f32.xlu0 %v4536
  %v4538 = vpop.xlane.xlu0 %4537
  %v4539 = vsel %vm1868, %v4509, 0.0
  %4540 = vadd.xlane.f32.xlu0 %v4539
  %v4541 = vpop.xlane.xlu0 %4540
  %v4542 = vsel %vm1868, %v4510, 0.0
  %4543 = vadd.xlane.f32.xlu0 %v4542
  %v4544 = vpop.xlane.xlu0 %4543
  %v4545 = vsel %vm1868, %v4511, 0.0
  %4546 = vadd.xlane.f32.xlu0 %v4545
  %v4547 = vpop.xlane.xlu0 %4546
  %v4548 = vsel %vm1868, %v4512, 0.0
  %4549 = vadd.xlane.f32.xlu0 %v4548
  %v4550 = vpop.xlane.xlu0 %4549
  %v4551 = vsel %vm1868, %v4513, 0.0
  %4552 = vadd.xlane.f32.xlu0 %v4551
  %v4553 = vpop.xlane.xlu0 %4552
  %v4554 = vsel %vm1868, %v4514, 0.0
  %4555 = vadd.xlane.f32.xlu0 %v4554
  %v4556 = vpop.xlane.xlu0 %4555
  %v4557 = vsel %vm1868, %v4515, 0.0
  %4558 = vadd.xlane.f32.xlu0 %v4557
  %v4559 = vpop.xlane.xlu0 %4558
  %v4560 = vsel %vm1868, %v4516, 0.0
  %4561 = vadd.xlane.f32.xlu0 %v4560
  %v4562 = vpop.xlane.xlu0 %4561
  %v4563 = vsel %vm1868, %v4517, 0.0
  %4564 = vadd.xlane.f32.xlu0 %v4563
  %v4565 = vpop.xlane.xlu0 %4564
  %s4566 = scalar_lea.vmem %s2, 128
  %4567 = vst.msk [vmem:[%s4566] sm:$0xff] %vm2272, %v4167
  %4568 = vst.msk [vmem:[%s4566 + $0x8] sm:$0xff] %vm2272, %v4170
  %4569 = vst.msk [vmem:[%s4566 + $0x10] sm:$0xff] %vm2272, %v4173
  %4570 = vst.msk [vmem:[%s4566 + $0x18] sm:$0xff] %vm2272, %v4176
  %4571 = vst.msk [vmem:[%s4566 + $0x20] sm:$0xff] %vm2272, %v4179
  %4572 = vst.msk [vmem:[%s4566 + $0x28] sm:$0xff] %vm2272, %v4182
  %4573 = vst.msk [vmem:[%s4566 + $0x30] sm:$0xff] %vm2272, %v4185
  %4574 = vst.msk [vmem:[%s4566 + $0x38] sm:$0xff] %vm2272, %v4188
  %4575 = vst.msk [vmem:[%s4566 + $0x40] sm:$0xff] %vm2272, %v4191
  %4576 = vst.msk [vmem:[%s4566 + $0x48] sm:$0xff] %vm2272, %v4194
  %4577 = vst.msk [vmem:[%s4566 + $0x50] sm:$0xff] %vm2272, %v4197
  %4578 = vst.msk [vmem:[%s4566 + $0x58] sm:$0xff] %vm2272, %v4200
  %4579 = vst.msk [vmem:[%s4566 + $0x60] sm:$0xff] %vm2272, %v4203
  %4580 = vst.msk [vmem:[%s4566 + $0x68] sm:$0xff] %vm2272, %v4206
  %4581 = vst.msk [vmem:[%s4566 + $0x70] sm:$0xff] %vm2272, %v4209
  %4582 = vst.msk [vmem:[%s4566 + $0x78] sm:$0xff] %vm2272, %v4212
  %4583 = vst.msk [vmem:[%s4566] sm:$0xff] %vm2289, %v4520
  %4584 = vst.msk [vmem:[%s4566 + $0x8] sm:$0xff] %vm2289, %v4523
  %4585 = vst.msk [vmem:[%s4566 + $0x10] sm:$0xff] %vm2289, %v4526
  %4586 = vst.msk [vmem:[%s4566 + $0x18] sm:$0xff] %vm2289, %v4529
  %4587 = vst.msk [vmem:[%s4566 + $0x20] sm:$0xff] %vm2289, %v4532
  %4588 = vst.msk [vmem:[%s4566 + $0x28] sm:$0xff] %vm2289, %v4535
  %4589 = vst.msk [vmem:[%s4566 + $0x30] sm:$0xff] %vm2289, %v4538
  %4590 = vst.msk [vmem:[%s4566 + $0x38] sm:$0xff] %vm2289, %v4541
  %4591 = vst.msk [vmem:[%s4566 + $0x40] sm:$0xff] %vm2289, %v4544
  %4592 = vst.msk [vmem:[%s4566 + $0x48] sm:$0xff] %vm2289, %v4547
  %4593 = vst.msk [vmem:[%s4566 + $0x50] sm:$0xff] %vm2289, %v4550
  %4594 = vst.msk [vmem:[%s4566 + $0x58] sm:$0xff] %vm2289, %v4553
  %4595 = vst.msk [vmem:[%s4566 + $0x60] sm:$0xff] %vm2289, %v4556
  %4596 = vst.msk [vmem:[%s4566 + $0x68] sm:$0xff] %vm2289, %v4559
  %4597 = vst.msk [vmem:[%s4566 + $0x70] sm:$0xff] %vm2289, %v4562
  %4598 = vst.msk [vmem:[%s4566 + $0x78] sm:$0xff] %vm2289, %v4565
  // Predicated region
  $region10: #{_relpn_forward.1} parent=0 // pred_check
    _
  $region11: #{_relpn_forward.1} parent=0 // pred_check_branch
    %4600 = sbr.rel (0) target = $region13
  $region12: #{_relpn_forward.1} parent=0 // pred_region
    _
  $region13: #{_relpn_forward.1} parent=0 // pred_fallthru
    _
  // Predicated region
  $region14: #{_relpn_forward.1} parent=0 // pred_check
    _
  $region15: #{_relpn_forward.1} parent=0 // pred_check_branch
    %4602 = sbr.rel (0) target = $region17
  $region16: #{_relpn_forward.1} parent=0 // pred_region
    _
  $region17: #{_relpn_forward.1} parent=0 // pred_fallthru
    _

</llo_original>
